<compile_context>
chip_gen: v7x
topology: tpu7x:2x2x1
jax: 0.10.0
libtpu: 0.0.40
codegen_flags: <defaults>
</compile_context>

<pallas_src>
import functools

import jax
import jax.numpy as jnp
from jax import lax
from jax.experimental import pallas as pl
from jax.experimental.pallas import tpu as pltpu


# -----------------------------------------------------------------------------
# Kernel
# -----------------------------------------------------------------------------
def _layer_norm(v, w, b, eps=1e-5):
    mu = jnp.mean(v, axis=-1, keepdims=True)
    var = jnp.mean(jnp.square(v - mu), axis=-1, keepdims=True)
    return (v - mu) * lax.rsqrt(var + eps) * w + b


def _fused_llm_kernel(x_ref, shift_ref, ln_w_ref, ln_b_ref, in_wx_ref, in_wg_ref,
                      conv_w_ref, conv_b_ref, dt_w_ref, dt_b_ref,
                      xb_w_ref, xc_w_ref, out_w_ref, A_ref, Dp_ref,
                      lnf_w_ref, lnf_b_ref, proj_w_ref, proj_b_ref,
                      o_ref,
                      dA_ref, dBx_ref, h_ref,
                      *, batch, seq_len):
    f32 = jnp.float32
    num_layer, _, d_inner = in_wx_ref.shape
    d_state = A_ref.shape[1]
    d_conv = conv_w_ref.shape[1]
    L, B = seq_len, batch

    x = x_ref[...]                                     # (B*L, D), batch folded

    # ---- all Mamba blocks, weights VMEM-resident, static layer unroll ----
    for l in range(num_layer):
        xn = _layer_norm(x, ln_w_ref[l], ln_b_ref[l])

        # in_proj, weight pre-split (conv branch / gate branch)
        x_c = jnp.dot(xn, in_wx_ref[l], preferred_element_type=f32)
        x_g = jnp.dot(xn, in_wg_ref[l], preferred_element_type=f32)

        # causal depthwise conv1d via block-diagonal shift matrices + SiLU
        cw = conv_w_ref[l]                             # (K, d_inner)
        acc = jnp.zeros_like(x_c)
        for k in range(d_conv):
            shifted = jnp.dot(shift_ref[k], x_c, preferred_element_type=f32)
            acc = acc + shifted * cw[k:k + 1, :]
        acc = acc + conv_b_ref[l]                      # (1, d_inner) broadcast
        x_c = acc * jax.nn.sigmoid(acc)                # SiLU, (B*L, d_inner)

        # dt / B / C projections (separate matmuls, no mid-vreg lane slices)
        delta = jax.nn.softplus(
            jnp.dot(x_c, dt_w_ref[l], preferred_element_type=f32) + dt_b_ref[l])
        Bp = jnp.dot(x_c, xb_w_ref[l], preferred_element_type=f32)   # (B*L, S)
        Cp = jnp.dot(x_c, xc_w_ref[l], preferred_element_type=f32)   # (B*L, S)

        # hoisted scan precursors, vectorized over every (batch, timestep)
        A_col = A_ref[l]                                              # (S, 1)
        dA_ref[...] = jnp.exp(delta[:, None, :] * A_col[None, :, :])  # (BL,S,I)
        dBx_ref[...] = (delta * x_c)[:, None, :] * Bp[:, :, None]     # (BL,S,I)

        # serial recurrence: both batch elements advanced each step
        def scan_step(t, hs):
            new = []
            for b in range(B):
                i = b * L + t
                h = dA_ref[i] * hs[b] + dBx_ref[i]
                h_ref[i] = h
                new.append(h)
            return tuple(new)

        h0 = jnp.zeros((d_state, d_inner), f32)
        lax.fori_loop(0, L, scan_step, tuple(h0 for _ in range(B)),
                      unroll=min(8, L))

        # y_t = C_t . h_t, vectorized after the loop (off the critical path)
        y = jnp.sum(Cp[:, :, None] * h_ref[...], axis=1)     # (B*L, d_inner)

        # skip (D), gating, out_proj, residual
        out = (y + x_c * Dp_ref[l]) * (x_g * jax.nn.sigmoid(x_g))
        x = x + jnp.dot(out, out_w_ref[l], preferred_element_type=f32)

    # ---- fused head: final LayerNorm + padded (lane-dense) vocab projection ----
    xn = _layer_norm(x, lnf_w_ref[...], lnf_b_ref[...])
    o_ref[...] = jnp.dot(xn, proj_w_ref[...],
                         preferred_element_type=f32) + proj_b_ref[...]


# -----------------------------------------------------------------------------
# Wrappers
# -----------------------------------------------------------------------------
def _make_shift_mats(batch, seq_len, k_taps):
    """S_k @ x == x shifted down by (K-1-k) rows, block-diagonal per batch."""
    n = batch * seq_len
    rows = jnp.arange(n)[:, None]
    cols = jnp.arange(n)[None, :]
    same_batch = (rows // seq_len) == (cols // seq_len)
    mats = [((cols == rows - (k_taps - 1 - k)) & same_batch).astype(jnp.float32)
            for k in range(k_taps)]
    return jnp.stack(mats, axis=0)                     # (K, B*L, B*L)


def tutorial_llm_apply(x2d, params, *, batch, seq_len):
    """All Mamba blocks + final LN + vocab projection in one pallas_call."""
    blk = params["blocks"]
    num_layer, dim, d_inner = blk["in_wx"].shape
    d_state = blk["A"].shape[1]
    d_conv = blk["conv_w"].shape[1]
    bl = batch * seq_len
    vpad = params["proj_w"].shape[1]

    shift = _make_shift_mats(batch, seq_len, d_conv)
    kernel = functools.partial(_fused_llm_kernel, batch=batch, seq_len=seq_len)

    return pl.pallas_call(
        kernel,
        out_shape=jax.ShapeDtypeStruct((bl, vpad), jnp.float32),
        scratch_shapes=[
            pltpu.VMEM((bl, d_state, d_inner), jnp.float32),   # exp(delta*A)
            pltpu.VMEM((bl, d_state, d_inner), jnp.float32),   # delta*B*x
            pltpu.VMEM((bl, d_state, d_inner), jnp.float32),   # h history
        ],
    )(x2d, shift,
      blk["ln_w"], blk["ln_b"], blk["in_wx"], blk["in_wg"],
      blk["conv_w"], blk["conv_b"], blk["dt_w"], blk["dt_b"],
      blk["xb_w"], blk["xc_w"], blk["out_w"], blk["A"], blk["Dp"],
      params["lnf_w"], params["lnf_b"], params["proj_w"], params["proj_b"])


# -----------------------------------------------------------------------------
# Deterministic parameter init (shapes per TutorialLLM.__init__), layer-stacked
# -----------------------------------------------------------------------------
def init_params(key, vocab, dim, max_len, num_layer, d_state, d_conv, expand):
    d_inner = expand * dim
    vpad = ((vocab + 127) // 128) * 128

    def nrm(k, shape, scale=0.1):
        return (scale * jax.random.normal(k, shape)).astype(jnp.float32)

    keys = jax.random.split(key, 10)
    params = {
        "tok_emb": nrm(keys[0], (vocab, dim)),
        "pos_emb": nrm(keys[1], (max_len, dim)),
        "lnf_w": jnp.ones((1, dim), jnp.float32),
        "lnf_b": jnp.zeros((1, dim), jnp.float32),
        # vocab projection padded to a 128-lane multiple (lane-dense output
        # stores + full MXU N); padding columns are zero, sliced off outside.
        "proj_w": jnp.pad(nrm(keys[2], (dim, vocab)), ((0, 0), (0, vpad - vocab))),
        "proj_b": jnp.zeros((1, vpad), jnp.float32),
    }

    NL = num_layer
    params["blocks"] = {
        "ln_w": jnp.ones((NL, 1, dim), jnp.float32),
        "ln_b": jnp.zeros((NL, 1, dim), jnp.float32),
        # in_proj weight pre-split into conv / gate halves (rows 0:d_inner and
        # d_inner:2*d_inner of PyTorch in_proj.weight, transposed) -- mind the
        # order when importing trained weights.
        "in_wx": nrm(keys[3], (NL, dim, d_inner)),
        "in_wg": nrm(keys[4], (NL, dim, d_inner)),
        # Depthwise conv taps stored (K, d_inner); PyTorch Conv1d weight is
        # (d_inner, 1, K) -> transpose if importing trained weights.
        "conv_w": nrm(keys[5], (NL, d_conv, d_inner)),
        "conv_b": jnp.zeros((NL, 1, d_inner), jnp.float32),
        "dt_w": nrm(keys[6], (NL, d_inner, d_inner)),
        "dt_b": jnp.full((NL, 1, d_inner), -5.0, jnp.float32),  # constant_(-5.0)
        # x_proj split into B / C halves (cols 0:d_state / d_state:2*d_state of
        # x_proj.weight.T) so no mid-vreg lane slices are needed in-kernel.
        "xb_w": nrm(keys[7], (NL, d_inner, d_state)),
        "xc_w": nrm(keys[8], (NL, d_inner, d_state)),
        "out_w": nrm(keys[9], (NL, d_inner, dim)),
        # A = +arange(1..d_state), exactly as in the PyTorch reference.
        "A": jnp.tile(jnp.arange(1, d_state + 1, dtype=jnp.float32
                                 ).reshape(1, d_state, 1), (NL, 1, 1)),
        "Dp": jnp.ones((NL, 1, d_inner), jnp.float32),
    }
    return params


@jax.jit
def tutorial_llm_forward(params, token_ids):
    """TutorialLLM.forward with labels=None -> (logits, None)."""
    B, T = token_ids.shape
    V, D = params["tok_emb"].shape
    tok_emb = jnp.take(params["tok_emb"], token_ids, axis=0)      # (B, T, D)
    pos_emb = params["pos_emb"][:T]                               # (T, D)
    x = (tok_emb + pos_emb[None, :, :]).reshape(B * T, D)         # batch folded
    logits_pad = tutorial_llm_apply(x, params, batch=B, seq_len=T)
    logits = logits_pad[:, :V].reshape(B, T, V)
    # TODO(synk): cross-entropy loss path (labels != None) not implemented;
    # this matches the labels=None branch which returns (logits, None).
    return logits, None


# -----------------------------------------------------------------------------
# Main
# -----------------------------------------------------------------------------
if __name__ == "__main__":
    vocab_size, dim_embed, max_length, num_layer = 64, 32, 16, 2
    d_state, d_conv, expand = 16, 4, 2
    B, T = 2, 8

    key = jax.random.PRNGKey(0)
    k_param, k_tok = jax.random.split(key)
    params = init_params(k_param, vocab_size, dim_embed, max_length,
                         num_layer, d_state, d_conv, expand)
    token_ids = jax.random.randint(k_tok, (B, T), 0, vocab_size, dtype=jnp.int32)

    logits, loss = tutorial_llm_forward(params, token_ids)
    logits = jax.block_until_ready(logits)
    assert logits.shape == (B, T, vocab_size)
    assert loss is None
    assert bool(jnp.isfinite(logits).all())
    print("KERNEL_OK")
</pallas_src>

<mosaic_0001>
module attributes {stable_mosaic.version = 11 : i64} {
  func.func @_fused_llm_kernel(%arg0: memref<16x32xf32, #tpu.memory_space<vmem>>, %arg1: memref<4x16x16xf32, #tpu.memory_space<vmem>>, %arg2: memref<2x1x32xf32, #tpu.memory_space<vmem>>, %arg3: memref<2x1x32xf32, #tpu.memory_space<vmem>>, %arg4: memref<2x32x64xf32, #tpu.memory_space<vmem>>, %arg5: memref<2x32x64xf32, #tpu.memory_space<vmem>>, %arg6: memref<2x4x64xf32, #tpu.memory_space<vmem>>, %arg7: memref<2x1x64xf32, #tpu.memory_space<vmem>>, %arg8: memref<2x64x64xf32, #tpu.memory_space<vmem>>, %arg9: memref<2x1x64xf32, #tpu.memory_space<vmem>>, %arg10: memref<2x64x16xf32, #tpu.memory_space<vmem>>, %arg11: memref<2x64x16xf32, #tpu.memory_space<vmem>>, %arg12: memref<2x64x32xf32, #tpu.memory_space<vmem>>, %arg13: memref<2x16x1xf32, #tpu.memory_space<vmem>>, %arg14: memref<2x1x64xf32, #tpu.memory_space<vmem>>, %arg15: memref<1x32xf32, #tpu.memory_space<vmem>>, %arg16: memref<1x32xf32, #tpu.memory_space<vmem>>, %arg17: memref<32x128xf32, #tpu.memory_space<vmem>>, %arg18: memref<1x128xf32, #tpu.memory_space<vmem>>, %arg19: memref<16x128xf32, #tpu.memory_space<vmem>>, %arg20: memref<16x16x64xf32, #tpu.memory_space<vmem>>, %arg21: memref<16x16x64xf32, #tpu.memory_space<vmem>>, %arg22: memref<16x16x64xf32, #tpu.memory_space<vmem>>) attributes {dimension_semantics = [], scalar_prefetch = 0 : i64, scratch_operands = 3 : i64, tpu.core_type = #tpu.core_type<tc>} {
    %c0 = arith.constant 0 : index
    %c0_0 = arith.constant 0 : index
    %0 = vector.load %arg0[%c0, %c0_0] : memref<16x32xf32, #tpu.memory_space<vmem>>, vector<16x32xf32>
    %c0_1 = arith.constant 0 : index
    %c0_2 = arith.constant 0 : index
    %c0_3 = arith.constant 0 : index
    %1 = vector.load %arg2[%c0_1, %c0_2, %c0_3] : memref<2x1x32xf32, #tpu.memory_space<vmem>>, vector<1x1x32xf32>
    %2 = vector.shape_cast %1 : vector<1x1x32xf32> to vector<1x32xf32>
    %c0_4 = arith.constant 0 : index
    %c0_5 = arith.constant 0 : index
    %c0_6 = arith.constant 0 : index
    %3 = vector.load %arg3[%c0_4, %c0_5, %c0_6] : memref<2x1x32xf32, #tpu.memory_space<vmem>>, vector<1x1x32xf32>
    %4 = vector.shape_cast %3 : vector<1x1x32xf32> to vector<1x32xf32>
    %cst = arith.constant dense<0.000000e+00> : vector<16xf32>
    %5 = vector.multi_reduction <add>, %0, %cst [1] : vector<16x32xf32> to vector<16xf32>
    %6 = vector.shape_cast %5 : vector<16xf32> to vector<16x1xf32>
    %cst_7 = arith.constant 3.200000e+01 : f32
    %7 = vector.broadcast %cst_7 : f32 to vector<16x1xf32>
    %8 = arith.divf %6, %7 : vector<16x1xf32>
    %9 = vector.broadcast %8 : vector<16x1xf32> to vector<16x32xf32>
    %10 = arith.subf %0, %9 : vector<16x32xf32>
    %11 = arith.mulf %10, %10 : vector<16x32xf32>
    %cst_8 = arith.constant dense<0.000000e+00> : vector<16xf32>
    %12 = vector.multi_reduction <add>, %11, %cst_8 [1] : vector<16x32xf32> to vector<16xf32>
    %13 = vector.shape_cast %12 : vector<16xf32> to vector<16x1xf32>
    %cst_9 = arith.constant 3.200000e+01 : f32
    %14 = vector.broadcast %cst_9 : f32 to vector<16x1xf32>
    %15 = arith.divf %13, %14 : vector<16x1xf32>
    %16 = vector.broadcast %8 : vector<16x1xf32> to vector<16x32xf32>
    %17 = arith.subf %0, %16 : vector<16x32xf32>
    %cst_10 = arith.constant 9.99999974E-6 : f32
    %18 = vector.broadcast %cst_10 : f32 to vector<16x1xf32>
    %19 = arith.addf %15, %18 : vector<16x1xf32>
    %20 = math.rsqrt %19 : vector<16x1xf32>
    %21 = vector.broadcast %20 : vector<16x1xf32> to vector<16x32xf32>
    %22 = arith.mulf %17, %21 : vector<16x32xf32>
    %23 = vector.broadcast %2 : vector<1x32xf32> to vector<16x32xf32>
    %24 = arith.mulf %22, %23 : vector<16x32xf32>
    %25 = vector.broadcast %4 : vector<1x32xf32> to vector<16x32xf32>
    %26 = arith.addf %24, %25 : vector<16x32xf32>
    %c0_11 = arith.constant 0 : index
    %c0_12 = arith.constant 0 : index
    %c0_13 = arith.constant 0 : index
    %27 = vector.load %arg4[%c0_11, %c0_12, %c0_13] : memref<2x32x64xf32, #tpu.memory_space<vmem>>, vector<1x32x64xf32>
    %28 = vector.shape_cast %27 : vector<1x32x64xf32> to vector<32x64xf32>
    %cst_14 = arith.constant dense<0.000000e+00> : vector<16x64xf32>
    %29 = tpu.matmul %26, %28, %cst_14 {dimension_numbers = #tpu.dot_dimension_numbers<[1], [0], [0], [1], [0, 0, 1, 1], [], []>} : vector<16x32xf32>, vector<32x64xf32>, vector<16x64xf32> -> vector<16x64xf32>
    %c0_15 = arith.constant 0 : index
    %c0_16 = arith.constant 0 : index
    %c0_17 = arith.constant 0 : index
    %30 = vector.load %arg5[%c0_15, %c0_16, %c0_17] : memref<2x32x64xf32, #tpu.memory_space<vmem>>, vector<1x32x64xf32>
    %31 = vector.shape_cast %30 : vector<1x32x64xf32> to vector<32x64xf32>
    %cst_18 = arith.constant dense<0.000000e+00> : vector<16x64xf32>
    %32 = tpu.matmul %26, %31, %cst_18 {dimension_numbers = #tpu.dot_dimension_numbers<[1], [0], [0], [1], [0, 0, 1, 1], [], []>} : vector<16x32xf32>, vector<32x64xf32>, vector<16x64xf32> -> vector<16x64xf32>
    %c0_19 = arith.constant 0 : index
    %c0_20 = arith.constant 0 : index
    %c0_21 = arith.constant 0 : index
    %33 = vector.load %arg6[%c0_19, %c0_20, %c0_21] : memref<2x4x64xf32, #tpu.memory_space<vmem>>, vector<1x4x64xf32>
    %34 = vector.shape_cast %33 : vector<1x4x64xf32> to vector<4x64xf32>
    %cst_22 = arith.constant 0.000000e+00 : f32
    %35 = vector.broadcast %cst_22 : f32 to vector<16x64xf32>
    %c0_23 = arith.constant 0 : index
    %c0_24 = arith.constant 0 : index
    %c0_25 = arith.constant 0 : index
    %36 = vector.load %arg1[%c0_23, %c0_24, %c0_25] : memref<4x16x16xf32, #tpu.memory_space<vmem>>, vector<1x16x16xf32>
    %37 = vector.shape_cast %36 : vector<1x16x16xf32> to vector<16x16xf32>
    %cst_26 = arith.constant dense<0.000000e+00> : vector<16x64xf32>
    %38 = tpu.matmul %37, %29, %cst_26 {dimension_numbers = #tpu.dot_dimension_numbers<[1], [0], [0], [1], [0, 0, 1, 1], [], []>} : vector<16x16xf32>, vector<16x64xf32>, vector<16x64xf32> -> vector<16x64xf32>
    %39 = vector.extract_strided_slice %34 {offsets = [0, 0], sizes = [1, 64], strides = [1, 1]} : vector<4x64xf32> to vector<1x64xf32>
    %40 = vector.broadcast %39 : vector<1x64xf32> to vector<16x64xf32>
    %41 = arith.mulf %38, %40 : vector<16x64xf32>
    %42 = arith.addf %35, %41 : vector<16x64xf32>
    %c1 = arith.constant 1 : index
    %c0_27 = arith.constant 0 : index
    %c0_28 = arith.constant 0 : index
    %43 = vector.load %arg1[%c1, %c0_27, %c0_28] : memref<4x16x16xf32, #tpu.memory_space<vmem>>, vector<1x16x16xf32>
    %44 = vector.shape_cast %43 : vector<1x16x16xf32> to vector<16x16xf32>
    %cst_29 = arith.constant dense<0.000000e+00> : vector<16x64xf32>
    %45 = tpu.matmul %44, %29, %cst_29 {dimension_numbers = #tpu.dot_dimension_numbers<[1], [0], [0], [1], [0, 0, 1, 1], [], []>} : vector<16x16xf32>, vector<16x64xf32>, vector<16x64xf32> -> vector<16x64xf32>
    %46 = vector.extract_strided_slice %34 {offsets = [1, 0], sizes = [1, 64], strides = [1, 1]} : vector<4x64xf32> to vector<1x64xf32>
    %47 = vector.broadcast %46 : vector<1x64xf32> to vector<16x64xf32>
    %48 = arith.mulf %45, %47 : vector<16x64xf32>
    %49 = arith.addf %42, %48 : vector<16x64xf32>
    %c2 = arith.constant 2 : index
    %c0_30 = arith.constant 0 : index
    %c0_31 = arith.constant 0 : index
    %50 = vector.load %arg1[%c2, %c0_30, %c0_31] : memref<4x16x16xf32, #tpu.memory_space<vmem>>, vector<1x16x16xf32>
    %51 = vector.shape_cast %50 : vector<1x16x16xf32> to vector<16x16xf32>
    %cst_32 = arith.constant dense<0.000000e+00> : vector<16x64xf32>
    %52 = tpu.matmul %51, %29, %cst_32 {dimension_numbers = #tpu.dot_dimension_numbers<[1], [0], [0], [1], [0, 0, 1, 1], [], []>} : vector<16x16xf32>, vector<16x64xf32>, vector<16x64xf32> -> vector<16x64xf32>
    %53 = vector.extract_strided_slice %34 {offsets = [2, 0], sizes = [1, 64], strides = [1, 1]} : vector<4x64xf32> to vector<1x64xf32>
    %54 = vector.broadcast %53 : vector<1x64xf32> to vector<16x64xf32>
    %55 = arith.mulf %52, %54 : vector<16x64xf32>
    %56 = arith.addf %49, %55 : vector<16x64xf32>
    %c3 = arith.constant 3 : index
    %c0_33 = arith.constant 0 : index
    %c0_34 = arith.constant 0 : index
    %57 = vector.load %arg1[%c3, %c0_33, %c0_34] : memref<4x16x16xf32, #tpu.memory_space<vmem>>, vector<1x16x16xf32>
    %58 = vector.shape_cast %57 : vector<1x16x16xf32> to vector<16x16xf32>
    %cst_35 = arith.constant dense<0.000000e+00> : vector<16x64xf32>
    %59 = tpu.matmul %58, %29, %cst_35 {dimension_numbers = #tpu.dot_dimension_numbers<[1], [0], [0], [1], [0, 0, 1, 1], [], []>} : vector<16x16xf32>, vector<16x64xf32>, vector<16x64xf32> -> vector<16x64xf32>
    %60 = vector.extract_strided_slice %34 {offsets = [3, 0], sizes = [1, 64], strides = [1, 1]} : vector<4x64xf32> to vector<1x64xf32>
    %61 = vector.broadcast %60 : vector<1x64xf32> to vector<16x64xf32>
    %62 = arith.mulf %59, %61 : vector<16x64xf32>
    %63 = arith.addf %56, %62 : vector<16x64xf32>
    %c0_36 = arith.constant 0 : index
    %c0_37 = arith.constant 0 : index
    %c0_38 = arith.constant 0 : index
    %64 = vector.load %arg7[%c0_36, %c0_37, %c0_38] : memref<2x1x64xf32, #tpu.memory_space<vmem>>, vector<1x1x64xf32>
    %65 = vector.shape_cast %64 : vector<1x1x64xf32> to vector<1x64xf32>
    %66 = vector.broadcast %65 : vector<1x64xf32> to vector<16x64xf32>
    %67 = arith.addf %63, %66 : vector<16x64xf32>
    %68 = arith.negf %67 : vector<16x64xf32>
    %69 = math.exp %68 : vector<16x64xf32>
    %cst_39 = arith.constant 1.000000e+00 : f32
    %70 = vector.broadcast %cst_39 : f32 to vector<16x64xf32>
    %71 = arith.addf %70, %69 : vector<16x64xf32>
    %72 = arith.divf %70, %71 : vector<16x64xf32>
    %73 = arith.mulf %67, %72 : vector<16x64xf32>
    %c0_40 = arith.constant 0 : index
    %c0_41 = arith.constant 0 : index
    %c0_42 = arith.constant 0 : index
    %74 = vector.load %arg8[%c0_40, %c0_41, %c0_42] : memref<2x64x64xf32, #tpu.memory_space<vmem>>, vector<1x64x64xf32>
    %75 = vector.shape_cast %74 : vector<1x64x64xf32> to vector<64x64xf32>
    %cst_43 = arith.constant dense<0.000000e+00> : vector<16x64xf32>
    %76 = tpu.matmul %73, %75, %cst_43 {dimension_numbers = #tpu.dot_dimension_numbers<[1], [0], [0], [1], [0, 0, 1, 1], [], []>} : vector<16x64xf32>, vector<64x64xf32>, vector<16x64xf32> -> vector<16x64xf32>
    %c0_44 = arith.constant 0 : index
    %c0_45 = arith.constant 0 : index
    %c0_46 = arith.constant 0 : index
    %77 = vector.load %arg9[%c0_44, %c0_45, %c0_46] : memref<2x1x64xf32, #tpu.memory_space<vmem>>, vector<1x1x64xf32>
    %78 = vector.shape_cast %77 : vector<1x1x64xf32> to vector<1x64xf32>
    %79 = vector.broadcast %78 : vector<1x64xf32> to vector<16x64xf32>
    %80 = arith.addf %76, %79 : vector<16x64xf32>
    %cst_47 = arith.constant 0.000000e+00 : f32
    %81 = vector.broadcast %cst_47 : f32 to vector<16x64xf32>
    %82 = arith.maximumf %80, %81 : vector<16x64xf32>
    %83 = vector.broadcast %cst_47 : f32 to vector<16x64xf32>
    %84 = arith.subf %80, %83 : vector<16x64xf32>
    %85 = arith.cmpf one, %84, %84 : vector<16x64xf32>
    %86 = vector.broadcast %cst_47 : f32 to vector<16x64xf32>
    %87 = arith.addf %80, %86 : vector<16x64xf32>
    %88 = math.absf %84 : vector<16x64xf32>
    %cst_48 = arith.constant 0.000000e+00 : f32
    %89 = vector.broadcast %cst_48 : f32 to vector<16x64xf32>
    %90 = arith.subf %89, %88 : vector<16x64xf32>
    %91 = math.exp %90 : vector<16x64xf32>
    %92 = math.log1p %91 : vector<16x64xf32>
    %93 = arith.addf %82, %92 : vector<16x64xf32>
    %94 = arith.select %85, %87, %93 : vector<16x64xi1>, vector<16x64xf32>
    %c0_49 = arith.constant 0 : index
    %c0_50 = arith.constant 0 : index
    %c0_51 = arith.constant 0 : index
    %95 = vector.load %arg10[%c0_49, %c0_50, %c0_51] : memref<2x64x16xf32, #tpu.memory_space<vmem>>, vector<1x64x16xf32>
    %96 = vector.shape_cast %95 : vector<1x64x16xf32> to vector<64x16xf32>
    %cst_52 = arith.constant dense<0.000000e+00> : vector<16x16xf32>
    %97 = tpu.matmul %73, %96, %cst_52 {dimension_numbers = #tpu.dot_dimension_numbers<[1], [0], [0], [1], [0, 0, 1, 1], [], []>} : vector<16x64xf32>, vector<64x16xf32>, vector<16x16xf32> -> vector<16x16xf32>
    %c0_53 = arith.constant 0 : index
    %c0_54 = arith.constant 0 : index
    %c0_55 = arith.constant 0 : index
    %98 = vector.load %arg11[%c0_53, %c0_54, %c0_55] : memref<2x64x16xf32, #tpu.memory_space<vmem>>, vector<1x64x16xf32>
    %99 = vector.shape_cast %98 : vector<1x64x16xf32> to vector<64x16xf32>
    %cst_56 = arith.constant dense<0.000000e+00> : vector<16x16xf32>
    %100 = tpu.matmul %73, %99, %cst_56 {dimension_numbers = #tpu.dot_dimension_numbers<[1], [0], [0], [1], [0, 0, 1, 1], [], []>} : vector<16x64xf32>, vector<64x16xf32>, vector<16x16xf32> -> vector<16x16xf32>
    %c0_57 = arith.constant 0 : index
    %c0_58 = arith.constant 0 : index
    %c0_59 = arith.constant 0 : index
    %101 = vector.load %arg13[%c0_57, %c0_58, %c0_59] : memref<2x16x1xf32, #tpu.memory_space<vmem>>, vector<1x16x1xf32>
    %102 = vector.shape_cast %101 : vector<1x16x1xf32> to vector<16x1xf32>
    %103 = vector.shape_cast %94 : vector<16x64xf32> to vector<16x1x64xf32>
    %104 = vector.shape_cast %102 : vector<16x1xf32> to vector<1x16x1xf32>
    %105 = vector.broadcast %103 : vector<16x1x64xf32> to vector<16x16x64xf32>
    %106 = vector.broadcast %104 : vector<1x16x1xf32> to vector<16x16x64xf32>
    %107 = arith.mulf %105, %106 : vector<16x16x64xf32>
    %108 = math.exp %107 : vector<16x16x64xf32>
    %c0_60 = arith.constant 0 : index
    %c0_61 = arith.constant 0 : index
    %c0_62 = arith.constant 0 : index
    %109 = vector.load %arg20[%c0_60, %c0_61, %c0_62] : memref<16x16x64xf32, #tpu.memory_space<vmem>>, vector<16x16x64xf32>
    tpu.vector_store %arg20[%c0_60, %c0_61, %c0_62], %108 {strides = array<i32>} : memref<16x16x64xf32, #tpu.memory_space<vmem>>, vector<16x16x64xf32>,
    %110 = arith.mulf %94, %73 : vector<16x64xf32>
    %111 = vector.shape_cast %110 : vector<16x64xf32> to vector<16x1x64xf32>
    %112 = vector.shape_cast %97 : vector<16x16xf32> to vector<16x16x1xf32>
    %113 = vector.broadcast %111 : vector<16x1x64xf32> to vector<16x16x64xf32>
    %114 = vector.broadcast %112 : vector<16x16x1xf32> to vector<16x16x64xf32>
    %115 = arith.mulf %113, %114 : vector<16x16x64xf32>
    %c0_63 = arith.constant 0 : index
    %c0_64 = arith.constant 0 : index
    %c0_65 = arith.constant 0 : index
    %116 = vector.load %arg21[%c0_63, %c0_64, %c0_65] : memref<16x16x64xf32, #tpu.memory_space<vmem>>, vector<16x16x64xf32>
    tpu.vector_store %arg21[%c0_63, %c0_64, %c0_65], %115 {strides = array<i32>} : memref<16x16x64xf32, #tpu.memory_space<vmem>>, vector<16x16x64xf32>,
    %cst_66 = arith.constant 0.000000e+00 : f32
    %117 = vector.broadcast %cst_66 : f32 to vector<16x64xf32>
    %c0_i32 = arith.constant 0 : i32
    %c0_i32_67 = arith.constant 0 : i32
    %118 = arith.addi %c0_i32_67, %c0_i32 : i32
    %119 = arith.index_cast %118 : i32 to index
    %c0_68 = arith.constant 0 : index
    %c0_69 = arith.constant 0 : index
    %120 = vector.load %arg20[%119, %c0_68, %c0_69] : memref<16x16x64xf32, #tpu.memory_space<vmem>>, vector<1x16x64xf32>
    %121 = vector.shape_cast %120 : vector<1x16x64xf32> to vector<16x64xf32>
    %122 = arith.mulf %121, %117 : vector<16x64xf32>
    %123 = arith.index_cast %118 : i32 to index
    %c0_70 = arith.constant 0 : index
    %c0_71 = arith.constant 0 : index
    %124 = vector.load %arg21[%123, %c0_70, %c0_71] : memref<16x16x64xf32, #tpu.memory_space<vmem>>, vector<1x16x64xf32>
    %125 = vector.shape_cast %124 : vector<1x16x64xf32> to vector<16x64xf32>
    %126 = arith.addf %122, %125 : vector<16x64xf32>
    %127 = arith.index_cast %118 : i32 to index
    %c0_72 = arith.constant 0 : index
    %c0_73 = arith.constant 0 : index
    %128 = vector.load %arg22[%127, %c0_72, %c0_73] : memref<16x16x64xf32, #tpu.memory_space<vmem>>, vector<1x16x64xf32>
    %129 = vector.shape_cast %128 : vector<1x16x64xf32> to vector<16x64xf32>
    %130 = vector.shape_cast %126 : vector<16x64xf32> to vector<1x16x64xf32>
    tpu.vector_store %arg22[%127, %c0_72, %c0_73], %130 {strides = array<i32>} : memref<16x16x64xf32, #tpu.memory_space<vmem>>, vector<1x16x64xf32>,
    %c8_i32 = arith.constant 8 : i32
    %131 = arith.addi %c8_i32, %c0_i32 : i32
    %132 = arith.index_cast %131 : i32 to index
    %c0_74 = arith.constant 0 : index
    %c0_75 = arith.constant 0 : index
    %133 = vector.load %arg20[%132, %c0_74, %c0_75] : memref<16x16x64xf32, #tpu.memory_space<vmem>>, vector<1x16x64xf32>
    %134 = vector.shape_cast %133 : vector<1x16x64xf32> to vector<16x64xf32>
    %135 = arith.mulf %134, %117 : vector<16x64xf32>
    %136 = arith.index_cast %131 : i32 to index
    %c0_76 = arith.constant 0 : index
    %c0_77 = arith.constant 0 : index
    %137 = vector.load %arg21[%136, %c0_76, %c0_77] : memref<16x16x64xf32, #tpu.memory_space<vmem>>, vector<1x16x64xf32>
    %138 = vector.shape_cast %137 : vector<1x16x64xf32> to vector<16x64xf32>
    %139 = arith.addf %135, %138 : vector<16x64xf32>
    %140 = arith.index_cast %131 : i32 to index
    %c0_78 = arith.constant 0 : index
    %c0_79 = arith.constant 0 : index
    %141 = vector.load %arg22[%140, %c0_78, %c0_79] : memref<16x16x64xf32, #tpu.memory_space<vmem>>, vector<1x16x64xf32>
    %142 = vector.shape_cast %141 : vector<1x16x64xf32> to vector<16x64xf32>
    %143 = vector.shape_cast %139 : vector<16x64xf32> to vector<1x16x64xf32>
    tpu.vector_store %arg22[%140, %c0_78, %c0_79], %143 {strides = array<i32>} : memref<16x16x64xf32, #tpu.memory_space<vmem>>, vector<1x16x64xf32>,
    %c1_i32 = arith.constant 1 : i32
    %c0_i32_80 = arith.constant 0 : i32
    %144 = arith.addi %c0_i32_80, %c1_i32 : i32
    %145 = arith.index_cast %144 : i32 to index
    %c0_81 = arith.constant 0 : index
    %c0_82 = arith.constant 0 : index
    %146 = vector.load %arg20[%145, %c0_81, %c0_82] : memref<16x16x64xf32, #tpu.memory_space<vmem>>, vector<1x16x64xf32>
    %147 = vector.shape_cast %146 : vector<1x16x64xf32> to vector<16x64xf32>
    %148 = arith.mulf %147, %126 : vector<16x64xf32>
    %149 = arith.index_cast %144 : i32 to index
    %c0_83 = arith.constant 0 : index
    %c0_84 = arith.constant 0 : index
    %150 = vector.load %arg21[%149, %c0_83, %c0_84] : memref<16x16x64xf32, #tpu.memory_space<vmem>>, vector<1x16x64xf32>
    %151 = vector.shape_cast %150 : vector<1x16x64xf32> to vector<16x64xf32>
    %152 = arith.addf %148, %151 : vector<16x64xf32>
    %153 = arith.index_cast %144 : i32 to index
    %c0_85 = arith.constant 0 : index
    %c0_86 = arith.constant 0 : index
    %154 = vector.load %arg22[%153, %c0_85, %c0_86] : memref<16x16x64xf32, #tpu.memory_space<vmem>>, vector<1x16x64xf32>
    %155 = vector.shape_cast %154 : vector<1x16x64xf32> to vector<16x64xf32>
    %156 = vector.shape_cast %152 : vector<16x64xf32> to vector<1x16x64xf32>
    tpu.vector_store %arg22[%153, %c0_85, %c0_86], %156 {strides = array<i32>} : memref<16x16x64xf32, #tpu.memory_space<vmem>>, vector<1x16x64xf32>,
    %c8_i32_87 = arith.constant 8 : i32
    %157 = arith.addi %c8_i32_87, %c1_i32 : i32
    %158 = arith.index_cast %157 : i32 to index
    %c0_88 = arith.constant 0 : index
    %c0_89 = arith.constant 0 : index
    %159 = vector.load %arg20[%158, %c0_88, %c0_89] : memref<16x16x64xf32, #tpu.memory_space<vmem>>, vector<1x16x64xf32>
    %160 = vector.shape_cast %159 : vector<1x16x64xf32> to vector<16x64xf32>
    %161 = arith.mulf %160, %139 : vector<16x64xf32>
    %162 = arith.index_cast %157 : i32 to index
    %c0_90 = arith.constant 0 : index
    %c0_91 = arith.constant 0 : index
    %163 = vector.load %arg21[%162, %c0_90, %c0_91] : memref<16x16x64xf32, #tpu.memory_space<vmem>>, vector<1x16x64xf32>
    %164 = vector.shape_cast %163 : vector<1x16x64xf32> to vector<16x64xf32>
    %165 = arith.addf %161, %164 : vector<16x64xf32>
    %166 = arith.index_cast %157 : i32 to index
    %c0_92 = arith.constant 0 : index
    %c0_93 = arith.constant 0 : index
    %167 = vector.load %arg22[%166, %c0_92, %c0_93] : memref<16x16x64xf32, #tpu.memory_space<vmem>>, vector<1x16x64xf32>
    %168 = vector.shape_cast %167 : vector<1x16x64xf32> to vector<16x64xf32>
    %169 = vector.shape_cast %165 : vector<16x64xf32> to vector<1x16x64xf32>
    tpu.vector_store %arg22[%166, %c0_92, %c0_93], %169 {strides = array<i32>} : memref<16x16x64xf32, #tpu.memory_space<vmem>>, vector<1x16x64xf32>,
    %c2_i32 = arith.constant 2 : i32
    %c0_i32_94 = arith.constant 0 : i32
    %170 = arith.addi %c0_i32_94, %c2_i32 : i32
    %171 = arith.index_cast %170 : i32 to index
    %c0_95 = arith.constant 0 : index
    %c0_96 = arith.constant 0 : index
    %172 = vector.load %arg20[%171, %c0_95, %c0_96] : memref<16x16x64xf32, #tpu.memory_space<vmem>>, vector<1x16x64xf32>
    %173 = vector.shape_cast %172 : vector<1x16x64xf32> to vector<16x64xf32>
    %174 = arith.mulf %173, %152 : vector<16x64xf32>
    %175 = arith.index_cast %170 : i32 to index
    %c0_97 = arith.constant 0 : index
    %c0_98 = arith.constant 0 : index
    %176 = vector.load %arg21[%175, %c0_97, %c0_98] : memref<16x16x64xf32, #tpu.memory_space<vmem>>, vector<1x16x64xf32>
    %177 = vector.shape_cast %176 : vector<1x16x64xf32> to vector<16x64xf32>
    %178 = arith.addf %174, %177 : vector<16x64xf32>
    %179 = arith.index_cast %170 : i32 to index
    %c0_99 = arith.constant 0 : index
    %c0_100 = arith.constant 0 : index
    %180 = vector.load %arg22[%179, %c0_99, %c0_100] : memref<16x16x64xf32, #tpu.memory_space<vmem>>, vector<1x16x64xf32>
    %181 = vector.shape_cast %180 : vector<1x16x64xf32> to vector<16x64xf32>
    %182 = vector.shape_cast %178 : vector<16x64xf32> to vector<1x16x64xf32>
    tpu.vector_store %arg22[%179, %c0_99, %c0_100], %182 {strides = array<i32>} : memref<16x16x64xf32, #tpu.memory_space<vmem>>, vector<1x16x64xf32>,
    %c8_i32_101 = arith.constant 8 : i32
    %183 = arith.addi %c8_i32_101, %c2_i32 : i32
    %184 = arith.index_cast %183 : i32 to index
    %c0_102 = arith.constant 0 : index
    %c0_103 = arith.constant 0 : index
    %185 = vector.load %arg20[%184, %c0_102, %c0_103] : memref<16x16x64xf32, #tpu.memory_space<vmem>>, vector<1x16x64xf32>
    %186 = vector.shape_cast %185 : vector<1x16x64xf32> to vector<16x64xf32>
    %187 = arith.mulf %186, %165 : vector<16x64xf32>
    %188 = arith.index_cast %183 : i32 to index
    %c0_104 = arith.constant 0 : index
    %c0_105 = arith.constant 0 : index
    %189 = vector.load %arg21[%188, %c0_104, %c0_105] : memref<16x16x64xf32, #tpu.memory_space<vmem>>, vector<1x16x64xf32>
    %190 = vector.shape_cast %189 : vector<1x16x64xf32> to vector<16x64xf32>
    %191 = arith.addf %187, %190 : vector<16x64xf32>
    %192 = arith.index_cast %183 : i32 to index
    %c0_106 = arith.constant 0 : index
    %c0_107 = arith.constant 0 : index
    %193 = vector.load %arg22[%192, %c0_106, %c0_107] : memref<16x16x64xf32, #tpu.memory_space<vmem>>, vector<1x16x64xf32>
    %194 = vector.shape_cast %193 : vector<1x16x64xf32> to vector<16x64xf32>
    %195 = vector.shape_cast %191 : vector<16x64xf32> to vector<1x16x64xf32>
    tpu.vector_store %arg22[%192, %c0_106, %c0_107], %195 {strides = array<i32>} : memref<16x16x64xf32, #tpu.memory_space<vmem>>, vector<1x16x64xf32>,
    %c3_i32 = arith.constant 3 : i32
    %c0_i32_108 = arith.constant 0 : i32
    %196 = arith.addi %c0_i32_108, %c3_i32 : i32
    %197 = arith.index_cast %196 : i32 to index
    %c0_109 = arith.constant 0 : index
    %c0_110 = arith.constant 0 : index
    %198 = vector.load %arg20[%197, %c0_109, %c0_110] : memref<16x16x64xf32, #tpu.memory_space<vmem>>, vector<1x16x64xf32>
    %199 = vector.shape_cast %198 : vector<1x16x64xf32> to vector<16x64xf32>
    %200 = arith.mulf %199, %178 : vector<16x64xf32>
    %201 = arith.index_cast %196 : i32 to index
    %c0_111 = arith.constant 0 : index
    %c0_112 = arith.constant 0 : index
    %202 = vector.load %arg21[%201, %c0_111, %c0_112] : memref<16x16x64xf32, #tpu.memory_space<vmem>>, vector<1x16x64xf32>
    %203 = vector.shape_cast %202 : vector<1x16x64xf32> to vector<16x64xf32>
    %204 = arith.addf %200, %203 : vector<16x64xf32>
    %205 = arith.index_cast %196 : i32 to index
    %c0_113 = arith.constant 0 : index
    %c0_114 = arith.constant 0 : index
    %206 = vector.load %arg22[%205, %c0_113, %c0_114] : memref<16x16x64xf32, #tpu.memory_space<vmem>>, vector<1x16x64xf32>
    %207 = vector.shape_cast %206 : vector<1x16x64xf32> to vector<16x64xf32>
    %208 = vector.shape_cast %204 : vector<16x64xf32> to vector<1x16x64xf32>
    tpu.vector_store %arg22[%205, %c0_113, %c0_114], %208 {strides = array<i32>} : memref<16x16x64xf32, #tpu.memory_space<vmem>>, vector<1x16x64xf32>,
    %c8_i32_115 = arith.constant 8 : i32
    %209 = arith.addi %c8_i32_115, %c3_i32 : i32
    %210 = arith.index_cast %209 : i32 to index
    %c0_116 = arith.constant 0 : index
    %c0_117 = arith.constant 0 : index
    %211 = vector.load %arg20[%210, %c0_116, %c0_117] : memref<16x16x64xf32, #tpu.memory_space<vmem>>, vector<1x16x64xf32>
    %212 = vector.shape_cast %211 : vector<1x16x64xf32> to vector<16x64xf32>
    %213 = arith.mulf %212, %191 : vector<16x64xf32>
    %214 = arith.index_cast %209 : i32 to index
    %c0_118 = arith.constant 0 : index
    %c0_119 = arith.constant 0 : index
    %215 = vector.load %arg21[%214, %c0_118, %c0_119] : memref<16x16x64xf32, #tpu.memory_space<vmem>>, vector<1x16x64xf32>
    %216 = vector.shape_cast %215 : vector<1x16x64xf32> to vector<16x64xf32>
    %217 = arith.addf %213, %216 : vector<16x64xf32>
    %218 = arith.index_cast %209 : i32 to index
    %c0_120 = arith.constant 0 : index
    %c0_121 = arith.constant 0 : index
    %219 = vector.load %arg22[%218, %c0_120, %c0_121] : memref<16x16x64xf32, #tpu.memory_space<vmem>>, vector<1x16x64xf32>
    %220 = vector.shape_cast %219 : vector<1x16x64xf32> to vector<16x64xf32>
    %221 = vector.shape_cast %217 : vector<16x64xf32> to vector<1x16x64xf32>
    tpu.vector_store %arg22[%218, %c0_120, %c0_121], %221 {strides = array<i32>} : memref<16x16x64xf32, #tpu.memory_space<vmem>>, vector<1x16x64xf32>,
    %c4_i32 = arith.constant 4 : i32
    %c0_i32_122 = arith.constant 0 : i32
    %222 = arith.addi %c0_i32_122, %c4_i32 : i32
    %223 = arith.index_cast %222 : i32 to index
    %c0_123 = arith.constant 0 : index
    %c0_124 = arith.constant 0 : index
    %224 = vector.load %arg20[%223, %c0_123, %c0_124] : memref<16x16x64xf32, #tpu.memory_space<vmem>>, vector<1x16x64xf32>
    %225 = vector.shape_cast %224 : vector<1x16x64xf32> to vector<16x64xf32>
    %226 = arith.mulf %225, %204 : vector<16x64xf32>
    %227 = arith.index_cast %222 : i32 to index
    %c0_125 = arith.constant 0 : index
    %c0_126 = arith.constant 0 : index
    %228 = vector.load %arg21[%227, %c0_125, %c0_126] : memref<16x16x64xf32, #tpu.memory_space<vmem>>, vector<1x16x64xf32>
    %229 = vector.shape_cast %228 : vector<1x16x64xf32> to vector<16x64xf32>
    %230 = arith.addf %226, %229 : vector<16x64xf32>
    %231 = arith.index_cast %222 : i32 to index
    %c0_127 = arith.constant 0 : index
    %c0_128 = arith.constant 0 : index
    %232 = vector.load %arg22[%231, %c0_127, %c0_128] : memref<16x16x64xf32, #tpu.memory_space<vmem>>, vector<1x16x64xf32>
    %233 = vector.shape_cast %232 : vector<1x16x64xf32> to vector<16x64xf32>
    %234 = vector.shape_cast %230 : vector<16x64xf32> to vector<1x16x64xf32>
    tpu.vector_store %arg22[%231, %c0_127, %c0_128], %234 {strides = array<i32>} : memref<16x16x64xf32, #tpu.memory_space<vmem>>, vector<1x16x64xf32>,
    %c8_i32_129 = arith.constant 8 : i32
    %235 = arith.addi %c8_i32_129, %c4_i32 : i32
    %236 = arith.index_cast %235 : i32 to index
    %c0_130 = arith.constant 0 : index
    %c0_131 = arith.constant 0 : index
    %237 = vector.load %arg20[%236, %c0_130, %c0_131] : memref<16x16x64xf32, #tpu.memory_space<vmem>>, vector<1x16x64xf32>
    %238 = vector.shape_cast %237 : vector<1x16x64xf32> to vector<16x64xf32>
    %239 = arith.mulf %238, %217 : vector<16x64xf32>
    %240 = arith.index_cast %235 : i32 to index
    %c0_132 = arith.constant 0 : index
    %c0_133 = arith.constant 0 : index
    %241 = vector.load %arg21[%240, %c0_132, %c0_133] : memref<16x16x64xf32, #tpu.memory_space<vmem>>, vector<1x16x64xf32>
    %242 = vector.shape_cast %241 : vector<1x16x64xf32> to vector<16x64xf32>
    %243 = arith.addf %239, %242 : vector<16x64xf32>
    %244 = arith.index_cast %235 : i32 to index
    %c0_134 = arith.constant 0 : index
    %c0_135 = arith.constant 0 : index
    %245 = vector.load %arg22[%244, %c0_134, %c0_135] : memref<16x16x64xf32, #tpu.memory_space<vmem>>, vector<1x16x64xf32>
    %246 = vector.shape_cast %245 : vector<1x16x64xf32> to vector<16x64xf32>
    %247 = vector.shape_cast %243 : vector<16x64xf32> to vector<1x16x64xf32>
    tpu.vector_store %arg22[%244, %c0_134, %c0_135], %247 {strides = array<i32>} : memref<16x16x64xf32, #tpu.memory_space<vmem>>, vector<1x16x64xf32>,
    %c5_i32 = arith.constant 5 : i32
    %c0_i32_136 = arith.constant 0 : i32
    %248 = arith.addi %c0_i32_136, %c5_i32 : i32
    %249 = arith.index_cast %248 : i32 to index
    %c0_137 = arith.constant 0 : index
    %c0_138 = arith.constant 0 : index
    %250 = vector.load %arg20[%249, %c0_137, %c0_138] : memref<16x16x64xf32, #tpu.memory_space<vmem>>, vector<1x16x64xf32>
    %251 = vector.shape_cast %250 : vector<1x16x64xf32> to vector<16x64xf32>
    %252 = arith.mulf %251, %230 : vector<16x64xf32>
    %253 = arith.index_cast %248 : i32 to index
    %c0_139 = arith.constant 0 : index
    %c0_140 = arith.constant 0 : index
    %254 = vector.load %arg21[%253, %c0_139, %c0_140] : memref<16x16x64xf32, #tpu.memory_space<vmem>>, vector<1x16x64xf32>
    %255 = vector.shape_cast %254 : vector<1x16x64xf32> to vector<16x64xf32>
    %256 = arith.addf %252, %255 : vector<16x64xf32>
    %257 = arith.index_cast %248 : i32 to index
    %c0_141 = arith.constant 0 : index
    %c0_142 = arith.constant 0 : index
    %258 = vector.load %arg22[%257, %c0_141, %c0_142] : memref<16x16x64xf32, #tpu.memory_space<vmem>>, vector<1x16x64xf32>
    %259 = vector.shape_cast %258 : vector<1x16x64xf32> to vector<16x64xf32>
    %260 = vector.shape_cast %256 : vector<16x64xf32> to vector<1x16x64xf32>
    tpu.vector_store %arg22[%257, %c0_141, %c0_142], %260 {strides = array<i32>} : memref<16x16x64xf32, #tpu.memory_space<vmem>>, vector<1x16x64xf32>,
    %c8_i32_143 = arith.constant 8 : i32
    %261 = arith.addi %c8_i32_143, %c5_i32 : i32
    %262 = arith.index_cast %261 : i32 to index
    %c0_144 = arith.constant 0 : index
    %c0_145 = arith.constant 0 : index
    %263 = vector.load %arg20[%262, %c0_144, %c0_145] : memref<16x16x64xf32, #tpu.memory_space<vmem>>, vector<1x16x64xf32>
    %264 = vector.shape_cast %263 : vector<1x16x64xf32> to vector<16x64xf32>
    %265 = arith.mulf %264, %243 : vector<16x64xf32>
    %266 = arith.index_cast %261 : i32 to index
    %c0_146 = arith.constant 0 : index
    %c0_147 = arith.constant 0 : index
    %267 = vector.load %arg21[%266, %c0_146, %c0_147] : memref<16x16x64xf32, #tpu.memory_space<vmem>>, vector<1x16x64xf32>
    %268 = vector.shape_cast %267 : vector<1x16x64xf32> to vector<16x64xf32>
    %269 = arith.addf %265, %268 : vector<16x64xf32>
    %270 = arith.index_cast %261 : i32 to index
    %c0_148 = arith.constant 0 : index
    %c0_149 = arith.constant 0 : index
    %271 = vector.load %arg22[%270, %c0_148, %c0_149] : memref<16x16x64xf32, #tpu.memory_space<vmem>>, vector<1x16x64xf32>
    %272 = vector.shape_cast %271 : vector<1x16x64xf32> to vector<16x64xf32>
    %273 = vector.shape_cast %269 : vector<16x64xf32> to vector<1x16x64xf32>
    tpu.vector_store %arg22[%270, %c0_148, %c0_149], %273 {strides = array<i32>} : memref<16x16x64xf32, #tpu.memory_space<vmem>>, vector<1x16x64xf32>,
    %c6_i32 = arith.constant 6 : i32
    %c0_i32_150 = arith.constant 0 : i32
    %274 = arith.addi %c0_i32_150, %c6_i32 : i32
    %275 = arith.index_cast %274 : i32 to index
    %c0_151 = arith.constant 0 : index
    %c0_152 = arith.constant 0 : index
    %276 = vector.load %arg20[%275, %c0_151, %c0_152] : memref<16x16x64xf32, #tpu.memory_space<vmem>>, vector<1x16x64xf32>
    %277 = vector.shape_cast %276 : vector<1x16x64xf32> to vector<16x64xf32>
    %278 = arith.mulf %277, %256 : vector<16x64xf32>
    %279 = arith.index_cast %274 : i32 to index
    %c0_153 = arith.constant 0 : index
    %c0_154 = arith.constant 0 : index
    %280 = vector.load %arg21[%279, %c0_153, %c0_154] : memref<16x16x64xf32, #tpu.memory_space<vmem>>, vector<1x16x64xf32>
    %281 = vector.shape_cast %280 : vector<1x16x64xf32> to vector<16x64xf32>
    %282 = arith.addf %278, %281 : vector<16x64xf32>
    %283 = arith.index_cast %274 : i32 to index
    %c0_155 = arith.constant 0 : index
    %c0_156 = arith.constant 0 : index
    %284 = vector.load %arg22[%283, %c0_155, %c0_156] : memref<16x16x64xf32, #tpu.memory_space<vmem>>, vector<1x16x64xf32>
    %285 = vector.shape_cast %284 : vector<1x16x64xf32> to vector<16x64xf32>
    %286 = vector.shape_cast %282 : vector<16x64xf32> to vector<1x16x64xf32>
    tpu.vector_store %arg22[%283, %c0_155, %c0_156], %286 {strides = array<i32>} : memref<16x16x64xf32, #tpu.memory_space<vmem>>, vector<1x16x64xf32>,
    %c8_i32_157 = arith.constant 8 : i32
    %287 = arith.addi %c8_i32_157, %c6_i32 : i32
    %288 = arith.index_cast %287 : i32 to index
    %c0_158 = arith.constant 0 : index
    %c0_159 = arith.constant 0 : index
    %289 = vector.load %arg20[%288, %c0_158, %c0_159] : memref<16x16x64xf32, #tpu.memory_space<vmem>>, vector<1x16x64xf32>
    %290 = vector.shape_cast %289 : vector<1x16x64xf32> to vector<16x64xf32>
    %291 = arith.mulf %290, %269 : vector<16x64xf32>
    %292 = arith.index_cast %287 : i32 to index
    %c0_160 = arith.constant 0 : index
    %c0_161 = arith.constant 0 : index
    %293 = vector.load %arg21[%292, %c0_160, %c0_161] : memref<16x16x64xf32, #tpu.memory_space<vmem>>, vector<1x16x64xf32>
    %294 = vector.shape_cast %293 : vector<1x16x64xf32> to vector<16x64xf32>
    %295 = arith.addf %291, %294 : vector<16x64xf32>
    %296 = arith.index_cast %287 : i32 to index
    %c0_162 = arith.constant 0 : index
    %c0_163 = arith.constant 0 : index
    %297 = vector.load %arg22[%296, %c0_162, %c0_163] : memref<16x16x64xf32, #tpu.memory_space<vmem>>, vector<1x16x64xf32>
    %298 = vector.shape_cast %297 : vector<1x16x64xf32> to vector<16x64xf32>
    %299 = vector.shape_cast %295 : vector<16x64xf32> to vector<1x16x64xf32>
    tpu.vector_store %arg22[%296, %c0_162, %c0_163], %299 {strides = array<i32>} : memref<16x16x64xf32, #tpu.memory_space<vmem>>, vector<1x16x64xf32>,
    %c7_i32 = arith.constant 7 : i32
    %c0_i32_164 = arith.constant 0 : i32
    %300 = arith.addi %c0_i32_164, %c7_i32 : i32
    %301 = arith.index_cast %300 : i32 to index
    %c0_165 = arith.constant 0 : index
    %c0_166 = arith.constant 0 : index
    %302 = vector.load %arg20[%301, %c0_165, %c0_166] : memref<16x16x64xf32, #tpu.memory_space<vmem>>, vector<1x16x64xf32>
    %303 = vector.shape_cast %302 : vector<1x16x64xf32> to vector<16x64xf32>
    %304 = arith.mulf %303, %282 : vector<16x64xf32>
    %305 = arith.index_cast %300 : i32 to index
    %c0_167 = arith.constant 0 : index
    %c0_168 = arith.constant 0 : index
    %306 = vector.load %arg21[%305, %c0_167, %c0_168] : memref<16x16x64xf32, #tpu.memory_space<vmem>>, vector<1x16x64xf32>
    %307 = vector.shape_cast %306 : vector<1x16x64xf32> to vector<16x64xf32>
    %308 = arith.addf %304, %307 : vector<16x64xf32>
    %309 = arith.index_cast %300 : i32 to index
    %c0_169 = arith.constant 0 : index
    %c0_170 = arith.constant 0 : index
    %310 = vector.load %arg22[%309, %c0_169, %c0_170] : memref<16x16x64xf32, #tpu.memory_space<vmem>>, vector<1x16x64xf32>
    %311 = vector.shape_cast %310 : vector<1x16x64xf32> to vector<16x64xf32>
    %312 = vector.shape_cast %308 : vector<16x64xf32> to vector<1x16x64xf32>
    tpu.vector_store %arg22[%309, %c0_169, %c0_170], %312 {strides = array<i32>} : memref<16x16x64xf32, #tpu.memory_space<vmem>>, vector<1x16x64xf32>,
    %c8_i32_171 = arith.constant 8 : i32
    %313 = arith.addi %c8_i32_171, %c7_i32 : i32
    %314 = arith.index_cast %313 : i32 to index
    %c0_172 = arith.constant 0 : index
    %c0_173 = arith.constant 0 : index
    %315 = vector.load %arg20[%314, %c0_172, %c0_173] : memref<16x16x64xf32, #tpu.memory_space<vmem>>, vector<1x16x64xf32>
    %316 = vector.shape_cast %315 : vector<1x16x64xf32> to vector<16x64xf32>
    %317 = arith.mulf %316, %295 : vector<16x64xf32>
    %318 = arith.index_cast %313 : i32 to index
    %c0_174 = arith.constant 0 : index
    %c0_175 = arith.constant 0 : index
    %319 = vector.load %arg21[%318, %c0_174, %c0_175] : memref<16x16x64xf32, #tpu.memory_space<vmem>>, vector<1x16x64xf32>
    %320 = vector.shape_cast %319 : vector<1x16x64xf32> to vector<16x64xf32>
    %321 = arith.addf %317, %320 : vector<16x64xf32>
    %322 = arith.index_cast %313 : i32 to index
    %c0_176 = arith.constant 0 : index
    %c0_177 = arith.constant 0 : index
    %323 = vector.load %arg22[%322, %c0_176, %c0_177] : memref<16x16x64xf32, #tpu.memory_space<vmem>>, vector<1x16x64xf32>
    %324 = vector.shape_cast %323 : vector<1x16x64xf32> to vector<16x64xf32>
    %325 = vector.shape_cast %321 : vector<16x64xf32> to vector<1x16x64xf32>
    tpu.vector_store %arg22[%322, %c0_176, %c0_177], %325 {strides = array<i32>} : memref<16x16x64xf32, #tpu.memory_space<vmem>>, vector<1x16x64xf32>,
    %c8_i32_178 = arith.constant 8 : i32
    %326 = vector.shape_cast %100 : vector<16x16xf32> to vector<16x16x1xf32>
    %c0_179 = arith.constant 0 : index
    %c0_180 = arith.constant 0 : index
    %c0_181 = arith.constant 0 : index
    %327 = vector.load %arg22[%c0_179, %c0_180, %c0_181] : memref<16x16x64xf32, #tpu.memory_space<vmem>>, vector<16x16x64xf32>
    %328 = vector.broadcast %326 : vector<16x16x1xf32> to vector<16x16x64xf32>
    %329 = arith.mulf %328, %327 : vector<16x16x64xf32>
    %cst_182 = arith.constant dense<0.000000e+00> : vector<16x64xf32>
    %330 = vector.multi_reduction <add>, %329, %cst_182 [1] : vector<16x16x64xf32> to vector<16x64xf32>
    %c0_183 = arith.constant 0 : index
    %c0_184 = arith.constant 0 : index
    %c0_185 = arith.constant 0 : index
    %331 = vector.load %arg14[%c0_183, %c0_184, %c0_185] : memref<2x1x64xf32, #tpu.memory_space<vmem>>, vector<1x1x64xf32>
    %332 = vector.shape_cast %331 : vector<1x1x64xf32> to vector<1x64xf32>
    %333 = vector.broadcast %332 : vector<1x64xf32> to vector<16x64xf32>
    %334 = arith.mulf %73, %333 : vector<16x64xf32>
    %335 = arith.addf %330, %334 : vector<16x64xf32>
    %336 = arith.negf %32 : vector<16x64xf32>
    %337 = math.exp %336 : vector<16x64xf32>
    %cst_186 = arith.constant 1.000000e+00 : f32
    %338 = vector.broadcast %cst_186 : f32 to vector<16x64xf32>
    %339 = arith.addf %338, %337 : vector<16x64xf32>
    %340 = arith.divf %338, %339 : vector<16x64xf32>
    %341 = arith.mulf %32, %340 : vector<16x64xf32>
    %342 = arith.mulf %335, %341 : vector<16x64xf32>
    %c0_187 = arith.constant 0 : index
    %c0_188 = arith.constant 0 : index
    %c0_189 = arith.constant 0 : index
    %343 = vector.load %arg12[%c0_187, %c0_188, %c0_189] : memref<2x64x32xf32, #tpu.memory_space<vmem>>, vector<1x64x32xf32>
    %344 = vector.shape_cast %343 : vector<1x64x32xf32> to vector<64x32xf32>
    %cst_190 = arith.constant dense<0.000000e+00> : vector<16x32xf32>
    %345 = tpu.matmul %342, %344, %cst_190 {dimension_numbers = #tpu.dot_dimension_numbers<[1], [0], [0], [1], [0, 0, 1, 1], [], []>} : vector<16x64xf32>, vector<64x32xf32>, vector<16x32xf32> -> vector<16x32xf32>
    %346 = arith.addf %0, %345 : vector<16x32xf32>
    %c1_191 = arith.constant 1 : index
    %c0_192 = arith.constant 0 : index
    %c0_193 = arith.constant 0 : index
    %347 = vector.load %arg2[%c1_191, %c0_192, %c0_193] : memref<2x1x32xf32, #tpu.memory_space<vmem>>, vector<1x1x32xf32>
    %348 = vector.shape_cast %347 : vector<1x1x32xf32> to vector<1x32xf32>
    %c1_194 = arith.constant 1 : index
    %c0_195 = arith.constant 0 : index
    %c0_196 = arith.constant 0 : index
    %349 = vector.load %arg3[%c1_194, %c0_195, %c0_196] : memref<2x1x32xf32, #tpu.memory_space<vmem>>, vector<1x1x32xf32>
    %350 = vector.shape_cast %349 : vector<1x1x32xf32> to vector<1x32xf32>
    %cst_197 = arith.constant dense<0.000000e+00> : vector<16xf32>
    %351 = vector.multi_reduction <add>, %346, %cst_197 [1] : vector<16x32xf32> to vector<16xf32>
    %352 = vector.shape_cast %351 : vector<16xf32> to vector<16x1xf32>
    %cst_198 = arith.constant 3.200000e+01 : f32
    %353 = vector.broadcast %cst_198 : f32 to vector<16x1xf32>
    %354 = arith.divf %352, %353 : vector<16x1xf32>
    %355 = vector.broadcast %354 : vector<16x1xf32> to vector<16x32xf32>
    %356 = arith.subf %346, %355 : vector<16x32xf32>
    %357 = arith.mulf %356, %356 : vector<16x32xf32>
    %cst_199 = arith.constant dense<0.000000e+00> : vector<16xf32>
    %358 = vector.multi_reduction <add>, %357, %cst_199 [1] : vector<16x32xf32> to vector<16xf32>
    %359 = vector.shape_cast %358 : vector<16xf32> to vector<16x1xf32>
    %cst_200 = arith.constant 3.200000e+01 : f32
    %360 = vector.broadcast %cst_200 : f32 to vector<16x1xf32>
    %361 = arith.divf %359, %360 : vector<16x1xf32>
    %362 = vector.broadcast %354 : vector<16x1xf32> to vector<16x32xf32>
    %363 = arith.subf %346, %362 : vector<16x32xf32>
    %cst_201 = arith.constant 9.99999974E-6 : f32
    %364 = vector.broadcast %cst_201 : f32 to vector<16x1xf32>
    %365 = arith.addf %361, %364 : vector<16x1xf32>
    %366 = math.rsqrt %365 : vector<16x1xf32>
    %367 = vector.broadcast %366 : vector<16x1xf32> to vector<16x32xf32>
    %368 = arith.mulf %363, %367 : vector<16x32xf32>
    %369 = vector.broadcast %348 : vector<1x32xf32> to vector<16x32xf32>
    %370 = arith.mulf %368, %369 : vector<16x32xf32>
    %371 = vector.broadcast %350 : vector<1x32xf32> to vector<16x32xf32>
    %372 = arith.addf %370, %371 : vector<16x32xf32>
    %c1_202 = arith.constant 1 : index
    %c0_203 = arith.constant 0 : index
    %c0_204 = arith.constant 0 : index
    %373 = vector.load %arg4[%c1_202, %c0_203, %c0_204] : memref<2x32x64xf32, #tpu.memory_space<vmem>>, vector<1x32x64xf32>
    %374 = vector.shape_cast %373 : vector<1x32x64xf32> to vector<32x64xf32>
    %cst_205 = arith.constant dense<0.000000e+00> : vector<16x64xf32>
    %375 = tpu.matmul %372, %374, %cst_205 {dimension_numbers = #tpu.dot_dimension_numbers<[1], [0], [0], [1], [0, 0, 1, 1], [], []>} : vector<16x32xf32>, vector<32x64xf32>, vector<16x64xf32> -> vector<16x64xf32>
    %c1_206 = arith.constant 1 : index
    %c0_207 = arith.constant 0 : index
    %c0_208 = arith.constant 0 : index
    %376 = vector.load %arg5[%c1_206, %c0_207, %c0_208] : memref<2x32x64xf32, #tpu.memory_space<vmem>>, vector<1x32x64xf32>
    %377 = vector.shape_cast %376 : vector<1x32x64xf32> to vector<32x64xf32>
    %cst_209 = arith.constant dense<0.000000e+00> : vector<16x64xf32>
    %378 = tpu.matmul %372, %377, %cst_209 {dimension_numbers = #tpu.dot_dimension_numbers<[1], [0], [0], [1], [0, 0, 1, 1], [], []>} : vector<16x32xf32>, vector<32x64xf32>, vector<16x64xf32> -> vector<16x64xf32>
    %c1_210 = arith.constant 1 : index
    %c0_211 = arith.constant 0 : index
    %c0_212 = arith.constant 0 : index
    %379 = vector.load %arg6[%c1_210, %c0_211, %c0_212] : memref<2x4x64xf32, #tpu.memory_space<vmem>>, vector<1x4x64xf32>
    %380 = vector.shape_cast %379 : vector<1x4x64xf32> to vector<4x64xf32>
    %cst_213 = arith.constant 0.000000e+00 : f32
    %381 = vector.broadcast %cst_213 : f32 to vector<16x64xf32>
    %c0_214 = arith.constant 0 : index
    %c0_215 = arith.constant 0 : index
    %c0_216 = arith.constant 0 : index
    %382 = vector.load %arg1[%c0_214, %c0_215, %c0_216] : memref<4x16x16xf32, #tpu.memory_space<vmem>>, vector<1x16x16xf32>
    %383 = vector.shape_cast %382 : vector<1x16x16xf32> to vector<16x16xf32>
    %cst_217 = arith.constant dense<0.000000e+00> : vector<16x64xf32>
    %384 = tpu.matmul %383, %375, %cst_217 {dimension_numbers = #tpu.dot_dimension_numbers<[1], [0], [0], [1], [0, 0, 1, 1], [], []>} : vector<16x16xf32>, vector<16x64xf32>, vector<16x64xf32> -> vector<16x64xf32>
    %385 = vector.extract_strided_slice %380 {offsets = [0, 0], sizes = [1, 64], strides = [1, 1]} : vector<4x64xf32> to vector<1x64xf32>
    %386 = vector.broadcast %385 : vector<1x64xf32> to vector<16x64xf32>
    %387 = arith.mulf %384, %386 : vector<16x64xf32>
    %388 = arith.addf %381, %387 : vector<16x64xf32>
    %c1_218 = arith.constant 1 : index
    %c0_219 = arith.constant 0 : index
    %c0_220 = arith.constant 0 : index
    %389 = vector.load %arg1[%c1_218, %c0_219, %c0_220] : memref<4x16x16xf32, #tpu.memory_space<vmem>>, vector<1x16x16xf32>
    %390 = vector.shape_cast %389 : vector<1x16x16xf32> to vector<16x16xf32>
    %cst_221 = arith.constant dense<0.000000e+00> : vector<16x64xf32>
    %391 = tpu.matmul %390, %375, %cst_221 {dimension_numbers = #tpu.dot_dimension_numbers<[1], [0], [0], [1], [0, 0, 1, 1], [], []>} : vector<16x16xf32>, vector<16x64xf32>, vector<16x64xf32> -> vector<16x64xf32>
    %392 = vector.extract_strided_slice %380 {offsets = [1, 0], sizes = [1, 64], strides = [1, 1]} : vector<4x64xf32> to vector<1x64xf32>
    %393 = vector.broadcast %392 : vector<1x64xf32> to vector<16x64xf32>
    %394 = arith.mulf %391, %393 : vector<16x64xf32>
    %395 = arith.addf %388, %394 : vector<16x64xf32>
    %c2_222 = arith.constant 2 : index
    %c0_223 = arith.constant 0 : index
    %c0_224 = arith.constant 0 : index
    %396 = vector.load %arg1[%c2_222, %c0_223, %c0_224] : memref<4x16x16xf32, #tpu.memory_space<vmem>>, vector<1x16x16xf32>
    %397 = vector.shape_cast %396 : vector<1x16x16xf32> to vector<16x16xf32>
    %cst_225 = arith.constant dense<0.000000e+00> : vector<16x64xf32>
    %398 = tpu.matmul %397, %375, %cst_225 {dimension_numbers = #tpu.dot_dimension_numbers<[1], [0], [0], [1], [0, 0, 1, 1], [], []>} : vector<16x16xf32>, vector<16x64xf32>, vector<16x64xf32> -> vector<16x64xf32>
    %399 = vector.extract_strided_slice %380 {offsets = [2, 0], sizes = [1, 64], strides = [1, 1]} : vector<4x64xf32> to vector<1x64xf32>
    %400 = vector.broadcast %399 : vector<1x64xf32> to vector<16x64xf32>
    %401 = arith.mulf %398, %400 : vector<16x64xf32>
    %402 = arith.addf %395, %401 : vector<16x64xf32>
    %c3_226 = arith.constant 3 : index
    %c0_227 = arith.constant 0 : index
    %c0_228 = arith.constant 0 : index
    %403 = vector.load %arg1[%c3_226, %c0_227, %c0_228] : memref<4x16x16xf32, #tpu.memory_space<vmem>>, vector<1x16x16xf32>
    %404 = vector.shape_cast %403 : vector<1x16x16xf32> to vector<16x16xf32>
    %cst_229 = arith.constant dense<0.000000e+00> : vector<16x64xf32>
    %405 = tpu.matmul %404, %375, %cst_229 {dimension_numbers = #tpu.dot_dimension_numbers<[1], [0], [0], [1], [0, 0, 1, 1], [], []>} : vector<16x16xf32>, vector<16x64xf32>, vector<16x64xf32> -> vector<16x64xf32>
    %406 = vector.extract_strided_slice %380 {offsets = [3, 0], sizes = [1, 64], strides = [1, 1]} : vector<4x64xf32> to vector<1x64xf32>
    %407 = vector.broadcast %406 : vector<1x64xf32> to vector<16x64xf32>
    %408 = arith.mulf %405, %407 : vector<16x64xf32>
    %409 = arith.addf %402, %408 : vector<16x64xf32>
    %c1_230 = arith.constant 1 : index
    %c0_231 = arith.constant 0 : index
    %c0_232 = arith.constant 0 : index
    %410 = vector.load %arg7[%c1_230, %c0_231, %c0_232] : memref<2x1x64xf32, #tpu.memory_space<vmem>>, vector<1x1x64xf32>
    %411 = vector.shape_cast %410 : vector<1x1x64xf32> to vector<1x64xf32>
    %412 = vector.broadcast %411 : vector<1x64xf32> to vector<16x64xf32>
    %413 = arith.addf %409, %412 : vector<16x64xf32>
    %414 = arith.negf %413 : vector<16x64xf32>
    %415 = math.exp %414 : vector<16x64xf32>
    %cst_233 = arith.constant 1.000000e+00 : f32
    %416 = vector.broadcast %cst_233 : f32 to vector<16x64xf32>
    %417 = arith.addf %416, %415 : vector<16x64xf32>
    %418 = arith.divf %416, %417 : vector<16x64xf32>
    %419 = arith.mulf %413, %418 : vector<16x64xf32>
    %c1_234 = arith.constant 1 : index
    %c0_235 = arith.constant 0 : index
    %c0_236 = arith.constant 0 : index
    %420 = vector.load %arg8[%c1_234, %c0_235, %c0_236] : memref<2x64x64xf32, #tpu.memory_space<vmem>>, vector<1x64x64xf32>
    %421 = vector.shape_cast %420 : vector<1x64x64xf32> to vector<64x64xf32>
    %cst_237 = arith.constant dense<0.000000e+00> : vector<16x64xf32>
    %422 = tpu.matmul %419, %421, %cst_237 {dimension_numbers = #tpu.dot_dimension_numbers<[1], [0], [0], [1], [0, 0, 1, 1], [], []>} : vector<16x64xf32>, vector<64x64xf32>, vector<16x64xf32> -> vector<16x64xf32>
    %c1_238 = arith.constant 1 : index
    %c0_239 = arith.constant 0 : index
    %c0_240 = arith.constant 0 : index
    %423 = vector.load %arg9[%c1_238, %c0_239, %c0_240] : memref<2x1x64xf32, #tpu.memory_space<vmem>>, vector<1x1x64xf32>
    %424 = vector.shape_cast %423 : vector<1x1x64xf32> to vector<1x64xf32>
    %425 = vector.broadcast %424 : vector<1x64xf32> to vector<16x64xf32>
    %426 = arith.addf %422, %425 : vector<16x64xf32>
    %cst_241 = arith.constant 0.000000e+00 : f32
    %427 = vector.broadcast %cst_241 : f32 to vector<16x64xf32>
    %428 = arith.maximumf %426, %427 : vector<16x64xf32>
    %429 = vector.broadcast %cst_241 : f32 to vector<16x64xf32>
    %430 = arith.subf %426, %429 : vector<16x64xf32>
    %431 = arith.cmpf one, %430, %430 : vector<16x64xf32>
    %432 = vector.broadcast %cst_241 : f32 to vector<16x64xf32>
    %433 = arith.addf %426, %432 : vector<16x64xf32>
    %434 = math.absf %430 : vector<16x64xf32>
    %cst_242 = arith.constant 0.000000e+00 : f32
    %435 = vector.broadcast %cst_242 : f32 to vector<16x64xf32>
    %436 = arith.subf %435, %434 : vector<16x64xf32>
    %437 = math.exp %436 : vector<16x64xf32>
    %438 = math.log1p %437 : vector<16x64xf32>
    %439 = arith.addf %428, %438 : vector<16x64xf32>
    %440 = arith.select %431, %433, %439 : vector<16x64xi1>, vector<16x64xf32>
    %c1_243 = arith.constant 1 : index
    %c0_244 = arith.constant 0 : index
    %c0_245 = arith.constant 0 : index
    %441 = vector.load %arg10[%c1_243, %c0_244, %c0_245] : memref<2x64x16xf32, #tpu.memory_space<vmem>>, vector<1x64x16xf32>
    %442 = vector.shape_cast %441 : vector<1x64x16xf32> to vector<64x16xf32>
    %cst_246 = arith.constant dense<0.000000e+00> : vector<16x16xf32>
    %443 = tpu.matmul %419, %442, %cst_246 {dimension_numbers = #tpu.dot_dimension_numbers<[1], [0], [0], [1], [0, 0, 1, 1], [], []>} : vector<16x64xf32>, vector<64x16xf32>, vector<16x16xf32> -> vector<16x16xf32>
    %c1_247 = arith.constant 1 : index
    %c0_248 = arith.constant 0 : index
    %c0_249 = arith.constant 0 : index
    %444 = vector.load %arg11[%c1_247, %c0_248, %c0_249] : memref<2x64x16xf32, #tpu.memory_space<vmem>>, vector<1x64x16xf32>
    %445 = vector.shape_cast %444 : vector<1x64x16xf32> to vector<64x16xf32>
    %cst_250 = arith.constant dense<0.000000e+00> : vector<16x16xf32>
    %446 = tpu.matmul %419, %445, %cst_250 {dimension_numbers = #tpu.dot_dimension_numbers<[1], [0], [0], [1], [0, 0, 1, 1], [], []>} : vector<16x64xf32>, vector<64x16xf32>, vector<16x16xf32> -> vector<16x16xf32>
    %c1_251 = arith.constant 1 : index
    %c0_252 = arith.constant 0 : index
    %c0_253 = arith.constant 0 : index
    %447 = vector.load %arg13[%c1_251, %c0_252, %c0_253] : memref<2x16x1xf32, #tpu.memory_space<vmem>>, vector<1x16x1xf32>
    %448 = vector.shape_cast %447 : vector<1x16x1xf32> to vector<16x1xf32>
    %449 = vector.shape_cast %440 : vector<16x64xf32> to vector<16x1x64xf32>
    %450 = vector.shape_cast %448 : vector<16x1xf32> to vector<1x16x1xf32>
    %451 = vector.broadcast %449 : vector<16x1x64xf32> to vector<16x16x64xf32>
    %452 = vector.broadcast %450 : vector<1x16x1xf32> to vector<16x16x64xf32>
    %453 = arith.mulf %451, %452 : vector<16x16x64xf32>
    %454 = math.exp %453 : vector<16x16x64xf32>
    %c0_254 = arith.constant 0 : index
    %c0_255 = arith.constant 0 : index
    %c0_256 = arith.constant 0 : index
    %455 = vector.load %arg20[%c0_254, %c0_255, %c0_256] : memref<16x16x64xf32, #tpu.memory_space<vmem>>, vector<16x16x64xf32>
    tpu.vector_store %arg20[%c0_254, %c0_255, %c0_256], %454 {strides = array<i32>} : memref<16x16x64xf32, #tpu.memory_space<vmem>>, vector<16x16x64xf32>,
    %456 = arith.mulf %440, %419 : vector<16x64xf32>
    %457 = vector.shape_cast %456 : vector<16x64xf32> to vector<16x1x64xf32>
    %458 = vector.shape_cast %443 : vector<16x16xf32> to vector<16x16x1xf32>
    %459 = vector.broadcast %457 : vector<16x1x64xf32> to vector<16x16x64xf32>
    %460 = vector.broadcast %458 : vector<16x16x1xf32> to vector<16x16x64xf32>
    %461 = arith.mulf %459, %460 : vector<16x16x64xf32>
    %c0_257 = arith.constant 0 : index
    %c0_258 = arith.constant 0 : index
    %c0_259 = arith.constant 0 : index
    %462 = vector.load %arg21[%c0_257, %c0_258, %c0_259] : memref<16x16x64xf32, #tpu.memory_space<vmem>>, vector<16x16x64xf32>
    tpu.vector_store %arg21[%c0_257, %c0_258, %c0_259], %461 {strides = array<i32>} : memref<16x16x64xf32, #tpu.memory_space<vmem>>, vector<16x16x64xf32>,
    %cst_260 = arith.constant 0.000000e+00 : f32
    %463 = vector.broadcast %cst_260 : f32 to vector<16x64xf32>
    %c0_i32_261 = arith.constant 0 : i32
    %c0_i32_262 = arith.constant 0 : i32
    %464 = arith.addi %c0_i32_262, %c0_i32_261 : i32
    %465 = arith.index_cast %464 : i32 to index
    %c0_263 = arith.constant 0 : index
    %c0_264 = arith.constant 0 : index
    %466 = vector.load %arg20[%465, %c0_263, %c0_264] : memref<16x16x64xf32, #tpu.memory_space<vmem>>, vector<1x16x64xf32>
    %467 = vector.shape_cast %466 : vector<1x16x64xf32> to vector<16x64xf32>
    %468 = arith.mulf %467, %463 : vector<16x64xf32>
    %469 = arith.index_cast %464 : i32 to index
    %c0_265 = arith.constant 0 : index
    %c0_266 = arith.constant 0 : index
    %470 = vector.load %arg21[%469, %c0_265, %c0_266] : memref<16x16x64xf32, #tpu.memory_space<vmem>>, vector<1x16x64xf32>
    %471 = vector.shape_cast %470 : vector<1x16x64xf32> to vector<16x64xf32>
    %472 = arith.addf %468, %471 : vector<16x64xf32>
    %473 = arith.index_cast %464 : i32 to index
    %c0_267 = arith.constant 0 : index
    %c0_268 = arith.constant 0 : index
    %474 = vector.load %arg22[%473, %c0_267, %c0_268] : memref<16x16x64xf32, #tpu.memory_space<vmem>>, vector<1x16x64xf32>
    %475 = vector.shape_cast %474 : vector<1x16x64xf32> to vector<16x64xf32>
    %476 = vector.shape_cast %472 : vector<16x64xf32> to vector<1x16x64xf32>
    tpu.vector_store %arg22[%473, %c0_267, %c0_268], %476 {strides = array<i32>} : memref<16x16x64xf32, #tpu.memory_space<vmem>>, vector<1x16x64xf32>,
    %c8_i32_269 = arith.constant 8 : i32
    %477 = arith.addi %c8_i32_269, %c0_i32_261 : i32
    %478 = arith.index_cast %477 : i32 to index
    %c0_270 = arith.constant 0 : index
    %c0_271 = arith.constant 0 : index
    %479 = vector.load %arg20[%478, %c0_270, %c0_271] : memref<16x16x64xf32, #tpu.memory_space<vmem>>, vector<1x16x64xf32>
    %480 = vector.shape_cast %479 : vector<1x16x64xf32> to vector<16x64xf32>
    %481 = arith.mulf %480, %463 : vector<16x64xf32>
    %482 = arith.index_cast %477 : i32 to index
    %c0_272 = arith.constant 0 : index
    %c0_273 = arith.constant 0 : index
    %483 = vector.load %arg21[%482, %c0_272, %c0_273] : memref<16x16x64xf32, #tpu.memory_space<vmem>>, vector<1x16x64xf32>
    %484 = vector.shape_cast %483 : vector<1x16x64xf32> to vector<16x64xf32>
    %485 = arith.addf %481, %484 : vector<16x64xf32>
    %486 = arith.index_cast %477 : i32 to index
    %c0_274 = arith.constant 0 : index
    %c0_275 = arith.constant 0 : index
    %487 = vector.load %arg22[%486, %c0_274, %c0_275] : memref<16x16x64xf32, #tpu.memory_space<vmem>>, vector<1x16x64xf32>
    %488 = vector.shape_cast %487 : vector<1x16x64xf32> to vector<16x64xf32>
    %489 = vector.shape_cast %485 : vector<16x64xf32> to vector<1x16x64xf32>
    tpu.vector_store %arg22[%486, %c0_274, %c0_275], %489 {strides = array<i32>} : memref<16x16x64xf32, #tpu.memory_space<vmem>>, vector<1x16x64xf32>,
    %c1_i32_276 = arith.constant 1 : i32
    %c0_i32_277 = arith.constant 0 : i32
    %490 = arith.addi %c0_i32_277, %c1_i32_276 : i32
    %491 = arith.index_cast %490 : i32 to index
    %c0_278 = arith.constant 0 : index
    %c0_279 = arith.constant 0 : index
    %492 = vector.load %arg20[%491, %c0_278, %c0_279] : memref<16x16x64xf32, #tpu.memory_space<vmem>>, vector<1x16x64xf32>
    %493 = vector.shape_cast %492 : vector<1x16x64xf32> to vector<16x64xf32>
    %494 = arith.mulf %493, %472 : vector<16x64xf32>
    %495 = arith.index_cast %490 : i32 to index
    %c0_280 = arith.constant 0 : index
    %c0_281 = arith.constant 0 : index
    %496 = vector.load %arg21[%495, %c0_280, %c0_281] : memref<16x16x64xf32, #tpu.memory_space<vmem>>, vector<1x16x64xf32>
    %497 = vector.shape_cast %496 : vector<1x16x64xf32> to vector<16x64xf32>
    %498 = arith.addf %494, %497 : vector<16x64xf32>
    %499 = arith.index_cast %490 : i32 to index
    %c0_282 = arith.constant 0 : index
    %c0_283 = arith.constant 0 : index
    %500 = vector.load %arg22[%499, %c0_282, %c0_283] : memref<16x16x64xf32, #tpu.memory_space<vmem>>, vector<1x16x64xf32>
    %501 = vector.shape_cast %500 : vector<1x16x64xf32> to vector<16x64xf32>
    %502 = vector.shape_cast %498 : vector<16x64xf32> to vector<1x16x64xf32>
    tpu.vector_store %arg22[%499, %c0_282, %c0_283], %502 {strides = array<i32>} : memref<16x16x64xf32, #tpu.memory_space<vmem>>, vector<1x16x64xf32>,
    %c8_i32_284 = arith.constant 8 : i32
    %503 = arith.addi %c8_i32_284, %c1_i32_276 : i32
    %504 = arith.index_cast %503 : i32 to index
    %c0_285 = arith.constant 0 : index
    %c0_286 = arith.constant 0 : index
    %505 = vector.load %arg20[%504, %c0_285, %c0_286] : memref<16x16x64xf32, #tpu.memory_space<vmem>>, vector<1x16x64xf32>
    %506 = vector.shape_cast %505 : vector<1x16x64xf32> to vector<16x64xf32>
    %507 = arith.mulf %506, %485 : vector<16x64xf32>
    %508 = arith.index_cast %503 : i32 to index
    %c0_287 = arith.constant 0 : index
    %c0_288 = arith.constant 0 : index
    %509 = vector.load %arg21[%508, %c0_287, %c0_288] : memref<16x16x64xf32, #tpu.memory_space<vmem>>, vector<1x16x64xf32>
    %510 = vector.shape_cast %509 : vector<1x16x64xf32> to vector<16x64xf32>
    %511 = arith.addf %507, %510 : vector<16x64xf32>
    %512 = arith.index_cast %503 : i32 to index
    %c0_289 = arith.constant 0 : index
    %c0_290 = arith.constant 0 : index
    %513 = vector.load %arg22[%512, %c0_289, %c0_290] : memref<16x16x64xf32, #tpu.memory_space<vmem>>, vector<1x16x64xf32>
    %514 = vector.shape_cast %513 : vector<1x16x64xf32> to vector<16x64xf32>
    %515 = vector.shape_cast %511 : vector<16x64xf32> to vector<1x16x64xf32>
    tpu.vector_store %arg22[%512, %c0_289, %c0_290], %515 {strides = array<i32>} : memref<16x16x64xf32, #tpu.memory_space<vmem>>, vector<1x16x64xf32>,
    %c2_i32_291 = arith.constant 2 : i32
    %c0_i32_292 = arith.constant 0 : i32
    %516 = arith.addi %c0_i32_292, %c2_i32_291 : i32
    %517 = arith.index_cast %516 : i32 to index
    %c0_293 = arith.constant 0 : index
    %c0_294 = arith.constant 0 : index
    %518 = vector.load %arg20[%517, %c0_293, %c0_294] : memref<16x16x64xf32, #tpu.memory_space<vmem>>, vector<1x16x64xf32>
    %519 = vector.shape_cast %518 : vector<1x16x64xf32> to vector<16x64xf32>
    %520 = arith.mulf %519, %498 : vector<16x64xf32>
    %521 = arith.index_cast %516 : i32 to index
    %c0_295 = arith.constant 0 : index
    %c0_296 = arith.constant 0 : index
    %522 = vector.load %arg21[%521, %c0_295, %c0_296] : memref<16x16x64xf32, #tpu.memory_space<vmem>>, vector<1x16x64xf32>
    %523 = vector.shape_cast %522 : vector<1x16x64xf32> to vector<16x64xf32>
    %524 = arith.addf %520, %523 : vector<16x64xf32>
    %525 = arith.index_cast %516 : i32 to index
    %c0_297 = arith.constant 0 : index
    %c0_298 = arith.constant 0 : index
    %526 = vector.load %arg22[%525, %c0_297, %c0_298] : memref<16x16x64xf32, #tpu.memory_space<vmem>>, vector<1x16x64xf32>
    %527 = vector.shape_cast %526 : vector<1x16x64xf32> to vector<16x64xf32>
    %528 = vector.shape_cast %524 : vector<16x64xf32> to vector<1x16x64xf32>
    tpu.vector_store %arg22[%525, %c0_297, %c0_298], %528 {strides = array<i32>} : memref<16x16x64xf32, #tpu.memory_space<vmem>>, vector<1x16x64xf32>,
    %c8_i32_299 = arith.constant 8 : i32
    %529 = arith.addi %c8_i32_299, %c2_i32_291 : i32
    %530 = arith.index_cast %529 : i32 to index
    %c0_300 = arith.constant 0 : index
    %c0_301 = arith.constant 0 : index
    %531 = vector.load %arg20[%530, %c0_300, %c0_301] : memref<16x16x64xf32, #tpu.memory_space<vmem>>, vector<1x16x64xf32>
    %532 = vector.shape_cast %531 : vector<1x16x64xf32> to vector<16x64xf32>
    %533 = arith.mulf %532, %511 : vector<16x64xf32>
    %534 = arith.index_cast %529 : i32 to index
    %c0_302 = arith.constant 0 : index
    %c0_303 = arith.constant 0 : index
    %535 = vector.load %arg21[%534, %c0_302, %c0_303] : memref<16x16x64xf32, #tpu.memory_space<vmem>>, vector<1x16x64xf32>
    %536 = vector.shape_cast %535 : vector<1x16x64xf32> to vector<16x64xf32>
    %537 = arith.addf %533, %536 : vector<16x64xf32>
    %538 = arith.index_cast %529 : i32 to index
    %c0_304 = arith.constant 0 : index
    %c0_305 = arith.constant 0 : index
    %539 = vector.load %arg22[%538, %c0_304, %c0_305] : memref<16x16x64xf32, #tpu.memory_space<vmem>>, vector<1x16x64xf32>
    %540 = vector.shape_cast %539 : vector<1x16x64xf32> to vector<16x64xf32>
    %541 = vector.shape_cast %537 : vector<16x64xf32> to vector<1x16x64xf32>
    tpu.vector_store %arg22[%538, %c0_304, %c0_305], %541 {strides = array<i32>} : memref<16x16x64xf32, #tpu.memory_space<vmem>>, vector<1x16x64xf32>,
    %c3_i32_306 = arith.constant 3 : i32
    %c0_i32_307 = arith.constant 0 : i32
    %542 = arith.addi %c0_i32_307, %c3_i32_306 : i32
    %543 = arith.index_cast %542 : i32 to index
    %c0_308 = arith.constant 0 : index
    %c0_309 = arith.constant 0 : index
    %544 = vector.load %arg20[%543, %c0_308, %c0_309] : memref<16x16x64xf32, #tpu.memory_space<vmem>>, vector<1x16x64xf32>
    %545 = vector.shape_cast %544 : vector<1x16x64xf32> to vector<16x64xf32>
    %546 = arith.mulf %545, %524 : vector<16x64xf32>
    %547 = arith.index_cast %542 : i32 to index
    %c0_310 = arith.constant 0 : index
    %c0_311 = arith.constant 0 : index
    %548 = vector.load %arg21[%547, %c0_310, %c0_311] : memref<16x16x64xf32, #tpu.memory_space<vmem>>, vector<1x16x64xf32>
    %549 = vector.shape_cast %548 : vector<1x16x64xf32> to vector<16x64xf32>
    %550 = arith.addf %546, %549 : vector<16x64xf32>
    %551 = arith.index_cast %542 : i32 to index
    %c0_312 = arith.constant 0 : index
    %c0_313 = arith.constant 0 : index
    %552 = vector.load %arg22[%551, %c0_312, %c0_313] : memref<16x16x64xf32, #tpu.memory_space<vmem>>, vector<1x16x64xf32>
    %553 = vector.shape_cast %552 : vector<1x16x64xf32> to vector<16x64xf32>
    %554 = vector.shape_cast %550 : vector<16x64xf32> to vector<1x16x64xf32>
    tpu.vector_store %arg22[%551, %c0_312, %c0_313], %554 {strides = array<i32>} : memref<16x16x64xf32, #tpu.memory_space<vmem>>, vector<1x16x64xf32>,
    %c8_i32_314 = arith.constant 8 : i32
    %555 = arith.addi %c8_i32_314, %c3_i32_306 : i32
    %556 = arith.index_cast %555 : i32 to index
    %c0_315 = arith.constant 0 : index
    %c0_316 = arith.constant 0 : index
    %557 = vector.load %arg20[%556, %c0_315, %c0_316] : memref<16x16x64xf32, #tpu.memory_space<vmem>>, vector<1x16x64xf32>
    %558 = vector.shape_cast %557 : vector<1x16x64xf32> to vector<16x64xf32>
    %559 = arith.mulf %558, %537 : vector<16x64xf32>
    %560 = arith.index_cast %555 : i32 to index
    %c0_317 = arith.constant 0 : index
    %c0_318 = arith.constant 0 : index
    %561 = vector.load %arg21[%560, %c0_317, %c0_318] : memref<16x16x64xf32, #tpu.memory_space<vmem>>, vector<1x16x64xf32>
    %562 = vector.shape_cast %561 : vector<1x16x64xf32> to vector<16x64xf32>
    %563 = arith.addf %559, %562 : vector<16x64xf32>
    %564 = arith.index_cast %555 : i32 to index
    %c0_319 = arith.constant 0 : index
    %c0_320 = arith.constant 0 : index
    %565 = vector.load %arg22[%564, %c0_319, %c0_320] : memref<16x16x64xf32, #tpu.memory_space<vmem>>, vector<1x16x64xf32>
    %566 = vector.shape_cast %565 : vector<1x16x64xf32> to vector<16x64xf32>
    %567 = vector.shape_cast %563 : vector<16x64xf32> to vector<1x16x64xf32>
    tpu.vector_store %arg22[%564, %c0_319, %c0_320], %567 {strides = array<i32>} : memref<16x16x64xf32, #tpu.memory_space<vmem>>, vector<1x16x64xf32>,
    %c4_i32_321 = arith.constant 4 : i32
    %c0_i32_322 = arith.constant 0 : i32
    %568 = arith.addi %c0_i32_322, %c4_i32_321 : i32
    %569 = arith.index_cast %568 : i32 to index
    %c0_323 = arith.constant 0 : index
    %c0_324 = arith.constant 0 : index
    %570 = vector.load %arg20[%569, %c0_323, %c0_324] : memref<16x16x64xf32, #tpu.memory_space<vmem>>, vector<1x16x64xf32>
    %571 = vector.shape_cast %570 : vector<1x16x64xf32> to vector<16x64xf32>
    %572 = arith.mulf %571, %550 : vector<16x64xf32>
    %573 = arith.index_cast %568 : i32 to index
    %c0_325 = arith.constant 0 : index
    %c0_326 = arith.constant 0 : index
    %574 = vector.load %arg21[%573, %c0_325, %c0_326] : memref<16x16x64xf32, #tpu.memory_space<vmem>>, vector<1x16x64xf32>
    %575 = vector.shape_cast %574 : vector<1x16x64xf32> to vector<16x64xf32>
    %576 = arith.addf %572, %575 : vector<16x64xf32>
    %577 = arith.index_cast %568 : i32 to index
    %c0_327 = arith.constant 0 : index
    %c0_328 = arith.constant 0 : index
    %578 = vector.load %arg22[%577, %c0_327, %c0_328] : memref<16x16x64xf32, #tpu.memory_space<vmem>>, vector<1x16x64xf32>
    %579 = vector.shape_cast %578 : vector<1x16x64xf32> to vector<16x64xf32>
    %580 = vector.shape_cast %576 : vector<16x64xf32> to vector<1x16x64xf32>
    tpu.vector_store %arg22[%577, %c0_327, %c0_328], %580 {strides = array<i32>} : memref<16x16x64xf32, #tpu.memory_space<vmem>>, vector<1x16x64xf32>,
    %c8_i32_329 = arith.constant 8 : i32
    %581 = arith.addi %c8_i32_329, %c4_i32_321 : i32
    %582 = arith.index_cast %581 : i32 to index
    %c0_330 = arith.constant 0 : index
    %c0_331 = arith.constant 0 : index
    %583 = vector.load %arg20[%582, %c0_330, %c0_331] : memref<16x16x64xf32, #tpu.memory_space<vmem>>, vector<1x16x64xf32>
    %584 = vector.shape_cast %583 : vector<1x16x64xf32> to vector<16x64xf32>
    %585 = arith.mulf %584, %563 : vector<16x64xf32>
    %586 = arith.index_cast %581 : i32 to index
    %c0_332 = arith.constant 0 : index
    %c0_333 = arith.constant 0 : index
    %587 = vector.load %arg21[%586, %c0_332, %c0_333] : memref<16x16x64xf32, #tpu.memory_space<vmem>>, vector<1x16x64xf32>
    %588 = vector.shape_cast %587 : vector<1x16x64xf32> to vector<16x64xf32>
    %589 = arith.addf %585, %588 : vector<16x64xf32>
    %590 = arith.index_cast %581 : i32 to index
    %c0_334 = arith.constant 0 : index
    %c0_335 = arith.constant 0 : index
    %591 = vector.load %arg22[%590, %c0_334, %c0_335] : memref<16x16x64xf32, #tpu.memory_space<vmem>>, vector<1x16x64xf32>
    %592 = vector.shape_cast %591 : vector<1x16x64xf32> to vector<16x64xf32>
    %593 = vector.shape_cast %589 : vector<16x64xf32> to vector<1x16x64xf32>
    tpu.vector_store %arg22[%590, %c0_334, %c0_335], %593 {strides = array<i32>} : memref<16x16x64xf32, #tpu.memory_space<vmem>>, vector<1x16x64xf32>,
    %c5_i32_336 = arith.constant 5 : i32
    %c0_i32_337 = arith.constant 0 : i32
    %594 = arith.addi %c0_i32_337, %c5_i32_336 : i32
    %595 = arith.index_cast %594 : i32 to index
    %c0_338 = arith.constant 0 : index
    %c0_339 = arith.constant 0 : index
    %596 = vector.load %arg20[%595, %c0_338, %c0_339] : memref<16x16x64xf32, #tpu.memory_space<vmem>>, vector<1x16x64xf32>
    %597 = vector.shape_cast %596 : vector<1x16x64xf32> to vector<16x64xf32>
    %598 = arith.mulf %597, %576 : vector<16x64xf32>
    %599 = arith.index_cast %594 : i32 to index
    %c0_340 = arith.constant 0 : index
    %c0_341 = arith.constant 0 : index
    %600 = vector.load %arg21[%599, %c0_340, %c0_341] : memref<16x16x64xf32, #tpu.memory_space<vmem>>, vector<1x16x64xf32>
    %601 = vector.shape_cast %600 : vector<1x16x64xf32> to vector<16x64xf32>
    %602 = arith.addf %598, %601 : vector<16x64xf32>
    %603 = arith.index_cast %594 : i32 to index
    %c0_342 = arith.constant 0 : index
    %c0_343 = arith.constant 0 : index
    %604 = vector.load %arg22[%603, %c0_342, %c0_343] : memref<16x16x64xf32, #tpu.memory_space<vmem>>, vector<1x16x64xf32>
    %605 = vector.shape_cast %604 : vector<1x16x64xf32> to vector<16x64xf32>
    %606 = vector.shape_cast %602 : vector<16x64xf32> to vector<1x16x64xf32>
    tpu.vector_store %arg22[%603, %c0_342, %c0_343], %606 {strides = array<i32>} : memref<16x16x64xf32, #tpu.memory_space<vmem>>, vector<1x16x64xf32>,
    %c8_i32_344 = arith.constant 8 : i32
    %607 = arith.addi %c8_i32_344, %c5_i32_336 : i32
    %608 = arith.index_cast %607 : i32 to index
    %c0_345 = arith.constant 0 : index
    %c0_346 = arith.constant 0 : index
    %609 = vector.load %arg20[%608, %c0_345, %c0_346] : memref<16x16x64xf32, #tpu.memory_space<vmem>>, vector<1x16x64xf32>
    %610 = vector.shape_cast %609 : vector<1x16x64xf32> to vector<16x64xf32>
    %611 = arith.mulf %610, %589 : vector<16x64xf32>
    %612 = arith.index_cast %607 : i32 to index
    %c0_347 = arith.constant 0 : index
    %c0_348 = arith.constant 0 : index
    %613 = vector.load %arg21[%612, %c0_347, %c0_348] : memref<16x16x64xf32, #tpu.memory_space<vmem>>, vector<1x16x64xf32>
    %614 = vector.shape_cast %613 : vector<1x16x64xf32> to vector<16x64xf32>
    %615 = arith.addf %611, %614 : vector<16x64xf32>
    %616 = arith.index_cast %607 : i32 to index
    %c0_349 = arith.constant 0 : index
    %c0_350 = arith.constant 0 : index
    %617 = vector.load %arg22[%616, %c0_349, %c0_350] : memref<16x16x64xf32, #tpu.memory_space<vmem>>, vector<1x16x64xf32>
    %618 = vector.shape_cast %617 : vector<1x16x64xf32> to vector<16x64xf32>
    %619 = vector.shape_cast %615 : vector<16x64xf32> to vector<1x16x64xf32>
    tpu.vector_store %arg22[%616, %c0_349, %c0_350], %619 {strides = array<i32>} : memref<16x16x64xf32, #tpu.memory_space<vmem>>, vector<1x16x64xf32>,
    %c6_i32_351 = arith.constant 6 : i32
    %c0_i32_352 = arith.constant 0 : i32
    %620 = arith.addi %c0_i32_352, %c6_i32_351 : i32
    %621 = arith.index_cast %620 : i32 to index
    %c0_353 = arith.constant 0 : index
    %c0_354 = arith.constant 0 : index
    %622 = vector.load %arg20[%621, %c0_353, %c0_354] : memref<16x16x64xf32, #tpu.memory_space<vmem>>, vector<1x16x64xf32>
    %623 = vector.shape_cast %622 : vector<1x16x64xf32> to vector<16x64xf32>
    %624 = arith.mulf %623, %602 : vector<16x64xf32>
    %625 = arith.index_cast %620 : i32 to index
    %c0_355 = arith.constant 0 : index
    %c0_356 = arith.constant 0 : index
    %626 = vector.load %arg21[%625, %c0_355, %c0_356] : memref<16x16x64xf32, #tpu.memory_space<vmem>>, vector<1x16x64xf32>
    %627 = vector.shape_cast %626 : vector<1x16x64xf32> to vector<16x64xf32>
    %628 = arith.addf %624, %627 : vector<16x64xf32>
    %629 = arith.index_cast %620 : i32 to index
    %c0_357 = arith.constant 0 : index
    %c0_358 = arith.constant 0 : index
    %630 = vector.load %arg22[%629, %c0_357, %c0_358] : memref<16x16x64xf32, #tpu.memory_space<vmem>>, vector<1x16x64xf32>
    %631 = vector.shape_cast %630 : vector<1x16x64xf32> to vector<16x64xf32>
    %632 = vector.shape_cast %628 : vector<16x64xf32> to vector<1x16x64xf32>
    tpu.vector_store %arg22[%629, %c0_357, %c0_358], %632 {strides = array<i32>} : memref<16x16x64xf32, #tpu.memory_space<vmem>>, vector<1x16x64xf32>,
    %c8_i32_359 = arith.constant 8 : i32
    %633 = arith.addi %c8_i32_359, %c6_i32_351 : i32
    %634 = arith.index_cast %633 : i32 to index
    %c0_360 = arith.constant 0 : index
    %c0_361 = arith.constant 0 : index
    %635 = vector.load %arg20[%634, %c0_360, %c0_361] : memref<16x16x64xf32, #tpu.memory_space<vmem>>, vector<1x16x64xf32>
    %636 = vector.shape_cast %635 : vector<1x16x64xf32> to vector<16x64xf32>
    %637 = arith.mulf %636, %615 : vector<16x64xf32>
    %638 = arith.index_cast %633 : i32 to index
    %c0_362 = arith.constant 0 : index
    %c0_363 = arith.constant 0 : index
    %639 = vector.load %arg21[%638, %c0_362, %c0_363] : memref<16x16x64xf32, #tpu.memory_space<vmem>>, vector<1x16x64xf32>
    %640 = vector.shape_cast %639 : vector<1x16x64xf32> to vector<16x64xf32>
    %641 = arith.addf %637, %640 : vector<16x64xf32>
    %642 = arith.index_cast %633 : i32 to index
    %c0_364 = arith.constant 0 : index
    %c0_365 = arith.constant 0 : index
    %643 = vector.load %arg22[%642, %c0_364, %c0_365] : memref<16x16x64xf32, #tpu.memory_space<vmem>>, vector<1x16x64xf32>
    %644 = vector.shape_cast %643 : vector<1x16x64xf32> to vector<16x64xf32>
    %645 = vector.shape_cast %641 : vector<16x64xf32> to vector<1x16x64xf32>
    tpu.vector_store %arg22[%642, %c0_364, %c0_365], %645 {strides = array<i32>} : memref<16x16x64xf32, #tpu.memory_space<vmem>>, vector<1x16x64xf32>,
    %c7_i32_366 = arith.constant 7 : i32
    %c0_i32_367 = arith.constant 0 : i32
    %646 = arith.addi %c0_i32_367, %c7_i32_366 : i32
    %647 = arith.index_cast %646 : i32 to index
    %c0_368 = arith.constant 0 : index
    %c0_369 = arith.constant 0 : index
    %648 = vector.load %arg20[%647, %c0_368, %c0_369] : memref<16x16x64xf32, #tpu.memory_space<vmem>>, vector<1x16x64xf32>
    %649 = vector.shape_cast %648 : vector<1x16x64xf32> to vector<16x64xf32>
    %650 = arith.mulf %649, %628 : vector<16x64xf32>
    %651 = arith.index_cast %646 : i32 to index
    %c0_370 = arith.constant 0 : index
    %c0_371 = arith.constant 0 : index
    %652 = vector.load %arg21[%651, %c0_370, %c0_371] : memref<16x16x64xf32, #tpu.memory_space<vmem>>, vector<1x16x64xf32>
    %653 = vector.shape_cast %652 : vector<1x16x64xf32> to vector<16x64xf32>
    %654 = arith.addf %650, %653 : vector<16x64xf32>
    %655 = arith.index_cast %646 : i32 to index
    %c0_372 = arith.constant 0 : index
    %c0_373 = arith.constant 0 : index
    %656 = vector.load %arg22[%655, %c0_372, %c0_373] : memref<16x16x64xf32, #tpu.memory_space<vmem>>, vector<1x16x64xf32>
    %657 = vector.shape_cast %656 : vector<1x16x64xf32> to vector<16x64xf32>
    %658 = vector.shape_cast %654 : vector<16x64xf32> to vector<1x16x64xf32>
    tpu.vector_store %arg22[%655, %c0_372, %c0_373], %658 {strides = array<i32>} : memref<16x16x64xf32, #tpu.memory_space<vmem>>, vector<1x16x64xf32>,
    %c8_i32_374 = arith.constant 8 : i32
    %659 = arith.addi %c8_i32_374, %c7_i32_366 : i32
    %660 = arith.index_cast %659 : i32 to index
    %c0_375 = arith.constant 0 : index
    %c0_376 = arith.constant 0 : index
    %661 = vector.load %arg20[%660, %c0_375, %c0_376] : memref<16x16x64xf32, #tpu.memory_space<vmem>>, vector<1x16x64xf32>
    %662 = vector.shape_cast %661 : vector<1x16x64xf32> to vector<16x64xf32>
    %663 = arith.mulf %662, %641 : vector<16x64xf32>
    %664 = arith.index_cast %659 : i32 to index
    %c0_377 = arith.constant 0 : index
    %c0_378 = arith.constant 0 : index
    %665 = vector.load %arg21[%664, %c0_377, %c0_378] : memref<16x16x64xf32, #tpu.memory_space<vmem>>, vector<1x16x64xf32>
    %666 = vector.shape_cast %665 : vector<1x16x64xf32> to vector<16x64xf32>
    %667 = arith.addf %663, %666 : vector<16x64xf32>
    %668 = arith.index_cast %659 : i32 to index
    %c0_379 = arith.constant 0 : index
    %c0_380 = arith.constant 0 : index
    %669 = vector.load %arg22[%668, %c0_379, %c0_380] : memref<16x16x64xf32, #tpu.memory_space<vmem>>, vector<1x16x64xf32>
    %670 = vector.shape_cast %669 : vector<1x16x64xf32> to vector<16x64xf32>
    %671 = vector.shape_cast %667 : vector<16x64xf32> to vector<1x16x64xf32>
    tpu.vector_store %arg22[%668, %c0_379, %c0_380], %671 {strides = array<i32>} : memref<16x16x64xf32, #tpu.memory_space<vmem>>, vector<1x16x64xf32>,
    %c8_i32_381 = arith.constant 8 : i32
    %672 = vector.shape_cast %446 : vector<16x16xf32> to vector<16x16x1xf32>
    %c0_382 = arith.constant 0 : index
    %c0_383 = arith.constant 0 : index
    %c0_384 = arith.constant 0 : index
    %673 = vector.load %arg22[%c0_382, %c0_383, %c0_384] : memref<16x16x64xf32, #tpu.memory_space<vmem>>, vector<16x16x64xf32>
    %674 = vector.broadcast %672 : vector<16x16x1xf32> to vector<16x16x64xf32>
    %675 = arith.mulf %674, %673 : vector<16x16x64xf32>
    %cst_385 = arith.constant dense<0.000000e+00> : vector<16x64xf32>
    %676 = vector.multi_reduction <add>, %675, %cst_385 [1] : vector<16x16x64xf32> to vector<16x64xf32>
    %c1_386 = arith.constant 1 : index
    %c0_387 = arith.constant 0 : index
    %c0_388 = arith.constant 0 : index
    %677 = vector.load %arg14[%c1_386, %c0_387, %c0_388] : memref<2x1x64xf32, #tpu.memory_space<vmem>>, vector<1x1x64xf32>
    %678 = vector.shape_cast %677 : vector<1x1x64xf32> to vector<1x64xf32>
    %679 = vector.broadcast %678 : vector<1x64xf32> to vector<16x64xf32>
    %680 = arith.mulf %419, %679 : vector<16x64xf32>
    %681 = arith.addf %676, %680 : vector<16x64xf32>
    %682 = arith.negf %378 : vector<16x64xf32>
    %683 = math.exp %682 : vector<16x64xf32>
    %cst_389 = arith.constant 1.000000e+00 : f32
    %684 = vector.broadcast %cst_389 : f32 to vector<16x64xf32>
    %685 = arith.addf %684, %683 : vector<16x64xf32>
    %686 = arith.divf %684, %685 : vector<16x64xf32>
    %687 = arith.mulf %378, %686 : vector<16x64xf32>
    %688 = arith.mulf %681, %687 : vector<16x64xf32>
    %c1_390 = arith.constant 1 : index
    %c0_391 = arith.constant 0 : index
    %c0_392 = arith.constant 0 : index
    %689 = vector.load %arg12[%c1_390, %c0_391, %c0_392] : memref<2x64x32xf32, #tpu.memory_space<vmem>>, vector<1x64x32xf32>
    %690 = vector.shape_cast %689 : vector<1x64x32xf32> to vector<64x32xf32>
    %cst_393 = arith.constant dense<0.000000e+00> : vector<16x32xf32>
    %691 = tpu.matmul %688, %690, %cst_393 {dimension_numbers = #tpu.dot_dimension_numbers<[1], [0], [0], [1], [0, 0, 1, 1], [], []>} : vector<16x64xf32>, vector<64x32xf32>, vector<16x32xf32> -> vector<16x32xf32>
    %692 = arith.addf %346, %691 : vector<16x32xf32>
    %c0_394 = arith.constant 0 : index
    %c0_395 = arith.constant 0 : index
    %693 = vector.load %arg15[%c0_394, %c0_395] : memref<1x32xf32, #tpu.memory_space<vmem>>, vector<1x32xf32>
    %c0_396 = arith.constant 0 : index
    %c0_397 = arith.constant 0 : index
    %694 = vector.load %arg16[%c0_396, %c0_397] : memref<1x32xf32, #tpu.memory_space<vmem>>, vector<1x32xf32>
    %cst_398 = arith.constant dense<0.000000e+00> : vector<16xf32>
    %695 = vector.multi_reduction <add>, %692, %cst_398 [1] : vector<16x32xf32> to vector<16xf32>
    %696 = vector.shape_cast %695 : vector<16xf32> to vector<16x1xf32>
    %cst_399 = arith.constant 3.200000e+01 : f32
    %697 = vector.broadcast %cst_399 : f32 to vector<16x1xf32>
    %698 = arith.divf %696, %697 : vector<16x1xf32>
    %699 = vector.broadcast %698 : vector<16x1xf32> to vector<16x32xf32>
    %700 = arith.subf %692, %699 : vector<16x32xf32>
    %701 = arith.mulf %700, %700 : vector<16x32xf32>
    %cst_400 = arith.constant dense<0.000000e+00> : vector<16xf32>
    %702 = vector.multi_reduction <add>, %701, %cst_400 [1] : vector<16x32xf32> to vector<16xf32>
    %703 = vector.shape_cast %702 : vector<16xf32> to vector<16x1xf32>
    %cst_401 = arith.constant 3.200000e+01 : f32
    %704 = vector.broadcast %cst_401 : f32 to vector<16x1xf32>
    %705 = arith.divf %703, %704 : vector<16x1xf32>
    %706 = vector.broadcast %698 : vector<16x1xf32> to vector<16x32xf32>
    %707 = arith.subf %692, %706 : vector<16x32xf32>
    %cst_402 = arith.constant 9.99999974E-6 : f32
    %708 = vector.broadcast %cst_402 : f32 to vector<16x1xf32>
    %709 = arith.addf %705, %708 : vector<16x1xf32>
    %710 = math.rsqrt %709 : vector<16x1xf32>
    %711 = vector.broadcast %710 : vector<16x1xf32> to vector<16x32xf32>
    %712 = arith.mulf %707, %711 : vector<16x32xf32>
    %713 = vector.broadcast %693 : vector<1x32xf32> to vector<16x32xf32>
    %714 = arith.mulf %712, %713 : vector<16x32xf32>
    %715 = vector.broadcast %694 : vector<1x32xf32> to vector<16x32xf32>
    %716 = arith.addf %714, %715 : vector<16x32xf32>
    %c0_403 = arith.constant 0 : index
    %c0_404 = arith.constant 0 : index
    %717 = vector.load %arg17[%c0_403, %c0_404] : memref<32x128xf32, #tpu.memory_space<vmem>>, vector<32x128xf32>
    %cst_405 = arith.constant dense<0.000000e+00> : vector<16x128xf32>
    %718 = tpu.matmul %716, %717, %cst_405 {dimension_numbers = #tpu.dot_dimension_numbers<[1], [0], [0], [1], [0, 0, 1, 1], [], []>} : vector<16x32xf32>, vector<32x128xf32>, vector<16x128xf32> -> vector<16x128xf32>
    %c0_406 = arith.constant 0 : index
    %c0_407 = arith.constant 0 : index
    %719 = vector.load %arg18[%c0_406, %c0_407] : memref<1x128xf32, #tpu.memory_space<vmem>>, vector<1x128xf32>
    %720 = vector.broadcast %719 : vector<1x128xf32> to vector<16x128xf32>
    %721 = arith.addf %718, %720 : vector<16x128xf32>
    %c0_408 = arith.constant 0 : index
    %c0_409 = arith.constant 0 : index
    %722 = vector.load %arg19[%c0_408, %c0_409] : memref<16x128xf32, #tpu.memory_space<vmem>>, vector<16x128xf32>
    tpu.vector_store %arg19[%c0_408, %c0_409], %721 {strides = array<i32>} : memref<16x128xf32, #tpu.memory_space<vmem>>, vector<16x128xf32>,
    return
  }
}

</mosaic_0001>

<llo_original>
// kernel: tutorial_llm_forward.1
$region0: #{tutorial_llm_forward.1}
  #allocation0 [shape = 'u32[]', space=smem, size = 0x4, offset = 0x4, fixed_abs, tag = 'smem constant byte address 0x4 - core index']
  #allocation1 [shape = 'u32[144,128]{1,0:T(1,128)}', space=vmem, size = 0x12000, scoped, tag = 'internal scratch']
  #allocation2 [shape = 'f32[16,16,64]{2,1,0:T(8,128)}', space=vmem, size = 0x20000, scoped, tag = 'scratch operand']
  #allocation3 [shape = 'f32[16,16,64]{2,1,0:T(8,128)}', space=vmem, size = 0x20000, scoped, tag = 'scratch operand']
  #allocation4 [shape = 'f32[16,16,64]{2,1,0:T(8,128)}', space=vmem, size = 0x20000, scoped, tag = 'scratch operand']
  %s0 = inlined_call_operand.vmem [shape: f32[16,32], index: 0, kind: input, shape index: {}]
  %s1 = inlined_call_operand.vmem [shape: f32[4,16,16], index: 1, kind: input, shape index: {}]
  %s2 = inlined_call_operand.vmem [shape: f32[2,1,32], index: 2, kind: input, shape index: {}]
  %s3 = inlined_call_operand.vmem [shape: f32[2,1,32], index: 3, kind: input, shape index: {}]
  %s4 = inlined_call_operand.vmem [shape: f32[2,32,64], index: 4, kind: input, shape index: {}]
  %s5 = inlined_call_operand.vmem [shape: f32[2,32,64], index: 5, kind: input, shape index: {}]
  %s6 = inlined_call_operand.vmem [shape: f32[2,4,64], index: 6, kind: input, shape index: {}]
  %s7 = inlined_call_operand.vmem [shape: f32[2,1,64], index: 7, kind: input, shape index: {}]
  %s8 = inlined_call_operand.vmem [shape: f32[2,64,64], index: 8, kind: input, shape index: {}]
  %s9 = inlined_call_operand.vmem [shape: f32[2,1,64], index: 9, kind: input, shape index: {}]
  %s10 = inlined_call_operand.vmem [shape: f32[2,64,16], index: 10, kind: input, shape index: {}]
  %s11 = inlined_call_operand.vmem [shape: f32[2,64,16], index: 11, kind: input, shape index: {}]
  %s12 = inlined_call_operand.vmem [shape: f32[2,64,32], index: 12, kind: input, shape index: {}]
  %s13 = inlined_call_operand.vmem [shape: f32[2,16,1], index: 13, kind: input, shape index: {}]
  %s14 = inlined_call_operand.vmem [shape: f32[2,1,64], index: 14, kind: input, shape index: {}]
  %s15 = inlined_call_operand.vmem [shape: f32[1,32], index: 15, kind: input, shape index: {}]
  %s16 = inlined_call_operand.vmem [shape: f32[1,32], index: 16, kind: input, shape index: {}]
  %s17 = inlined_call_operand.vmem [shape: f32[32,128], index: 17, kind: input, shape index: {}]
  %s18 = inlined_call_operand.vmem [shape: f32[1,128], index: 18, kind: input, shape index: {}]
  %s19 = inlined_call_operand.vmem [shape: f32[16,128], index: 19, kind: output, shape index: {}]
  %s20 = sld [smem:[#allocation0]]
  $region86: #{tutorial_llm_forward.1} parent=0
    _
  %s22 = ssub.s32 1, %s20
  %s23 = scalar_select 0, %s22, %s20
  // Predicated region
  $region2: #{tutorial_llm_forward.1} parent=0 // pred_check
    _
  $region3: #{tutorial_llm_forward.1} parent=0 // pred_check_branch
    %25 = sbr.rel (0) target = $region5
  $region4: #{tutorial_llm_forward.1} parent=0 // pred_region
    _
  $region5: #{tutorial_llm_forward.1} parent=0 // pred_fallthru
    _
  // Predicated region
  $region6: #{tutorial_llm_forward.1} parent=0 // pred_check
    _
  $region7: #{tutorial_llm_forward.1} parent=0 // pred_check_branch
    %27 = sbr.rel (0) target = $region9
  $region8: #{tutorial_llm_forward.1} parent=0 // pred_region
    _
  $region9: #{tutorial_llm_forward.1} parent=0 // pred_fallthru
    _
  // Predicated region
  $region10: #{tutorial_llm_forward.1} parent=0 // pred_check
    _
  $region11: #{tutorial_llm_forward.1} parent=0 // pred_check_branch
    %29 = sbr.rel (0) target = $region13
  $region12: #{tutorial_llm_forward.1} parent=0 // pred_region
    _
  $region13: #{tutorial_llm_forward.1} parent=0 // pred_fallthru
    _
  // Predicated region
  $region14: #{tutorial_llm_forward.1} parent=0 // pred_check
    _
  $region15: #{tutorial_llm_forward.1} parent=0 // pred_check_branch
    %31 = sbr.rel (0) target = $region17
  $region16: #{tutorial_llm_forward.1} parent=0 // pred_region
    _
  $region17: #{tutorial_llm_forward.1} parent=0 // pred_fallthru
    _
  // Predicated region
  $region18: #{tutorial_llm_forward.1} parent=0 // pred_check
    _
  $region19: #{tutorial_llm_forward.1} parent=0 // pred_check_branch
    %33 = sbr.rel (0) target = $region21
  $region20: #{tutorial_llm_forward.1} parent=0 // pred_region
    _
  $region21: #{tutorial_llm_forward.1} parent=0 // pred_fallthru
    _
  // Predicated region
  $region22: #{tutorial_llm_forward.1} parent=0 // pred_check
    _
  $region23: #{tutorial_llm_forward.1} parent=0 // pred_check_branch
    %35 = sbr.rel (0) target = $region25
  $region24: #{tutorial_llm_forward.1} parent=0 // pred_region
    _
  $region25: #{tutorial_llm_forward.1} parent=0 // pred_fallthru
    _
  // Predicated region
  $region26: #{tutorial_llm_forward.1} parent=0 // pred_check
    _
  $region27: #{tutorial_llm_forward.1} parent=0 // pred_check_branch
    %37 = sbr.rel (0) target = $region29
  $region28: #{tutorial_llm_forward.1} parent=0 // pred_region
    _
  $region29: #{tutorial_llm_forward.1} parent=0 // pred_fallthru
    _
  // Predicated region
  $region30: #{tutorial_llm_forward.1} parent=0 // pred_check
    _
  $region31: #{tutorial_llm_forward.1} parent=0 // pred_check_branch
    %39 = sbr.rel (0) target = $region33
  $region32: #{tutorial_llm_forward.1} parent=0 // pred_region
    _
  $region33: #{tutorial_llm_forward.1} parent=0 // pred_fallthru
    _
  // Predicated region
  $region34: #{tutorial_llm_forward.1} parent=0 // pred_check
    _
  $region35: #{tutorial_llm_forward.1} parent=0 // pred_check_branch
    %41 = sbr.rel (0) target = $region37
  $region36: #{tutorial_llm_forward.1} parent=0 // pred_region
    _
  $region37: #{tutorial_llm_forward.1} parent=0 // pred_fallthru
    _
  // Predicated region
  $region38: #{tutorial_llm_forward.1} parent=0 // pred_check
    _
  $region39: #{tutorial_llm_forward.1} parent=0 // pred_check_branch
    %43 = sbr.rel (0) target = $region41
  $region40: #{tutorial_llm_forward.1} parent=0 // pred_region
    _
  $region41: #{tutorial_llm_forward.1} parent=0 // pred_fallthru
    _
  // Predicated region
  $region42: #{tutorial_llm_forward.1} parent=0 // pred_check
    _
  $region43: #{tutorial_llm_forward.1} parent=0 // pred_check_branch
    %45 = sbr.rel (0) target = $region45
  $region44: #{tutorial_llm_forward.1} parent=0 // pred_region
    _
  $region45: #{tutorial_llm_forward.1} parent=0 // pred_fallthru
    _
  // Predicated region
  $region46: #{tutorial_llm_forward.1} parent=0 // pred_check
    _
  $region47: #{tutorial_llm_forward.1} parent=0 // pred_check_branch
    %47 = sbr.rel (0) target = $region49
  $region48: #{tutorial_llm_forward.1} parent=0 // pred_region
    _
  $region49: #{tutorial_llm_forward.1} parent=0 // pred_fallthru
    _
  // Predicated region
  $region50: #{tutorial_llm_forward.1} parent=0 // pred_check
    _
  $region51: #{tutorial_llm_forward.1} parent=0 // pred_check_branch
    %49 = sbr.rel (0) target = $region53
  $region52: #{tutorial_llm_forward.1} parent=0 // pred_region
    _
  $region53: #{tutorial_llm_forward.1} parent=0 // pred_fallthru
    _
  // Predicated region
  $region54: #{tutorial_llm_forward.1} parent=0 // pred_check
    _
  $region55: #{tutorial_llm_forward.1} parent=0 // pred_check_branch
    %51 = sbr.rel (0) target = $region57
  $region56: #{tutorial_llm_forward.1} parent=0 // pred_region
    _
  $region57: #{tutorial_llm_forward.1} parent=0 // pred_fallthru
    _
  // Predicated region
  $region58: #{tutorial_llm_forward.1} parent=0 // pred_check
    _
  $region59: #{tutorial_llm_forward.1} parent=0 // pred_check_branch
    %53 = sbr.rel (0) target = $region61
  $region60: #{tutorial_llm_forward.1} parent=0 // pred_region
    _
  $region61: #{tutorial_llm_forward.1} parent=0 // pred_fallthru
    _
  // Predicated region
  $region62: #{tutorial_llm_forward.1} parent=0 // pred_check
    _
  $region63: #{tutorial_llm_forward.1} parent=0 // pred_check_branch
    %55 = sbr.rel (0) target = $region65
  $region64: #{tutorial_llm_forward.1} parent=0 // pred_region
    _
  $region65: #{tutorial_llm_forward.1} parent=0 // pred_fallthru
    _
  // Predicated region
  $region66: #{tutorial_llm_forward.1} parent=0 // pred_check
    _
  $region67: #{tutorial_llm_forward.1} parent=0 // pred_check_branch
    %57 = sbr.rel (0) target = $region69
  $region68: #{tutorial_llm_forward.1} parent=0 // pred_region
    _
  $region69: #{tutorial_llm_forward.1} parent=0 // pred_fallthru
    _
  // Predicated region
  $region70: #{tutorial_llm_forward.1} parent=0 // pred_check
    _
  $region71: #{tutorial_llm_forward.1} parent=0 // pred_check_branch
    %59 = sbr.rel (0) target = $region73
  $region72: #{tutorial_llm_forward.1} parent=0 // pred_region
    _
  $region73: #{tutorial_llm_forward.1} parent=0 // pred_fallthru
    _
  // Predicated region
  $region74: #{tutorial_llm_forward.1} parent=0 // pred_check
    _
  $region75: #{tutorial_llm_forward.1} parent=0 // pred_check_branch
    %61 = sbr.rel (0) target = $region77
  $region76: #{tutorial_llm_forward.1} parent=0 // pred_region
    _
  $region77: #{tutorial_llm_forward.1} parent=0 // pred_fallthru
    _
  %v62 = vld [vmem:[%s0] sm:$0xff]
  %v63 = vld [vmem:[%s0 + $0x8] sm:$0xff]
  %v64 = vld [vmem:[%s2] sm:$0x1]
  %v65 = vld [vmem:[%s3] sm:$0x1]
  %vm66 = vcmask 261120
  %v67 = vsel %vm66, %v62, 0.0
  %68 = vadd.xlane.f32.xlu0 %v67
  %v69 = vpop.xlane.xlu0 %68
  %v70 = vsel %vm66, %v63, 0.0
  %71 = vadd.xlane.f32.xlu0 %v70
  %v72 = vpop.xlane.xlu0 %71
  %v73 = vrcp.pop 32.0
  %v74 = vmul.f32 %v69, %v73
  %v75 = vmul.f32 %v72, %v73
  %v76 = vsub.f32 %v62, %v74
  %v77 = vsub.f32 %v63, %v75
  %v78 = vmul.f32 %v76, %v76
  %v79 = vmul.f32 %v77, %v77
  %v80 = vsel %vm66, %v78, 0.0
  %81 = vadd.xlane.f32.xlu0 %v80
  %v82 = vpop.xlane.xlu0 %81
  %v83 = vsel %vm66, %v79, 0.0
  %84 = vadd.xlane.f32.xlu0 %v83
  %v85 = vpop.xlane.xlu0 %84
  %v86 = vmul.f32 %v82, %v73
  %v87 = vmul.f32 %v85, %v73
  %v88 = vadd.f32 %v86, 1e-05
  %v89 = vadd.f32 %v87, 1e-05
  %v90 = vrsqrt.pop %v88
  %v91 = vrsqrt.pop %v89
  %v92 = vmul.f32 %v76, %v90
  %v93 = vmul.f32 %v77, %v91
  %v95 = vlaneseq
  %v96 = vshrl.u32 %v95, 7
  %v97 = vsub.s32 0, %v96
  %v98 = vrot.slane %v64, %v97
  %v100 = vmul.f32 %v92, %v98
  %v101 = vmul.f32 %v93, %v98
  %v103 = vlaneseq
  %v104 = vshrl.u32 %v103, 7
  %v105 = vsub.s32 0, %v104
  %v106 = vrot.slane %v65, %v105
  %v108 = vadd.f32 %v100, %v106
  %v109 = vadd.f32 %v101, %v106
  %v110 = vld [vmem:[%s4] sm:$0xff]
  %v111 = vld [vmem:[%s4 + $0x8] sm:$0xff]
  %v112 = vld [vmem:[%s4 + $0x10] sm:$0xff]
  %v113 = vld [vmem:[%s4 + $0x18] sm:$0xff]
  %v115 = vsel %vm66, %v108, 0
  %v118 = vsel %vm66, %v109, 0
  %120 = vmatprep.subr.mxu0 0.0
  %121 = vmatpush1.msra.mxu0 %v110
  %122 = vmatprep.subr.mxu0 0.0
  %123 = vmatpush1.msra.mxu0 %v111
  %124 = vmatprep.subr.mxu0 0.0
  %125 = vmatpush1.msra.mxu0 %v112
  %126 = vmatprep.subr.mxu0 0.0
  %127 = vmatpush1.msra.mxu0 %v113
  %128 = vmatprep.subr.mxu0 0.0
  %129 = vmatpush1.msra.mxu0 0.0
  %130 = vmatprep.subr.mxu0 0.0
  %131 = vmatpush1.msra.mxu0 0.0
  %132 = vmatprep.subr.mxu0 0.0
  %133 = vmatpush1.msra.mxu0 0.0
  %134 = vmatprep.subr.mxu0 0.0
  %135 = vmatpush1.msra.mxu0 0.0
  %136 = vmatprep.subr.mxu0 0.0
  %137 = vmatpush1.msra.mxu0 0.0
  %138 = vmatprep.subr.mxu0 0.0
  %139 = vmatpush1.msra.mxu0 0.0
  %140 = vmatprep.subr.mxu0 0.0
  %141 = vmatpush1.msra.mxu0 0.0
  %142 = vmatprep.subr.mxu0 0.0
  %143 = vmatpush1.msra.mxu0 0.0
  %144 = vmatprep.subr.mxu0 0.0
  %145 = vmatpush1.msra.mxu0 0.0
  %146 = vmatprep.subr.mxu0 0.0
  %147 = vmatpush1.msra.mxu0 0.0
  %148 = vmatprep.subr.mxu0 0.0
  %149 = vmatpush1.msra.mxu0 0.0
  %150 = vmatprep.subr.mxu0 0.0
  %151 = vmatpush1.msra.mxu0 0.0
  %152 = vmatprep.subr.mxu0 0.0
  %153 = vmatpush1.msra.mxu0 0.0
  %154 = vmatprep.subr.mxu0 0.0
  %155 = vmatpush1.msra.mxu0 0.0
  %156 = vmatprep.subr.mxu0 0.0
  %157 = vmatpush1.msra.mxu0 0.0
  %158 = vmatprep.subr.mxu0 0.0
  %159 = vmatpush1.msra.mxu0 0.0
  %160 = vmatprep.subr.mxu0 0.0
  %161 = vmatpush1.msra.mxu0 0.0
  %162 = vmatprep.subr.mxu0 0.0
  %163 = vmatpush1.msra.mxu0 0.0
  %164 = vmatprep.subr.mxu0 0.0
  %165 = vmatpush1.msra.mxu0 0.0
  %166 = vmatprep.subr.mxu0 0.0
  %167 = vmatpush1.msra.mxu0 0.0
  %168 = vmatprep.subr.mxu0 0.0
  %169 = vmatpush1.msra.mxu0 0.0
  %170 = vmatprep.subr.mxu0 0.0
  %171 = vmatpush1.msra.mxu0 0.0
  %172 = vmatprep.subr.mxu0 0.0
  %173 = vmatpush1.msra.mxu0 0.0
  %174 = vmatprep.subr.mxu0 0.0
  %175 = vmatpush1.msra.mxu0 0.0
  %176 = vmatprep.subr.mxu0 0.0
  %177 = vmatpush1.msra.mxu0 0.0
  %178 = vmatprep.subr.mxu0 0.0
  %179 = vmatpush1.msra.mxu0 0.0
  %180 = vmatprep.subr.mxu0 0.0
  %181 = vmatpush1.msra.mxu0 0.0
  %182 = vmatprep.subr.mxu0 0.0
  %183 = vmatpush1.msra.mxu0 0.0
  %184 = vmatprep.mubr.f32.mxu0 0.0
  %185 = vmatmul.mubr.f32.gmra.mrb[0].mxu0 %v115
  %v186 = vpop.f32.mrb[0].mxu0
  %v187 = vadd.f32 0.0, %v186
  %v188 = vpop.f32.mrb[0].mxu0
  %189 = vmatprep.mubr.f32.mxu0 0.0
  %190 = vmatmul.mubr.f32.gmra.mrb[0].mxu0 %v118
  %v191 = vpop.f32.mrb[0].mxu0
  %v192 = vadd.f32 0.0, %v191
  %v193 = vpop.f32.mrb[0].mxu0
  %194 = vdwg.mxu0
  %v195 = vld [vmem:[%s5] sm:$0xff]
  %v196 = vld [vmem:[%s5 + $0x8] sm:$0xff]
  %v197 = vld [vmem:[%s5 + $0x10] sm:$0xff]
  %v198 = vld [vmem:[%s5 + $0x18] sm:$0xff]
  %199 = vmatprep.subr.mxu0 0.0
  %200 = vmatpush1.msra.mxu0 %v195
  %201 = vmatprep.subr.mxu0 0.0
  %202 = vmatpush1.msra.mxu0 %v196
  %203 = vmatprep.subr.mxu0 0.0
  %204 = vmatpush1.msra.mxu0 %v197
  %205 = vmatprep.subr.mxu0 0.0
  %206 = vmatpush1.msra.mxu0 %v198
  %207 = vmatprep.subr.mxu0 0.0
  %208 = vmatpush1.msra.mxu0 0.0
  %209 = vmatprep.subr.mxu0 0.0
  %210 = vmatpush1.msra.mxu0 0.0
  %211 = vmatprep.subr.mxu0 0.0
  %212 = vmatpush1.msra.mxu0 0.0
  %213 = vmatprep.subr.mxu0 0.0
  %214 = vmatpush1.msra.mxu0 0.0
  %215 = vmatprep.subr.mxu0 0.0
  %216 = vmatpush1.msra.mxu0 0.0
  %217 = vmatprep.subr.mxu0 0.0
  %218 = vmatpush1.msra.mxu0 0.0
  %219 = vmatprep.subr.mxu0 0.0
  %220 = vmatpush1.msra.mxu0 0.0
  %221 = vmatprep.subr.mxu0 0.0
  %222 = vmatpush1.msra.mxu0 0.0
  %223 = vmatprep.subr.mxu0 0.0
  %224 = vmatpush1.msra.mxu0 0.0
  %225 = vmatprep.subr.mxu0 0.0
  %226 = vmatpush1.msra.mxu0 0.0
  %227 = vmatprep.subr.mxu0 0.0
  %228 = vmatpush1.msra.mxu0 0.0
  %229 = vmatprep.subr.mxu0 0.0
  %230 = vmatpush1.msra.mxu0 0.0
  %231 = vmatprep.subr.mxu0 0.0
  %232 = vmatpush1.msra.mxu0 0.0
  %233 = vmatprep.subr.mxu0 0.0
  %234 = vmatpush1.msra.mxu0 0.0
  %235 = vmatprep.subr.mxu0 0.0
  %236 = vmatpush1.msra.mxu0 0.0
  %237 = vmatprep.subr.mxu0 0.0
  %238 = vmatpush1.msra.mxu0 0.0
  %239 = vmatprep.subr.mxu0 0.0
  %240 = vmatpush1.msra.mxu0 0.0
  %241 = vmatprep.subr.mxu0 0.0
  %242 = vmatpush1.msra.mxu0 0.0
  %243 = vmatprep.subr.mxu0 0.0
  %244 = vmatpush1.msra.mxu0 0.0
  %245 = vmatprep.subr.mxu0 0.0
  %246 = vmatpush1.msra.mxu0 0.0
  %247 = vmatprep.subr.mxu0 0.0
  %248 = vmatpush1.msra.mxu0 0.0
  %249 = vmatprep.subr.mxu0 0.0
  %250 = vmatpush1.msra.mxu0 0.0
  %251 = vmatprep.subr.mxu0 0.0
  %252 = vmatpush1.msra.mxu0 0.0
  %253 = vmatprep.subr.mxu0 0.0
  %254 = vmatpush1.msra.mxu0 0.0
  %255 = vmatprep.subr.mxu0 0.0
  %256 = vmatpush1.msra.mxu0 0.0
  %257 = vmatprep.subr.mxu0 0.0
  %258 = vmatpush1.msra.mxu0 0.0
  %259 = vmatprep.subr.mxu0 0.0
  %260 = vmatpush1.msra.mxu0 0.0
  %261 = vmatprep.subr.mxu0 0.0
  %262 = vmatpush1.msra.mxu0 0.0
  %263 = vmatprep.mubr.f32.mxu0 0.0
  %264 = vmatmul.mubr.f32.gmra.mrb[0].mxu0 %v115
  %v265 = vpop.f32.mrb[0].mxu0
  %v266 = vadd.f32 0.0, %v265
  %v267 = vpop.f32.mrb[0].mxu0
  %268 = vmatprep.mubr.f32.mxu0 0.0
  %269 = vmatmul.mubr.f32.gmra.mrb[0].mxu0 %v118
  %v270 = vpop.f32.mrb[0].mxu0
  %v271 = vadd.f32 0.0, %v270
  %v272 = vpop.f32.mrb[0].mxu0
  %273 = vdwg.mxu0
  %v274 = vld [vmem:[%s6] sm:$0xf]
  %v275 = vld [vmem:[%s1] sm:$0xff]
  %v276 = vld [vmem:[%s1 + $0x8] sm:$0xff]
  %vm277 = vcmask 130048
  %v279 = vsel %vm277, %v275, 0
  %v282 = vsel %vm277, %v276, 0
  %284 = vmatprep.subr.mxu0 0.0
  %285 = vmatpush1.msra.mxu0 %v187
  %286 = vmatprep.subr.mxu0 0.0
  %287 = vmatpush1.msra.mxu0 %v192
  %288 = vmatprep.subr.mxu0 0.0
  %289 = vmatpush1.msra.mxu0 0.0
  %290 = vmatprep.subr.mxu0 0.0
  %291 = vmatpush1.msra.mxu0 0.0
  %292 = vmatprep.subr.mxu0 0.0
  %293 = vmatpush1.msra.mxu0 0.0
  %294 = vmatprep.subr.mxu0 0.0
  %295 = vmatpush1.msra.mxu0 0.0
  %296 = vmatprep.subr.mxu0 0.0
  %297 = vmatpush1.msra.mxu0 0.0
  %298 = vmatprep.subr.mxu0 0.0
  %299 = vmatpush1.msra.mxu0 0.0
  %300 = vmatprep.subr.mxu0 0.0
  %301 = vmatpush1.msra.mxu0 0.0
  %302 = vmatprep.subr.mxu0 0.0
  %303 = vmatpush1.msra.mxu0 0.0
  %304 = vmatprep.subr.mxu0 0.0
  %305 = vmatpush1.msra.mxu0 0.0
  %306 = vmatprep.subr.mxu0 0.0
  %307 = vmatpush1.msra.mxu0 0.0
  %308 = vmatprep.subr.mxu0 0.0
  %309 = vmatpush1.msra.mxu0 0.0
  %310 = vmatprep.subr.mxu0 0.0
  %311 = vmatpush1.msra.mxu0 0.0
  %312 = vmatprep.subr.mxu0 0.0
  %313 = vmatpush1.msra.mxu0 0.0
  %314 = vmatprep.subr.mxu0 0.0
  %315 = vmatpush1.msra.mxu0 0.0
  %316 = vmatprep.subr.mxu0 0.0
  %317 = vmatpush1.msra.mxu0 0.0
  %318 = vmatprep.subr.mxu0 0.0
  %319 = vmatpush1.msra.mxu0 0.0
  %320 = vmatprep.subr.mxu0 0.0
  %321 = vmatpush1.msra.mxu0 0.0
  %322 = vmatprep.subr.mxu0 0.0
  %323 = vmatpush1.msra.mxu0 0.0
  %324 = vmatprep.subr.mxu0 0.0
  %325 = vmatpush1.msra.mxu0 0.0
  %326 = vmatprep.subr.mxu0 0.0
  %327 = vmatpush1.msra.mxu0 0.0
  %328 = vmatprep.subr.mxu0 0.0
  %329 = vmatpush1.msra.mxu0 0.0
  %330 = vmatprep.subr.mxu0 0.0
  %331 = vmatpush1.msra.mxu0 0.0
  %332 = vmatprep.subr.mxu0 0.0
  %333 = vmatpush1.msra.mxu0 0.0
  %334 = vmatprep.subr.mxu0 0.0
  %335 = vmatpush1.msra.mxu0 0.0
  %336 = vmatprep.subr.mxu0 0.0
  %337 = vmatpush1.msra.mxu0 0.0
  %338 = vmatprep.subr.mxu0 0.0
  %339 = vmatpush1.msra.mxu0 0.0
  %340 = vmatprep.subr.mxu0 0.0
  %341 = vmatpush1.msra.mxu0 0.0
  %342 = vmatprep.subr.mxu0 0.0
  %343 = vmatpush1.msra.mxu0 0.0
  %344 = vmatprep.subr.mxu0 0.0
  %345 = vmatpush1.msra.mxu0 0.0
  %346 = vmatprep.subr.mxu0 0.0
  %347 = vmatpush1.msra.mxu0 0.0
  %348 = vmatprep.mubr.f32.mxu0 0.0
  %349 = vmatmul.mubr.f32.gmra.mrb[0].mxu0 %v279
  %v350 = vpop.f32.mrb[0].mxu0
  %v351 = vadd.f32 0.0, %v350
  %v352 = vpop.f32.mrb[0].mxu0
  %353 = vmatprep.mubr.f32.mxu0 0.0
  %354 = vmatmul.mubr.f32.gmra.mrb[0].mxu0 %v282
  %v355 = vpop.f32.mrb[0].mxu0
  %v356 = vadd.f32 0.0, %v355
  %v357 = vpop.f32.mrb[0].mxu0
  %358 = vdwg.mxu0
  %v359 = vlaneseq
  %v360 = vshrl.u32 %v359, 7
  %v361 = vsub.s32 0, %v360
  %v362 = vrot.slane %v274, %v361
  %v363 = vmul.f32 %v351, %v362
  %v364 = vmul.f32 %v356, %v362
  %v365 = vadd.f32 %v363, 0.0
  %v366 = vadd.f32 %v364, 0.0
  %s367 = scalar_lea.vmem %s1, 16
  %v368 = vld [vmem:[%s367] sm:$0xff]
  %v369 = vld [vmem:[%s367 + $0x8] sm:$0xff]
  %v371 = vsel %vm277, %v368, 0
  %v374 = vsel %vm277, %v369, 0
  %376 = vmatprep.subr.mxu0 0.0
  %377 = vmatpush1.msra.mxu0 %v187
  %378 = vmatprep.subr.mxu0 0.0
  %379 = vmatpush1.msra.mxu0 %v192
  %380 = vmatprep.subr.mxu0 0.0
  %381 = vmatpush1.msra.mxu0 0.0
  %382 = vmatprep.subr.mxu0 0.0
  %383 = vmatpush1.msra.mxu0 0.0
  %384 = vmatprep.subr.mxu0 0.0
  %385 = vmatpush1.msra.mxu0 0.0
  %386 = vmatprep.subr.mxu0 0.0
  %387 = vmatpush1.msra.mxu0 0.0
  %388 = vmatprep.subr.mxu0 0.0
  %389 = vmatpush1.msra.mxu0 0.0
  %390 = vmatprep.subr.mxu0 0.0
  %391 = vmatpush1.msra.mxu0 0.0
  %392 = vmatprep.subr.mxu0 0.0
  %393 = vmatpush1.msra.mxu0 0.0
  %394 = vmatprep.subr.mxu0 0.0
  %395 = vmatpush1.msra.mxu0 0.0
  %396 = vmatprep.subr.mxu0 0.0
  %397 = vmatpush1.msra.mxu0 0.0
  %398 = vmatprep.subr.mxu0 0.0
  %399 = vmatpush1.msra.mxu0 0.0
  %400 = vmatprep.subr.mxu0 0.0
  %401 = vmatpush1.msra.mxu0 0.0
  %402 = vmatprep.subr.mxu0 0.0
  %403 = vmatpush1.msra.mxu0 0.0
  %404 = vmatprep.subr.mxu0 0.0
  %405 = vmatpush1.msra.mxu0 0.0
  %406 = vmatprep.subr.mxu0 0.0
  %407 = vmatpush1.msra.mxu0 0.0
  %408 = vmatprep.subr.mxu0 0.0
  %409 = vmatpush1.msra.mxu0 0.0
  %410 = vmatprep.subr.mxu0 0.0
  %411 = vmatpush1.msra.mxu0 0.0
  %412 = vmatprep.subr.mxu0 0.0
  %413 = vmatpush1.msra.mxu0 0.0
  %414 = vmatprep.subr.mxu0 0.0
  %415 = vmatpush1.msra.mxu0 0.0
  %416 = vmatprep.subr.mxu0 0.0
  %417 = vmatpush1.msra.mxu0 0.0
  %418 = vmatprep.subr.mxu0 0.0
  %419 = vmatpush1.msra.mxu0 0.0
  %420 = vmatprep.subr.mxu0 0.0
  %421 = vmatpush1.msra.mxu0 0.0
  %422 = vmatprep.subr.mxu0 0.0
  %423 = vmatpush1.msra.mxu0 0.0
  %424 = vmatprep.subr.mxu0 0.0
  %425 = vmatpush1.msra.mxu0 0.0
  %426 = vmatprep.subr.mxu0 0.0
  %427 = vmatpush1.msra.mxu0 0.0
  %428 = vmatprep.subr.mxu0 0.0
  %429 = vmatpush1.msra.mxu0 0.0
  %430 = vmatprep.subr.mxu0 0.0
  %431 = vmatpush1.msra.mxu0 0.0
  %432 = vmatprep.subr.mxu0 0.0
  %433 = vmatpush1.msra.mxu0 0.0
  %434 = vmatprep.subr.mxu0 0.0
  %435 = vmatpush1.msra.mxu0 0.0
  %436 = vmatprep.subr.mxu0 0.0
  %437 = vmatpush1.msra.mxu0 0.0
  %438 = vmatprep.subr.mxu0 0.0
  %439 = vmatpush1.msra.mxu0 0.0
  %440 = vmatprep.mubr.f32.mxu0 0.0
  %441 = vmatmul.mubr.f32.gmra.mrb[0].mxu0 %v371
  %v442 = vpop.f32.mrb[0].mxu0
  %v443 = vadd.f32 0.0, %v442
  %v444 = vpop.f32.mrb[0].mxu0
  %445 = vmatprep.mubr.f32.mxu0 0.0
  %446 = vmatmul.mubr.f32.gmra.mrb[0].mxu0 %v374
  %v447 = vpop.f32.mrb[0].mxu0
  %v448 = vadd.f32 0.0, %v447
  %v449 = vpop.f32.mrb[0].mxu0
  %450 = vdwg.mxu0
  %v451 = vlaneseq
  %v452 = vshrl.u32 %v451, 7
  %v453 = vsub.s32 1, %v452
  %v454 = vrot.slane %v274, %v453
  %v455 = vmul.f32 %v443, %v454
  %v456 = vmul.f32 %v448, %v454
  %v457 = vadd.f32 %v365, %v455
  %v458 = vadd.f32 %v366, %v456
  %s459 = scalar_lea.vmem %s1, 32
  %v460 = vld [vmem:[%s459] sm:$0xff]
  %v461 = vld [vmem:[%s459 + $0x8] sm:$0xff]
  %v463 = vsel %vm277, %v460, 0
  %v466 = vsel %vm277, %v461, 0
  %468 = vmatprep.subr.mxu0 0.0
  %469 = vmatpush1.msra.mxu0 %v187
  %470 = vmatprep.subr.mxu0 0.0
  %471 = vmatpush1.msra.mxu0 %v192
  %472 = vmatprep.subr.mxu0 0.0
  %473 = vmatpush1.msra.mxu0 0.0
  %474 = vmatprep.subr.mxu0 0.0
  %475 = vmatpush1.msra.mxu0 0.0
  %476 = vmatprep.subr.mxu0 0.0
  %477 = vmatpush1.msra.mxu0 0.0
  %478 = vmatprep.subr.mxu0 0.0
  %479 = vmatpush1.msra.mxu0 0.0
  %480 = vmatprep.subr.mxu0 0.0
  %481 = vmatpush1.msra.mxu0 0.0
  %482 = vmatprep.subr.mxu0 0.0
  %483 = vmatpush1.msra.mxu0 0.0
  %484 = vmatprep.subr.mxu0 0.0
  %485 = vmatpush1.msra.mxu0 0.0
  %486 = vmatprep.subr.mxu0 0.0
  %487 = vmatpush1.msra.mxu0 0.0
  %488 = vmatprep.subr.mxu0 0.0
  %489 = vmatpush1.msra.mxu0 0.0
  %490 = vmatprep.subr.mxu0 0.0
  %491 = vmatpush1.msra.mxu0 0.0
  %492 = vmatprep.subr.mxu0 0.0
  %493 = vmatpush1.msra.mxu0 0.0
  %494 = vmatprep.subr.mxu0 0.0
  %495 = vmatpush1.msra.mxu0 0.0
  %496 = vmatprep.subr.mxu0 0.0
  %497 = vmatpush1.msra.mxu0 0.0
  %498 = vmatprep.subr.mxu0 0.0
  %499 = vmatpush1.msra.mxu0 0.0
  %500 = vmatprep.subr.mxu0 0.0
  %501 = vmatpush1.msra.mxu0 0.0
  %502 = vmatprep.subr.mxu0 0.0
  %503 = vmatpush1.msra.mxu0 0.0
  %504 = vmatprep.subr.mxu0 0.0
  %505 = vmatpush1.msra.mxu0 0.0
  %506 = vmatprep.subr.mxu0 0.0
  %507 = vmatpush1.msra.mxu0 0.0
  %508 = vmatprep.subr.mxu0 0.0
  %509 = vmatpush1.msra.mxu0 0.0
  %510 = vmatprep.subr.mxu0 0.0
  %511 = vmatpush1.msra.mxu0 0.0
  %512 = vmatprep.subr.mxu0 0.0
  %513 = vmatpush1.msra.mxu0 0.0
  %514 = vmatprep.subr.mxu0 0.0
  %515 = vmatpush1.msra.mxu0 0.0
  %516 = vmatprep.subr.mxu0 0.0
  %517 = vmatpush1.msra.mxu0 0.0
  %518 = vmatprep.subr.mxu0 0.0
  %519 = vmatpush1.msra.mxu0 0.0
  %520 = vmatprep.subr.mxu0 0.0
  %521 = vmatpush1.msra.mxu0 0.0
  %522 = vmatprep.subr.mxu0 0.0
  %523 = vmatpush1.msra.mxu0 0.0
  %524 = vmatprep.subr.mxu0 0.0
  %525 = vmatpush1.msra.mxu0 0.0
  %526 = vmatprep.subr.mxu0 0.0
  %527 = vmatpush1.msra.mxu0 0.0
  %528 = vmatprep.subr.mxu0 0.0
  %529 = vmatpush1.msra.mxu0 0.0
  %530 = vmatprep.subr.mxu0 0.0
  %531 = vmatpush1.msra.mxu0 0.0
  %532 = vmatprep.mubr.f32.mxu0 0.0
  %533 = vmatmul.mubr.f32.gmra.mrb[0].mxu0 %v463
  %v534 = vpop.f32.mrb[0].mxu0
  %v535 = vadd.f32 0.0, %v534
  %v536 = vpop.f32.mrb[0].mxu0
  %537 = vmatprep.mubr.f32.mxu0 0.0
  %538 = vmatmul.mubr.f32.gmra.mrb[0].mxu0 %v466
  %v539 = vpop.f32.mrb[0].mxu0
  %v540 = vadd.f32 0.0, %v539
  %v541 = vpop.f32.mrb[0].mxu0
  %542 = vdwg.mxu0
  %v543 = vlaneseq
  %v544 = vshrl.u32 %v543, 7
  %v545 = vsub.s32 2, %v544
  %v546 = vrot.slane %v274, %v545
  %v547 = vmul.f32 %v535, %v546
  %v548 = vmul.f32 %v540, %v546
  %v549 = vadd.f32 %v457, %v547
  %v550 = vadd.f32 %v458, %v548
  %s551 = scalar_lea.vmem %s1, 48
  %v552 = vld [vmem:[%s551] sm:$0xff]
  %v553 = vld [vmem:[%s551 + $0x8] sm:$0xff]
  %v555 = vsel %vm277, %v552, 0
  %v558 = vsel %vm277, %v553, 0
  %560 = vmatprep.subr.mxu0 0.0
  %561 = vmatpush1.msra.mxu0 %v187
  %562 = vmatprep.subr.mxu0 0.0
  %563 = vmatpush1.msra.mxu0 %v192
  %564 = vmatprep.subr.mxu0 0.0
  %565 = vmatpush1.msra.mxu0 0.0
  %566 = vmatprep.subr.mxu0 0.0
  %567 = vmatpush1.msra.mxu0 0.0
  %568 = vmatprep.subr.mxu0 0.0
  %569 = vmatpush1.msra.mxu0 0.0
  %570 = vmatprep.subr.mxu0 0.0
  %571 = vmatpush1.msra.mxu0 0.0
  %572 = vmatprep.subr.mxu0 0.0
  %573 = vmatpush1.msra.mxu0 0.0
  %574 = vmatprep.subr.mxu0 0.0
  %575 = vmatpush1.msra.mxu0 0.0
  %576 = vmatprep.subr.mxu0 0.0
  %577 = vmatpush1.msra.mxu0 0.0
  %578 = vmatprep.subr.mxu0 0.0
  %579 = vmatpush1.msra.mxu0 0.0
  %580 = vmatprep.subr.mxu0 0.0
  %581 = vmatpush1.msra.mxu0 0.0
  %582 = vmatprep.subr.mxu0 0.0
  %583 = vmatpush1.msra.mxu0 0.0
  %584 = vmatprep.subr.mxu0 0.0
  %585 = vmatpush1.msra.mxu0 0.0
  %586 = vmatprep.subr.mxu0 0.0
  %587 = vmatpush1.msra.mxu0 0.0
  %588 = vmatprep.subr.mxu0 0.0
  %589 = vmatpush1.msra.mxu0 0.0
  %590 = vmatprep.subr.mxu0 0.0
  %591 = vmatpush1.msra.mxu0 0.0
  %592 = vmatprep.subr.mxu0 0.0
  %593 = vmatpush1.msra.mxu0 0.0
  %594 = vmatprep.subr.mxu0 0.0
  %595 = vmatpush1.msra.mxu0 0.0
  %596 = vmatprep.subr.mxu0 0.0
  %597 = vmatpush1.msra.mxu0 0.0
  %598 = vmatprep.subr.mxu0 0.0
  %599 = vmatpush1.msra.mxu0 0.0
  %600 = vmatprep.subr.mxu0 0.0
  %601 = vmatpush1.msra.mxu0 0.0
  %602 = vmatprep.subr.mxu0 0.0
  %603 = vmatpush1.msra.mxu0 0.0
  %604 = vmatprep.subr.mxu0 0.0
  %605 = vmatpush1.msra.mxu0 0.0
  %606 = vmatprep.subr.mxu0 0.0
  %607 = vmatpush1.msra.mxu0 0.0
  %608 = vmatprep.subr.mxu0 0.0
  %609 = vmatpush1.msra.mxu0 0.0
  %610 = vmatprep.subr.mxu0 0.0
  %611 = vmatpush1.msra.mxu0 0.0
  %612 = vmatprep.subr.mxu0 0.0
  %613 = vmatpush1.msra.mxu0 0.0
  %614 = vmatprep.subr.mxu0 0.0
  %615 = vmatpush1.msra.mxu0 0.0
  %616 = vmatprep.subr.mxu0 0.0
  %617 = vmatpush1.msra.mxu0 0.0
  %618 = vmatprep.subr.mxu0 0.0
  %619 = vmatpush1.msra.mxu0 0.0
  %620 = vmatprep.subr.mxu0 0.0
  %621 = vmatpush1.msra.mxu0 0.0
  %622 = vmatprep.subr.mxu0 0.0
  %623 = vmatpush1.msra.mxu0 0.0
  %624 = vmatprep.mubr.f32.mxu0 0.0
  %625 = vmatmul.mubr.f32.gmra.mrb[0].mxu0 %v555
  %v626 = vpop.f32.mrb[0].mxu0
  %v627 = vadd.f32 0.0, %v626
  %v628 = vpop.f32.mrb[0].mxu0
  %629 = vmatprep.mubr.f32.mxu0 0.0
  %630 = vmatmul.mubr.f32.gmra.mrb[0].mxu0 %v558
  %v631 = vpop.f32.mrb[0].mxu0
  %v632 = vadd.f32 0.0, %v631
  %v633 = vpop.f32.mrb[0].mxu0
  %634 = vdwg.mxu0
  %v635 = vlaneseq
  %v636 = vshrl.u32 %v635, 7
  %v637 = vsub.s32 3, %v636
  %v638 = vrot.slane %v274, %v637
  %v639 = vmul.f32 %v627, %v638
  %v640 = vmul.f32 %v632, %v638
  %v641 = vadd.f32 %v549, %v639
  %v642 = vadd.f32 %v550, %v640
  %v643 = vld [vmem:[%s7] sm:$0x1]
  %v645 = vlaneseq
  %v646 = vshrl.u32 %v645, 7
  %v647 = vsub.s32 0, %v646
  %v648 = vrot.slane %v643, %v647
  %v650 = vadd.f32 %v641, %v648
  %v651 = vadd.f32 %v642, %v648
  %v652 = vxor.u32 %v650, 2147483648
  %v653 = vxor.u32 %v651, 2147483648
  %v654 = vmul.f32 %v652, 1.442695
  %v655 = vpow.pop %v654
  %v656 = vmul.f32 %v653, 1.442695
  %v657 = vpow.pop %v656
  %v658 = vadd.f32 %v655, 1.0
  %v659 = vadd.f32 %v657, 1.0
  %v660 = vrcp.pop %v658
  %v661 = vmul.f32 1.0, %v660
  %v662 = vrcp.pop %v659
  %v663 = vmul.f32 1.0, %v662
  %v664 = vmul.f32 %v650, %v661
  %v665 = vmul.f32 %v651, %v663
  %v666 = vld [vmem:[%s8] sm:$0xff]
  %v667 = vld [vmem:[%s8 + $0x8] sm:$0xff]
  %v668 = vld [vmem:[%s8 + $0x10] sm:$0xff]
  %v669 = vld [vmem:[%s8 + $0x18] sm:$0xff]
  %v670 = vld [vmem:[%s8 + $0x20] sm:$0xff]
  %v671 = vld [vmem:[%s8 + $0x28] sm:$0xff]
  %v672 = vld [vmem:[%s8 + $0x30] sm:$0xff]
  %v673 = vld [vmem:[%s8 + $0x38] sm:$0xff]
  %v674 = vld [vmem:[%s9] sm:$0x1]
  %v676 = vlaneseq
  %v677 = vshrl.u32 %v676, 7
  %v678 = vsub.s32 0, %v677
  %v679 = vrot.slane %v674, %v678
  %vm681 = vcmask 523264
  %v683 = vsel %vm681, %v664, 0
  %v686 = vsel %vm681, %v665, 0
  %688 = vmatprep.subr.mxu0 0.0
  %689 = vmatpush1.msra.mxu0 %v666
  %690 = vmatprep.subr.mxu0 0.0
  %691 = vmatpush1.msra.mxu0 %v667
  %692 = vmatprep.subr.mxu0 0.0
  %693 = vmatpush1.msra.mxu0 %v668
  %694 = vmatprep.subr.mxu0 0.0
  %695 = vmatpush1.msra.mxu0 %v669
  %696 = vmatprep.subr.mxu0 0.0
  %697 = vmatpush1.msra.mxu0 %v670
  %698 = vmatprep.subr.mxu0 0.0
  %699 = vmatpush1.msra.mxu0 %v671
  %700 = vmatprep.subr.mxu0 0.0
  %701 = vmatpush1.msra.mxu0 %v672
  %702 = vmatprep.subr.mxu0 0.0
  %703 = vmatpush1.msra.mxu0 %v673
  %704 = vmatprep.subr.mxu0 0.0
  %705 = vmatpush1.msra.mxu0 0.0
  %706 = vmatprep.subr.mxu0 0.0
  %707 = vmatpush1.msra.mxu0 0.0
  %708 = vmatprep.subr.mxu0 0.0
  %709 = vmatpush1.msra.mxu0 0.0
  %710 = vmatprep.subr.mxu0 0.0
  %711 = vmatpush1.msra.mxu0 0.0
  %712 = vmatprep.subr.mxu0 0.0
  %713 = vmatpush1.msra.mxu0 0.0
  %714 = vmatprep.subr.mxu0 0.0
  %715 = vmatpush1.msra.mxu0 0.0
  %716 = vmatprep.subr.mxu0 0.0
  %717 = vmatpush1.msra.mxu0 0.0
  %718 = vmatprep.subr.mxu0 0.0
  %719 = vmatpush1.msra.mxu0 0.0
  %720 = vmatprep.subr.mxu0 0.0
  %721 = vmatpush1.msra.mxu0 0.0
  %722 = vmatprep.subr.mxu0 0.0
  %723 = vmatpush1.msra.mxu0 0.0
  %724 = vmatprep.subr.mxu0 0.0
  %725 = vmatpush1.msra.mxu0 0.0
  %726 = vmatprep.subr.mxu0 0.0
  %727 = vmatpush1.msra.mxu0 0.0
  %728 = vmatprep.subr.mxu0 0.0
  %729 = vmatpush1.msra.mxu0 0.0
  %730 = vmatprep.subr.mxu0 0.0
  %731 = vmatpush1.msra.mxu0 0.0
  %732 = vmatprep.subr.mxu0 0.0
  %733 = vmatpush1.msra.mxu0 0.0
  %734 = vmatprep.subr.mxu0 0.0
  %735 = vmatpush1.msra.mxu0 0.0
  %736 = vmatprep.subr.mxu0 0.0
  %737 = vmatpush1.msra.mxu0 0.0
  %738 = vmatprep.subr.mxu0 0.0
  %739 = vmatpush1.msra.mxu0 0.0
  %740 = vmatprep.subr.mxu0 0.0
  %741 = vmatpush1.msra.mxu0 0.0
  %742 = vmatprep.subr.mxu0 0.0
  %743 = vmatpush1.msra.mxu0 0.0
  %744 = vmatprep.subr.mxu0 0.0
  %745 = vmatpush1.msra.mxu0 0.0
  %746 = vmatprep.subr.mxu0 0.0
  %747 = vmatpush1.msra.mxu0 0.0
  %748 = vmatprep.subr.mxu0 0.0
  %749 = vmatpush1.msra.mxu0 0.0
  %750 = vmatprep.subr.mxu0 0.0
  %751 = vmatpush1.msra.mxu0 0.0
  %752 = vmatprep.mubr.f32.mxu0 0.0
  %753 = vmatmul.mubr.f32.gmra.mrb[0].mxu0 %v683
  %v754 = vpop.f32.mrb[0].mxu0
  %v755 = vadd.f32 %v679, %v754
  %v756 = vpop.f32.mrb[0].mxu0
  %757 = vmatprep.mubr.f32.mxu0 0.0
  %758 = vmatmul.mubr.f32.gmra.mrb[0].mxu0 %v686
  %v759 = vpop.f32.mrb[0].mxu0
  %v760 = vadd.f32 %v679, %v759
  %v761 = vpop.f32.mrb[0].mxu0
  %762 = vdwg.mxu0
  %v763 = vmax.f32 %v755, 0.0
  %v764 = vmax.f32 %v760, 0.0
  %vm765 = vcmp.ne.f32.partialorder %v755, %v755
  %vm766 = vcmp.ne.f32.partialorder %v760, %v760
  %v767 = vadd.f32 %v755, 0.0
  %v768 = vadd.f32 %v760, 0.0
  %v769 = vand.u32 2147483647, %v755
  %v770 = vand.u32 2147483647, %v760
  %v771 = vsub.f32 0.0, %v769
  %v772 = vsub.f32 0.0, %v770
  %v773 = vmul.f32 %v771, 1.442695
  %v774 = vpow.pop %v773
  %v775 = vmul.f32 %v772, 1.442695
  %v776 = vpow.pop %v775
  %v777 = vadd.f32 %v774, 1.0
  %v778 = vlog2.pop %v777
  %v779 = vmul.f32 %v778, 0.6931472
  %v780 = vmul.f32 -0.5, %v774
  %v781 = vadd.f32 %v780, 1.0
  %v782 = vmul.f32 %v781, %v774
  %v783 = vand.u32 2147483647, %v774
  %vm784 = vcmp.lt.f32.partialorder %v783, 0.0004427343
  %v785 = vsel %vm784, %v782, %v779
  %v786 = vadd.f32 %v776, 1.0
  %v787 = vlog2.pop %v786
  %v788 = vmul.f32 %v787, 0.6931472
  %v789 = vmul.f32 -0.5, %v776
  %v790 = vadd.f32 %v789, 1.0
  %v791 = vmul.f32 %v790, %v776
  %v792 = vand.u32 2147483647, %v776
  %vm793 = vcmp.lt.f32.partialorder %v792, 0.0004427343
  %v794 = vsel %vm793, %v791, %v788
  %v795 = vadd.f32 %v763, %v785
  %v796 = vadd.f32 %v764, %v794
  %v797 = vsel %vm765, %v767, %v795
  %v798 = vsel %vm766, %v768, %v796
  %v799 = vld [vmem:[%s10] sm:$0xff]
  %v800 = vld [vmem:[%s10 + $0x8] sm:$0xff]
  %v801 = vld [vmem:[%s10 + $0x10] sm:$0xff]
  %v802 = vld [vmem:[%s10 + $0x18] sm:$0xff]
  %v803 = vld [vmem:[%s10 + $0x20] sm:$0xff]
  %v804 = vld [vmem:[%s10 + $0x28] sm:$0xff]
  %v805 = vld [vmem:[%s10 + $0x30] sm:$0xff]
  %v806 = vld [vmem:[%s10 + $0x38] sm:$0xff]
  %807 = vmatprep.subr.mxu0 0.0
  %808 = vmatpush1.msra.mxu0 %v799
  %809 = vmatprep.subr.mxu0 0.0
  %810 = vmatpush1.msra.mxu0 %v800
  %811 = vmatprep.subr.mxu0 0.0
  %812 = vmatpush1.msra.mxu0 %v801
  %813 = vmatprep.subr.mxu0 0.0
  %814 = vmatpush1.msra.mxu0 %v802
  %815 = vmatprep.subr.mxu0 0.0
  %816 = vmatpush1.msra.mxu0 %v803
  %817 = vmatprep.subr.mxu0 0.0
  %818 = vmatpush1.msra.mxu0 %v804
  %819 = vmatprep.subr.mxu0 0.0
  %820 = vmatpush1.msra.mxu0 %v805
  %821 = vmatprep.subr.mxu0 0.0
  %822 = vmatpush1.msra.mxu0 %v806
  %823 = vmatprep.subr.mxu0 0.0
  %824 = vmatpush1.msra.mxu0 0.0
  %825 = vmatprep.subr.mxu0 0.0
  %826 = vmatpush1.msra.mxu0 0.0
  %827 = vmatprep.subr.mxu0 0.0
  %828 = vmatpush1.msra.mxu0 0.0
  %829 = vmatprep.subr.mxu0 0.0
  %830 = vmatpush1.msra.mxu0 0.0
  %831 = vmatprep.subr.mxu0 0.0
  %832 = vmatpush1.msra.mxu0 0.0
  %833 = vmatprep.subr.mxu0 0.0
  %834 = vmatpush1.msra.mxu0 0.0
  %835 = vmatprep.subr.mxu0 0.0
  %836 = vmatpush1.msra.mxu0 0.0
  %837 = vmatprep.subr.mxu0 0.0
  %838 = vmatpush1.msra.mxu0 0.0
  %839 = vmatprep.subr.mxu0 0.0
  %840 = vmatpush1.msra.mxu0 0.0
  %841 = vmatprep.subr.mxu0 0.0
  %842 = vmatpush1.msra.mxu0 0.0
  %843 = vmatprep.subr.mxu0 0.0
  %844 = vmatpush1.msra.mxu0 0.0
  %845 = vmatprep.subr.mxu0 0.0
  %846 = vmatpush1.msra.mxu0 0.0
  %847 = vmatprep.subr.mxu0 0.0
  %848 = vmatpush1.msra.mxu0 0.0
  %849 = vmatprep.subr.mxu0 0.0
  %850 = vmatpush1.msra.mxu0 0.0
  %851 = vmatprep.subr.mxu0 0.0
  %852 = vmatpush1.msra.mxu0 0.0
  %853 = vmatprep.subr.mxu0 0.0
  %854 = vmatpush1.msra.mxu0 0.0
  %855 = vmatprep.subr.mxu0 0.0
  %856 = vmatpush1.msra.mxu0 0.0
  %857 = vmatprep.subr.mxu0 0.0
  %858 = vmatpush1.msra.mxu0 0.0
  %859 = vmatprep.subr.mxu0 0.0
  %860 = vmatpush1.msra.mxu0 0.0
  %861 = vmatprep.subr.mxu0 0.0
  %862 = vmatpush1.msra.mxu0 0.0
  %863 = vmatprep.subr.mxu0 0.0
  %864 = vmatpush1.msra.mxu0 0.0
  %865 = vmatprep.subr.mxu0 0.0
  %866 = vmatpush1.msra.mxu0 0.0
  %867 = vmatprep.subr.mxu0 0.0
  %868 = vmatpush1.msra.mxu0 0.0
  %869 = vmatprep.subr.mxu0 0.0
  %870 = vmatpush1.msra.mxu0 0.0
  %871 = vmatprep.mubr.f32.mxu0 0.0
  %872 = vmatmul.mubr.f32.gmra.mrb[0].mxu0 %v683
  %v873 = vpop.f32.mrb[0].mxu0
  %v874 = vadd.f32 0.0, %v873
  %v875 = vpop.f32.mrb[0].mxu0
  %876 = vmatprep.mubr.f32.mxu0 0.0
  %877 = vmatmul.mubr.f32.gmra.mrb[0].mxu0 %v686
  %v878 = vpop.f32.mrb[0].mxu0
  %v879 = vadd.f32 0.0, %v878
  %v880 = vpop.f32.mrb[0].mxu0
  %881 = vdwg.mxu0
  %v882 = vld [vmem:[%s11] sm:$0xff]
  %v883 = vld [vmem:[%s11 + $0x8] sm:$0xff]
  %v884 = vld [vmem:[%s11 + $0x10] sm:$0xff]
  %v885 = vld [vmem:[%s11 + $0x18] sm:$0xff]
  %v886 = vld [vmem:[%s11 + $0x20] sm:$0xff]
  %v887 = vld [vmem:[%s11 + $0x28] sm:$0xff]
  %v888 = vld [vmem:[%s11 + $0x30] sm:$0xff]
  %v889 = vld [vmem:[%s11 + $0x38] sm:$0xff]
  %890 = vmatprep.subr.mxu0 0.0
  %891 = vmatpush1.msra.mxu0 %v882
  %892 = vmatprep.subr.mxu0 0.0
  %893 = vmatpush1.msra.mxu0 %v883
  %894 = vmatprep.subr.mxu0 0.0
  %895 = vmatpush1.msra.mxu0 %v884
  %896 = vmatprep.subr.mxu0 0.0
  %897 = vmatpush1.msra.mxu0 %v885
  %898 = vmatprep.subr.mxu0 0.0
  %899 = vmatpush1.msra.mxu0 %v886
  %900 = vmatprep.subr.mxu0 0.0
  %901 = vmatpush1.msra.mxu0 %v887
  %902 = vmatprep.subr.mxu0 0.0
  %903 = vmatpush1.msra.mxu0 %v888
  %904 = vmatprep.subr.mxu0 0.0
  %905 = vmatpush1.msra.mxu0 %v889
  %906 = vmatprep.subr.mxu0 0.0
  %907 = vmatpush1.msra.mxu0 0.0
  %908 = vmatprep.subr.mxu0 0.0
  %909 = vmatpush1.msra.mxu0 0.0
  %910 = vmatprep.subr.mxu0 0.0
  %911 = vmatpush1.msra.mxu0 0.0
  %912 = vmatprep.subr.mxu0 0.0
  %913 = vmatpush1.msra.mxu0 0.0
  %914 = vmatprep.subr.mxu0 0.0
  %915 = vmatpush1.msra.mxu0 0.0
  %916 = vmatprep.subr.mxu0 0.0
  %917 = vmatpush1.msra.mxu0 0.0
  %918 = vmatprep.subr.mxu0 0.0
  %919 = vmatpush1.msra.mxu0 0.0
  %920 = vmatprep.subr.mxu0 0.0
  %921 = vmatpush1.msra.mxu0 0.0
  %922 = vmatprep.subr.mxu0 0.0
  %923 = vmatpush1.msra.mxu0 0.0
  %924 = vmatprep.subr.mxu0 0.0
  %925 = vmatpush1.msra.mxu0 0.0
  %926 = vmatprep.subr.mxu0 0.0
  %927 = vmatpush1.msra.mxu0 0.0
  %928 = vmatprep.subr.mxu0 0.0
  %929 = vmatpush1.msra.mxu0 0.0
  %930 = vmatprep.subr.mxu0 0.0
  %931 = vmatpush1.msra.mxu0 0.0
  %932 = vmatprep.subr.mxu0 0.0
  %933 = vmatpush1.msra.mxu0 0.0
  %934 = vmatprep.subr.mxu0 0.0
  %935 = vmatpush1.msra.mxu0 0.0
  %936 = vmatprep.subr.mxu0 0.0
  %937 = vmatpush1.msra.mxu0 0.0
  %938 = vmatprep.subr.mxu0 0.0
  %939 = vmatpush1.msra.mxu0 0.0
  %940 = vmatprep.subr.mxu0 0.0
  %941 = vmatpush1.msra.mxu0 0.0
  %942 = vmatprep.subr.mxu0 0.0
  %943 = vmatpush1.msra.mxu0 0.0
  %944 = vmatprep.subr.mxu0 0.0
  %945 = vmatpush1.msra.mxu0 0.0
  %946 = vmatprep.subr.mxu0 0.0
  %947 = vmatpush1.msra.mxu0 0.0
  %948 = vmatprep.subr.mxu0 0.0
  %949 = vmatpush1.msra.mxu0 0.0
  %950 = vmatprep.subr.mxu0 0.0
  %951 = vmatpush1.msra.mxu0 0.0
  %952 = vmatprep.subr.mxu0 0.0
  %953 = vmatpush1.msra.mxu0 0.0
  %954 = vmatprep.mubr.f32.mxu0 0.0
  %955 = vmatmul.mubr.f32.gmra.mrb[0].mxu0 %v683
  %v956 = vpop.f32.mrb[0].mxu0
  %v957 = vadd.f32 0.0, %v956
  %v958 = vpop.f32.mrb[0].mxu0
  %959 = vmatprep.mubr.f32.mxu0 0.0
  %960 = vmatmul.mubr.f32.gmra.mrb[0].mxu0 %v686
  %v961 = vpop.f32.mrb[0].mxu0
  %v962 = vadd.f32 0.0, %v961
  %v963 = vpop.f32.mrb[0].mxu0
  %964 = vdwg.mxu0
  %v965 = vld [vmem:[%s13] sm:$0xff]
  %v966 = vld [vmem:[%s13 + $0x8] sm:$0xff]
  %v969 = vcombine.high %v797, %v797
  %v971 = vunpack.c.l.s4 1966171168
  %v972 = vunpack.c.0.s8 %v971
  %v973 = vlaneseq
  %v974 = vshrl.u32 %v973, 7
  %v975 = vsub.s32 %v972, %v974
  %v976 = vrot.slane %v797, %v975
  %v978 = vunpack.c.l.s4 1966171168
  %v979 = vunpack.c.0.s8 %v978
  %v980 = vlaneseq
  %v981 = vshrl.u32 %v980, 7
  %v982 = vsub.s32 %v979, %v981
  %v983 = vrot.slane %v969, %v982
  %v984 = vcombine.high %v976, %v976
  %v985 = vcombine.high %v983, %v983
  %v987 = vunpack.c.l.s4 1966171168
  %v988 = vunpack.c.0.s8 %v987
  %v989 = vlaneseq
  %v990 = vshrl.u32 %v989, 7
  %v991 = vsub.s32 %v988, %v990
  %v992 = vrot.slane %v976, %v991
  %v994 = vunpack.c.l.s4 1966171168
  %v995 = vunpack.c.0.s8 %v994
  %v996 = vlaneseq
  %v997 = vshrl.u32 %v996, 7
  %v998 = vsub.s32 %v995, %v997
  %v999 = vrot.slane %v983, %v998
  %v1001 = vunpack.c.l.s4 1966171168
  %v1002 = vunpack.c.0.s8 %v1001
  %v1003 = vlaneseq
  %v1004 = vshrl.u32 %v1003, 7
  %v1005 = vsub.s32 %v1002, %v1004
  %v1006 = vrot.slane %v984, %v1005
  %v1008 = vunpack.c.l.s4 1966171168
  %v1009 = vunpack.c.0.s8 %v1008
  %v1010 = vlaneseq
  %v1011 = vshrl.u32 %v1010, 7
  %v1012 = vsub.s32 %v1009, %v1011
  %v1013 = vrot.slane %v985, %v1012
  %v1014 = vcombine.high %v992, %v992
  %v1015 = vcombine.high %v999, %v999
  %v1016 = vcombine.high %v1006, %v1006
  %v1017 = vcombine.high %v1013, %v1013
  %v1018 = vcombine.high %v798, %v798
  %v1020 = vunpack.c.l.s4 1966171168
  %v1021 = vunpack.c.0.s8 %v1020
  %v1022 = vlaneseq
  %v1023 = vshrl.u32 %v1022, 7
  %v1024 = vsub.s32 %v1021, %v1023
  %v1025 = vrot.slane %v798, %v1024
  %v1027 = vunpack.c.l.s4 1966171168
  %v1028 = vunpack.c.0.s8 %v1027
  %v1029 = vlaneseq
  %v1030 = vshrl.u32 %v1029, 7
  %v1031 = vsub.s32 %v1028, %v1030
  %v1032 = vrot.slane %v1018, %v1031
  %v1033 = vcombine.high %v1025, %v1025
  %v1034 = vcombine.high %v1032, %v1032
  %v1036 = vunpack.c.l.s4 1966171168
  %v1037 = vunpack.c.0.s8 %v1036
  %v1038 = vlaneseq
  %v1039 = vshrl.u32 %v1038, 7
  %v1040 = vsub.s32 %v1037, %v1039
  %v1041 = vrot.slane %v1025, %v1040
  %v1043 = vunpack.c.l.s4 1966171168
  %v1044 = vunpack.c.0.s8 %v1043
  %v1045 = vlaneseq
  %v1046 = vshrl.u32 %v1045, 7
  %v1047 = vsub.s32 %v1044, %v1046
  %v1048 = vrot.slane %v1032, %v1047
  %v1050 = vunpack.c.l.s4 1966171168
  %v1051 = vunpack.c.0.s8 %v1050
  %v1052 = vlaneseq
  %v1053 = vshrl.u32 %v1052, 7
  %v1054 = vsub.s32 %v1051, %v1053
  %v1055 = vrot.slane %v1033, %v1054
  %v1057 = vunpack.c.l.s4 1966171168
  %v1058 = vunpack.c.0.s8 %v1057
  %v1059 = vlaneseq
  %v1060 = vshrl.u32 %v1059, 7
  %v1061 = vsub.s32 %v1058, %v1060
  %v1062 = vrot.slane %v1034, %v1061
  %v1063 = vcombine.high %v1041, %v1041
  %v1064 = vcombine.high %v1048, %v1048
  %v1065 = vcombine.high %v1055, %v1055
  %v1066 = vcombine.high %v1062, %v1062
  %v1067 = vlaneseq
  %v1068 = vshrl.u32 %v1067, 7
  %v1069 = vsub.s32 0, %v1068
  %v1070 = vrot.slane %v992, %v1069
  %v1071 = vlaneseq
  %v1072 = vshrl.u32 %v1071, 7
  %v1073 = vsub.s32 0, %v1072
  %v1074 = vrot.slane %v1006, %v1073
  %v1075 = vlaneseq
  %v1076 = vshrl.u32 %v1075, 7
  %v1077 = vsub.s32 0, %v1076
  %v1078 = vrot.slane %v1014, %v1077
  %v1079 = vlaneseq
  %v1080 = vshrl.u32 %v1079, 7
  %v1081 = vsub.s32 0, %v1080
  %v1082 = vrot.slane %v1016, %v1081
  %v1083 = vlaneseq
  %v1084 = vshrl.u32 %v1083, 7
  %v1085 = vsub.s32 0, %v1084
  %v1086 = vrot.slane %v999, %v1085
  %v1087 = vlaneseq
  %v1088 = vshrl.u32 %v1087, 7
  %v1089 = vsub.s32 0, %v1088
  %v1090 = vrot.slane %v1013, %v1089
  %v1091 = vlaneseq
  %v1092 = vshrl.u32 %v1091, 7
  %v1093 = vsub.s32 0, %v1092
  %v1094 = vrot.slane %v1015, %v1093
  %v1095 = vlaneseq
  %v1096 = vshrl.u32 %v1095, 7
  %v1097 = vsub.s32 0, %v1096
  %v1098 = vrot.slane %v1017, %v1097
  %v1099 = vlaneseq
  %v1100 = vshrl.u32 %v1099, 7
  %v1101 = vsub.s32 0, %v1100
  %v1102 = vrot.slane %v1041, %v1101
  %v1103 = vlaneseq
  %v1104 = vshrl.u32 %v1103, 7
  %v1105 = vsub.s32 0, %v1104
  %v1106 = vrot.slane %v1055, %v1105
  %v1107 = vlaneseq
  %v1108 = vshrl.u32 %v1107, 7
  %v1109 = vsub.s32 0, %v1108
  %v1110 = vrot.slane %v1063, %v1109
  %v1111 = vlaneseq
  %v1112 = vshrl.u32 %v1111, 7
  %v1113 = vsub.s32 0, %v1112
  %v1114 = vrot.slane %v1065, %v1113
  %v1115 = vlaneseq
  %v1116 = vshrl.u32 %v1115, 7
  %v1117 = vsub.s32 0, %v1116
  %v1118 = vrot.slane %v1048, %v1117
  %v1119 = vlaneseq
  %v1120 = vshrl.u32 %v1119, 7
  %v1121 = vsub.s32 0, %v1120
  %v1122 = vrot.slane %v1062, %v1121
  %v1123 = vlaneseq
  %v1124 = vshrl.u32 %v1123, 7
  %v1125 = vsub.s32 0, %v1124
  %v1126 = vrot.slane %v1064, %v1125
  %v1127 = vlaneseq
  %v1128 = vshrl.u32 %v1127, 7
  %v1129 = vsub.s32 0, %v1128
  %v1130 = vrot.slane %v1066, %v1129
  %1148 = vset.pattern.permute.xlu0 0
  %1149 = vperm.xlu0 %1148, %v965
  %v1150 = vpop.permute.xlu0 %1149
  %1153 = vset.pattern.permute.xlu0 0
  %1154 = vperm.xlu0 %1153, %v966
  %v1155 = vpop.permute.xlu0 %1154
  %v1157 = vmul.f32 %v1070, %v1150
  %v1158 = vmul.f32 %v1070, %v1155
  %v1159 = vmul.f32 %v1074, %v1150
  %v1160 = vmul.f32 %v1074, %v1155
  %v1161 = vmul.f32 %v1078, %v1150
  %v1162 = vmul.f32 %v1078, %v1155
  %v1163 = vmul.f32 %v1082, %v1150
  %v1164 = vmul.f32 %v1082, %v1155
  %v1165 = vmul.f32 %v1086, %v1150
  %v1166 = vmul.f32 %v1086, %v1155
  %v1167 = vmul.f32 %v1090, %v1150
  %v1168 = vmul.f32 %v1090, %v1155
  %v1169 = vmul.f32 %v1094, %v1150
  %v1170 = vmul.f32 %v1094, %v1155
  %v1171 = vmul.f32 %v1098, %v1150
  %v1172 = vmul.f32 %v1098, %v1155
  %v1173 = vmul.f32 %v1102, %v1150
  %v1174 = vmul.f32 %v1102, %v1155
  %v1175 = vmul.f32 %v1106, %v1150
  %v1176 = vmul.f32 %v1106, %v1155
  %v1177 = vmul.f32 %v1110, %v1150
  %v1178 = vmul.f32 %v1110, %v1155
  %v1179 = vmul.f32 %v1114, %v1150
  %v1180 = vmul.f32 %v1114, %v1155
  %v1181 = vmul.f32 %v1118, %v1150
  %v1182 = vmul.f32 %v1118, %v1155
  %v1183 = vmul.f32 %v1122, %v1150
  %v1184 = vmul.f32 %v1122, %v1155
  %v1185 = vmul.f32 %v1126, %v1150
  %v1186 = vmul.f32 %v1126, %v1155
  %v1187 = vmul.f32 %v1130, %v1150
  %v1188 = vmul.f32 %v1130, %v1155
  %v1189 = vmul.f32 %v1157, 1.442695
  %v1190 = vpow.pop %v1189
  %v1191 = vmul.f32 %v1158, 1.442695
  %v1192 = vpow.pop %v1191
  %v1193 = vmul.f32 %v1159, 1.442695
  %v1194 = vpow.pop %v1193
  %v1195 = vmul.f32 %v1160, 1.442695
  %v1196 = vpow.pop %v1195
  %v1197 = vmul.f32 %v1161, 1.442695
  %v1198 = vpow.pop %v1197
  %v1199 = vmul.f32 %v1162, 1.442695
  %v1200 = vpow.pop %v1199
  %v1201 = vmul.f32 %v1163, 1.442695
  %v1202 = vpow.pop %v1201
  %v1203 = vmul.f32 %v1164, 1.442695
  %v1204 = vpow.pop %v1203
  %v1205 = vmul.f32 %v1165, 1.442695
  %v1206 = vpow.pop %v1205
  %v1207 = vmul.f32 %v1166, 1.442695
  %v1208 = vpow.pop %v1207
  %v1209 = vmul.f32 %v1167, 1.442695
  %v1210 = vpow.pop %v1209
  %v1211 = vmul.f32 %v1168, 1.442695
  %v1212 = vpow.pop %v1211
  %v1213 = vmul.f32 %v1169, 1.442695
  %v1214 = vpow.pop %v1213
  %v1215 = vmul.f32 %v1170, 1.442695
  %v1216 = vpow.pop %v1215
  %v1217 = vmul.f32 %v1171, 1.442695
  %v1218 = vpow.pop %v1217
  %v1219 = vmul.f32 %v1172, 1.442695
  %v1220 = vpow.pop %v1219
  %v1221 = vmul.f32 %v1173, 1.442695
  %v1222 = vpow.pop %v1221
  %v1223 = vmul.f32 %v1174, 1.442695
  %v1224 = vpow.pop %v1223
  %v1225 = vmul.f32 %v1175, 1.442695
  %v1226 = vpow.pop %v1225
  %v1227 = vmul.f32 %v1176, 1.442695
  %v1228 = vpow.pop %v1227
  %v1229 = vmul.f32 %v1177, 1.442695
  %v1230 = vpow.pop %v1229
  %v1231 = vmul.f32 %v1178, 1.442695
  %v1232 = vpow.pop %v1231
  %v1233 = vmul.f32 %v1179, 1.442695
  %v1234 = vpow.pop %v1233
  %v1235 = vmul.f32 %v1180, 1.442695
  %v1236 = vpow.pop %v1235
  %v1237 = vmul.f32 %v1181, 1.442695
  %v1238 = vpow.pop %v1237
  %v1239 = vmul.f32 %v1182, 1.442695
  %v1240 = vpow.pop %v1239
  %v1241 = vmul.f32 %v1183, 1.442695
  %v1242 = vpow.pop %v1241
  %v1243 = vmul.f32 %v1184, 1.442695
  %v1244 = vpow.pop %v1243
  %v1245 = vmul.f32 %v1185, 1.442695
  %v1246 = vpow.pop %v1245
  %v1247 = vmul.f32 %v1186, 1.442695
  %v1248 = vpow.pop %v1247
  %v1249 = vmul.f32 %v1187, 1.442695
  %v1250 = vpow.pop %v1249
  %v1251 = vmul.f32 %v1188, 1.442695
  %v1252 = vpow.pop %v1251
  %1253 = vst.msk [vmem:[#allocation2] sm:$0xff] %vm681, %v1190
  %1254 = vst.msk [vmem:[#allocation2 + $0x8] sm:$0xff] %vm681, %v1192
  %1255 = vst.msk [vmem:[#allocation2 + $0x10] sm:$0xff] %vm681, %v1194
  %1256 = vst.msk [vmem:[#allocation2 + $0x18] sm:$0xff] %vm681, %v1196
  %1257 = vst.msk [vmem:[#allocation2 + $0x20] sm:$0xff] %vm681, %v1198
  %1258 = vst.msk [vmem:[#allocation2 + $0x28] sm:$0xff] %vm681, %v1200
  %1259 = vst.msk [vmem:[#allocation2 + $0x30] sm:$0xff] %vm681, %v1202
  %1260 = vst.msk [vmem:[#allocation2 + $0x38] sm:$0xff] %vm681, %v1204
  %1261 = vst.msk [vmem:[#allocation2 + $0x40] sm:$0xff] %vm681, %v1206
  %1262 = vst.msk [vmem:[#allocation2 + $0x48] sm:$0xff] %vm681, %v1208
  %1263 = vst.msk [vmem:[#allocation2 + $0x50] sm:$0xff] %vm681, %v1210
  %1264 = vst.msk [vmem:[#allocation2 + $0x58] sm:$0xff] %vm681, %v1212
  %1265 = vst.msk [vmem:[#allocation2 + $0x60] sm:$0xff] %vm681, %v1214
  %1266 = vst.msk [vmem:[#allocation2 + $0x68] sm:$0xff] %vm681, %v1216
  %1267 = vst.msk [vmem:[#allocation2 + $0x70] sm:$0xff] %vm681, %v1218
  %1268 = vst.msk [vmem:[#allocation2 + $0x78] sm:$0xff] %vm681, %v1220
  %1269 = vst.msk [vmem:[#allocation2 + $0x80] sm:$0xff] %vm681, %v1222
  %1270 = vst.msk [vmem:[#allocation2 + $0x88] sm:$0xff] %vm681, %v1224
  %1271 = vst.msk [vmem:[#allocation2 + $0x90] sm:$0xff] %vm681, %v1226
  %1272 = vst.msk [vmem:[#allocation2 + $0x98] sm:$0xff] %vm681, %v1228
  %1273 = vst.msk [vmem:[#allocation2 + $0xa0] sm:$0xff] %vm681, %v1230
  %1274 = vst.msk [vmem:[#allocation2 + $0xa8] sm:$0xff] %vm681, %v1232
  %1275 = vst.msk [vmem:[#allocation2 + $0xb0] sm:$0xff] %vm681, %v1234
  %1276 = vst.msk [vmem:[#allocation2 + $0xb8] sm:$0xff] %vm681, %v1236
  %1277 = vst.msk [vmem:[#allocation2 + $0xc0] sm:$0xff] %vm681, %v1238
  %1278 = vst.msk [vmem:[#allocation2 + $0xc8] sm:$0xff] %vm681, %v1240
  %1279 = vst.msk [vmem:[#allocation2 + $0xd0] sm:$0xff] %vm681, %v1242
  %1280 = vst.msk [vmem:[#allocation2 + $0xd8] sm:$0xff] %vm681, %v1244
  %1281 = vst.msk [vmem:[#allocation2 + $0xe0] sm:$0xff] %vm681, %v1246
  %1282 = vst.msk [vmem:[#allocation2 + $0xe8] sm:$0xff] %vm681, %v1248
  %1283 = vst.msk [vmem:[#allocation2 + $0xf0] sm:$0xff] %vm681, %v1250
  %1284 = vst.msk [vmem:[#allocation2 + $0xf8] sm:$0xff] %vm681, %v1252
  %v1285 = vmul.f32 %v797, %v664
  %v1286 = vmul.f32 %v798, %v665
  %v1289 = vcombine.high %v1285, %v1285
  %v1291 = vunpack.c.l.s4 1966171168
  %v1292 = vunpack.c.0.s8 %v1291
  %v1293 = vlaneseq
  %v1294 = vshrl.u32 %v1293, 7
  %v1295 = vsub.s32 %v1292, %v1294
  %v1296 = vrot.slane %v1285, %v1295
  %v1298 = vunpack.c.l.s4 1966171168
  %v1299 = vunpack.c.0.s8 %v1298
  %v1300 = vlaneseq
  %v1301 = vshrl.u32 %v1300, 7
  %v1302 = vsub.s32 %v1299, %v1301
  %v1303 = vrot.slane %v1289, %v1302
  %v1304 = vcombine.high %v1296, %v1296
  %v1305 = vcombine.high %v1303, %v1303
  %v1307 = vunpack.c.l.s4 1966171168
  %v1308 = vunpack.c.0.s8 %v1307
  %v1309 = vlaneseq
  %v1310 = vshrl.u32 %v1309, 7
  %v1311 = vsub.s32 %v1308, %v1310
  %v1312 = vrot.slane %v1296, %v1311
  %v1314 = vunpack.c.l.s4 1966171168
  %v1315 = vunpack.c.0.s8 %v1314
  %v1316 = vlaneseq
  %v1317 = vshrl.u32 %v1316, 7
  %v1318 = vsub.s32 %v1315, %v1317
  %v1319 = vrot.slane %v1303, %v1318
  %v1321 = vunpack.c.l.s4 1966171168
  %v1322 = vunpack.c.0.s8 %v1321
  %v1323 = vlaneseq
  %v1324 = vshrl.u32 %v1323, 7
  %v1325 = vsub.s32 %v1322, %v1324
  %v1326 = vrot.slane %v1304, %v1325
  %v1328 = vunpack.c.l.s4 1966171168
  %v1329 = vunpack.c.0.s8 %v1328
  %v1330 = vlaneseq
  %v1331 = vshrl.u32 %v1330, 7
  %v1332 = vsub.s32 %v1329, %v1331
  %v1333 = vrot.slane %v1305, %v1332
  %v1334 = vcombine.high %v1312, %v1312
  %v1335 = vcombine.high %v1319, %v1319
  %v1336 = vcombine.high %v1326, %v1326
  %v1337 = vcombine.high %v1333, %v1333
  %v1338 = vcombine.high %v1286, %v1286
  %v1340 = vunpack.c.l.s4 1966171168
  %v1341 = vunpack.c.0.s8 %v1340
  %v1342 = vlaneseq
  %v1343 = vshrl.u32 %v1342, 7
  %v1344 = vsub.s32 %v1341, %v1343
  %v1345 = vrot.slane %v1286, %v1344
  %v1347 = vunpack.c.l.s4 1966171168
  %v1348 = vunpack.c.0.s8 %v1347
  %v1349 = vlaneseq
  %v1350 = vshrl.u32 %v1349, 7
  %v1351 = vsub.s32 %v1348, %v1350
  %v1352 = vrot.slane %v1338, %v1351
  %v1353 = vcombine.high %v1345, %v1345
  %v1354 = vcombine.high %v1352, %v1352
  %v1356 = vunpack.c.l.s4 1966171168
  %v1357 = vunpack.c.0.s8 %v1356
  %v1358 = vlaneseq
  %v1359 = vshrl.u32 %v1358, 7
  %v1360 = vsub.s32 %v1357, %v1359
  %v1361 = vrot.slane %v1345, %v1360
  %v1363 = vunpack.c.l.s4 1966171168
  %v1364 = vunpack.c.0.s8 %v1363
  %v1365 = vlaneseq
  %v1366 = vshrl.u32 %v1365, 7
  %v1367 = vsub.s32 %v1364, %v1366
  %v1368 = vrot.slane %v1352, %v1367
  %v1370 = vunpack.c.l.s4 1966171168
  %v1371 = vunpack.c.0.s8 %v1370
  %v1372 = vlaneseq
  %v1373 = vshrl.u32 %v1372, 7
  %v1374 = vsub.s32 %v1371, %v1373
  %v1375 = vrot.slane %v1353, %v1374
  %v1377 = vunpack.c.l.s4 1966171168
  %v1378 = vunpack.c.0.s8 %v1377
  %v1379 = vlaneseq
  %v1380 = vshrl.u32 %v1379, 7
  %v1381 = vsub.s32 %v1378, %v1380
  %v1382 = vrot.slane %v1354, %v1381
  %v1383 = vcombine.high %v1361, %v1361
  %v1384 = vcombine.high %v1368, %v1368
  %v1385 = vcombine.high %v1375, %v1375
  %v1386 = vcombine.high %v1382, %v1382
  %v1387 = vlaneseq
  %v1388 = vshrl.u32 %v1387, 7
  %v1389 = vsub.s32 0, %v1388
  %v1390 = vrot.slane %v874, %v1389
  %1392 = vbcast.lane.b32.xlu0 %v1390, 256
  %v1393 = vpop.permute.xlu0 %1392
  %s1395 = sor.u32 256, 8
  %1396 = vbcast.lane.b32.xlu0 %v1390, %s1395
  %v1397 = vpop.permute.xlu0 %1396
  %v1398 = vlaneseq
  %v1399 = vshrl.u32 %v1398, 7
  %v1400 = vsub.s32 1, %v1399
  %v1401 = vrot.slane %v874, %v1400
  %1403 = vbcast.lane.b32.xlu0 %v1401, 256
  %v1404 = vpop.permute.xlu0 %1403
  %s1406 = sor.u32 256, 8
  %1407 = vbcast.lane.b32.xlu0 %v1401, %s1406
  %v1408 = vpop.permute.xlu0 %1407
  %v1409 = vlaneseq
  %v1410 = vshrl.u32 %v1409, 7
  %v1411 = vsub.s32 2, %v1410
  %v1412 = vrot.slane %v874, %v1411
  %1414 = vbcast.lane.b32.xlu0 %v1412, 256
  %v1415 = vpop.permute.xlu0 %1414
  %s1417 = sor.u32 256, 8
  %1418 = vbcast.lane.b32.xlu0 %v1412, %s1417
  %v1419 = vpop.permute.xlu0 %1418
  %v1420 = vlaneseq
  %v1421 = vshrl.u32 %v1420, 7
  %v1422 = vsub.s32 3, %v1421
  %v1423 = vrot.slane %v874, %v1422
  %1425 = vbcast.lane.b32.xlu0 %v1423, 256
  %v1426 = vpop.permute.xlu0 %1425
  %s1428 = sor.u32 256, 8
  %1429 = vbcast.lane.b32.xlu0 %v1423, %s1428
  %v1430 = vpop.permute.xlu0 %1429
  %v1431 = vlaneseq
  %v1432 = vshrl.u32 %v1431, 7
  %v1433 = vsub.s32 4, %v1432
  %v1434 = vrot.slane %v874, %v1433
  %1436 = vbcast.lane.b32.xlu0 %v1434, 256
  %v1437 = vpop.permute.xlu0 %1436
  %s1439 = sor.u32 256, 8
  %1440 = vbcast.lane.b32.xlu0 %v1434, %s1439
  %v1441 = vpop.permute.xlu0 %1440
  %v1442 = vlaneseq
  %v1443 = vshrl.u32 %v1442, 7
  %v1444 = vsub.s32 5, %v1443
  %v1445 = vrot.slane %v874, %v1444
  %1447 = vbcast.lane.b32.xlu0 %v1445, 256
  %v1448 = vpop.permute.xlu0 %1447
  %s1450 = sor.u32 256, 8
  %1451 = vbcast.lane.b32.xlu0 %v1445, %s1450
  %v1452 = vpop.permute.xlu0 %1451
  %v1453 = vlaneseq
  %v1454 = vshrl.u32 %v1453, 7
  %v1455 = vsub.s32 6, %v1454
  %v1456 = vrot.slane %v874, %v1455
  %1458 = vbcast.lane.b32.xlu0 %v1456, 256
  %v1459 = vpop.permute.xlu0 %1458
  %s1461 = sor.u32 256, 8
  %1462 = vbcast.lane.b32.xlu0 %v1456, %s1461
  %v1463 = vpop.permute.xlu0 %1462
  %v1464 = vlaneseq
  %v1465 = vshrl.u32 %v1464, 7
  %v1466 = vsub.s32 7, %v1465
  %v1467 = vrot.slane %v874, %v1466
  %1469 = vbcast.lane.b32.xlu0 %v1467, 256
  %v1470 = vpop.permute.xlu0 %1469
  %s1472 = sor.u32 256, 8
  %1473 = vbcast.lane.b32.xlu0 %v1467, %s1472
  %v1474 = vpop.permute.xlu0 %1473
  %v1475 = vlaneseq
  %v1476 = vshrl.u32 %v1475, 7
  %v1477 = vsub.s32 0, %v1476
  %v1478 = vrot.slane %v879, %v1477
  %1480 = vbcast.lane.b32.xlu0 %v1478, 256
  %v1481 = vpop.permute.xlu0 %1480
  %s1483 = sor.u32 256, 8
  %1484 = vbcast.lane.b32.xlu0 %v1478, %s1483
  %v1485 = vpop.permute.xlu0 %1484
  %v1486 = vlaneseq
  %v1487 = vshrl.u32 %v1486, 7
  %v1488 = vsub.s32 1, %v1487
  %v1489 = vrot.slane %v879, %v1488
  %1491 = vbcast.lane.b32.xlu0 %v1489, 256
  %v1492 = vpop.permute.xlu0 %1491
  %s1494 = sor.u32 256, 8
  %1495 = vbcast.lane.b32.xlu0 %v1489, %s1494
  %v1496 = vpop.permute.xlu0 %1495
  %v1497 = vlaneseq
  %v1498 = vshrl.u32 %v1497, 7
  %v1499 = vsub.s32 2, %v1498
  %v1500 = vrot.slane %v879, %v1499
  %1502 = vbcast.lane.b32.xlu0 %v1500, 256
  %v1503 = vpop.permute.xlu0 %1502
  %s1505 = sor.u32 256, 8
  %1506 = vbcast.lane.b32.xlu0 %v1500, %s1505
  %v1507 = vpop.permute.xlu0 %1506
  %v1508 = vlaneseq
  %v1509 = vshrl.u32 %v1508, 7
  %v1510 = vsub.s32 3, %v1509
  %v1511 = vrot.slane %v879, %v1510
  %1513 = vbcast.lane.b32.xlu0 %v1511, 256
  %v1514 = vpop.permute.xlu0 %1513
  %s1516 = sor.u32 256, 8
  %1517 = vbcast.lane.b32.xlu0 %v1511, %s1516
  %v1518 = vpop.permute.xlu0 %1517
  %v1519 = vlaneseq
  %v1520 = vshrl.u32 %v1519, 7
  %v1521 = vsub.s32 4, %v1520
  %v1522 = vrot.slane %v879, %v1521
  %1524 = vbcast.lane.b32.xlu0 %v1522, 256
  %v1525 = vpop.permute.xlu0 %1524
  %s1527 = sor.u32 256, 8
  %1528 = vbcast.lane.b32.xlu0 %v1522, %s1527
  %v1529 = vpop.permute.xlu0 %1528
  %v1530 = vlaneseq
  %v1531 = vshrl.u32 %v1530, 7
  %v1532 = vsub.s32 5, %v1531
  %v1533 = vrot.slane %v879, %v1532
  %1535 = vbcast.lane.b32.xlu0 %v1533, 256
  %v1536 = vpop.permute.xlu0 %1535
  %s1538 = sor.u32 256, 8
  %1539 = vbcast.lane.b32.xlu0 %v1533, %s1538
  %v1540 = vpop.permute.xlu0 %1539
  %v1541 = vlaneseq
  %v1542 = vshrl.u32 %v1541, 7
  %v1543 = vsub.s32 6, %v1542
  %v1544 = vrot.slane %v879, %v1543
  %1546 = vbcast.lane.b32.xlu0 %v1544, 256
  %v1547 = vpop.permute.xlu0 %1546
  %s1549 = sor.u32 256, 8
  %1550 = vbcast.lane.b32.xlu0 %v1544, %s1549
  %v1551 = vpop.permute.xlu0 %1550
  %v1552 = vlaneseq
  %v1553 = vshrl.u32 %v1552, 7
  %v1554 = vsub.s32 7, %v1553
  %v1555 = vrot.slane %v879, %v1554
  %1557 = vbcast.lane.b32.xlu0 %v1555, 256
  %v1558 = vpop.permute.xlu0 %1557
  %s1560 = sor.u32 256, 8
  %1561 = vbcast.lane.b32.xlu0 %v1555, %s1560
  %v1562 = vpop.permute.xlu0 %1561
  %v1563 = vlaneseq
  %v1564 = vshrl.u32 %v1563, 7
  %v1565 = vsub.s32 0, %v1564
  %v1566 = vrot.slane %v1312, %v1565
  %v1567 = vlaneseq
  %v1568 = vshrl.u32 %v1567, 7
  %v1569 = vsub.s32 0, %v1568
  %v1570 = vrot.slane %v1326, %v1569
  %v1571 = vlaneseq
  %v1572 = vshrl.u32 %v1571, 7
  %v1573 = vsub.s32 0, %v1572
  %v1574 = vrot.slane %v1334, %v1573
  %v1575 = vlaneseq
  %v1576 = vshrl.u32 %v1575, 7
  %v1577 = vsub.s32 0, %v1576
  %v1578 = vrot.slane %v1336, %v1577
  %v1579 = vlaneseq
  %v1580 = vshrl.u32 %v1579, 7
  %v1581 = vsub.s32 0, %v1580
  %v1582 = vrot.slane %v1319, %v1581
  %v1583 = vlaneseq
  %v1584 = vshrl.u32 %v1583, 7
  %v1585 = vsub.s32 0, %v1584
  %v1586 = vrot.slane %v1333, %v1585
  %v1587 = vlaneseq
  %v1588 = vshrl.u32 %v1587, 7
  %v1589 = vsub.s32 0, %v1588
  %v1590 = vrot.slane %v1335, %v1589
  %v1591 = vlaneseq
  %v1592 = vshrl.u32 %v1591, 7
  %v1593 = vsub.s32 0, %v1592
  %v1594 = vrot.slane %v1337, %v1593
  %v1595 = vlaneseq
  %v1596 = vshrl.u32 %v1595, 7
  %v1597 = vsub.s32 0, %v1596
  %v1598 = vrot.slane %v1361, %v1597
  %v1599 = vlaneseq
  %v1600 = vshrl.u32 %v1599, 7
  %v1601 = vsub.s32 0, %v1600
  %v1602 = vrot.slane %v1375, %v1601
  %v1603 = vlaneseq
  %v1604 = vshrl.u32 %v1603, 7
  %v1605 = vsub.s32 0, %v1604
  %v1606 = vrot.slane %v1383, %v1605
  %v1607 = vlaneseq
  %v1608 = vshrl.u32 %v1607, 7
  %v1609 = vsub.s32 0, %v1608
  %v1610 = vrot.slane %v1385, %v1609
  %v1611 = vlaneseq
  %v1612 = vshrl.u32 %v1611, 7
  %v1613 = vsub.s32 0, %v1612
  %v1614 = vrot.slane %v1368, %v1613
  %v1615 = vlaneseq
  %v1616 = vshrl.u32 %v1615, 7
  %v1617 = vsub.s32 0, %v1616
  %v1618 = vrot.slane %v1382, %v1617
  %v1619 = vlaneseq
  %v1620 = vshrl.u32 %v1619, 7
  %v1621 = vsub.s32 0, %v1620
  %v1622 = vrot.slane %v1384, %v1621
  %v1623 = vlaneseq
  %v1624 = vshrl.u32 %v1623, 7
  %v1625 = vsub.s32 0, %v1624
  %v1626 = vrot.slane %v1386, %v1625
  %v1643 = vmul.f32 %v1566, %v1393
  %v1644 = vmul.f32 %v1566, %v1397
  %v1645 = vmul.f32 %v1570, %v1404
  %v1646 = vmul.f32 %v1570, %v1408
  %v1647 = vmul.f32 %v1574, %v1415
  %v1648 = vmul.f32 %v1574, %v1419
  %v1649 = vmul.f32 %v1578, %v1426
  %v1650 = vmul.f32 %v1578, %v1430
  %v1651 = vmul.f32 %v1582, %v1437
  %v1652 = vmul.f32 %v1582, %v1441
  %v1653 = vmul.f32 %v1586, %v1448
  %v1654 = vmul.f32 %v1586, %v1452
  %v1655 = vmul.f32 %v1590, %v1459
  %v1656 = vmul.f32 %v1590, %v1463
  %v1657 = vmul.f32 %v1594, %v1470
  %v1658 = vmul.f32 %v1594, %v1474
  %v1659 = vmul.f32 %v1598, %v1481
  %v1660 = vmul.f32 %v1598, %v1485
  %v1661 = vmul.f32 %v1602, %v1492
  %v1662 = vmul.f32 %v1602, %v1496
  %v1663 = vmul.f32 %v1606, %v1503
  %v1664 = vmul.f32 %v1606, %v1507
  %v1665 = vmul.f32 %v1610, %v1514
  %v1666 = vmul.f32 %v1610, %v1518
  %v1667 = vmul.f32 %v1614, %v1525
  %v1668 = vmul.f32 %v1614, %v1529
  %v1669 = vmul.f32 %v1618, %v1536
  %v1670 = vmul.f32 %v1618, %v1540
  %v1671 = vmul.f32 %v1622, %v1547
  %v1672 = vmul.f32 %v1622, %v1551
  %v1673 = vmul.f32 %v1626, %v1558
  %v1674 = vmul.f32 %v1626, %v1562
  %1675 = vst.msk [vmem:[#allocation3] sm:$0xff] %vm681, %v1643
  %1676 = vst.msk [vmem:[#allocation3 + $0x8] sm:$0xff] %vm681, %v1644
  %1677 = vst.msk [vmem:[#allocation3 + $0x10] sm:$0xff] %vm681, %v1645
  %1678 = vst.msk [vmem:[#allocation3 + $0x18] sm:$0xff] %vm681, %v1646
  %1679 = vst.msk [vmem:[#allocation3 + $0x20] sm:$0xff] %vm681, %v1647
  %1680 = vst.msk [vmem:[#allocation3 + $0x28] sm:$0xff] %vm681, %v1648
  %1681 = vst.msk [vmem:[#allocation3 + $0x30] sm:$0xff] %vm681, %v1649
  %1682 = vst.msk [vmem:[#allocation3 + $0x38] sm:$0xff] %vm681, %v1650
  %1683 = vst.msk [vmem:[#allocation3 + $0x40] sm:$0xff] %vm681, %v1651
  %1684 = vst.msk [vmem:[#allocation3 + $0x48] sm:$0xff] %vm681, %v1652
  %1685 = vst.msk [vmem:[#allocation3 + $0x50] sm:$0xff] %vm681, %v1653
  %1686 = vst.msk [vmem:[#allocation3 + $0x58] sm:$0xff] %vm681, %v1654
  %1687 = vst.msk [vmem:[#allocation3 + $0x60] sm:$0xff] %vm681, %v1655
  %1688 = vst.msk [vmem:[#allocation3 + $0x68] sm:$0xff] %vm681, %v1656
  %1689 = vst.msk [vmem:[#allocation3 + $0x70] sm:$0xff] %vm681, %v1657
  %1690 = vst.msk [vmem:[#allocation3 + $0x78] sm:$0xff] %vm681, %v1658
  %1691 = vst.msk [vmem:[#allocation3 + $0x80] sm:$0xff] %vm681, %v1659
  %1692 = vst.msk [vmem:[#allocation3 + $0x88] sm:$0xff] %vm681, %v1660
  %1693 = vst.msk [vmem:[#allocation3 + $0x90] sm:$0xff] %vm681, %v1661
  %1694 = vst.msk [vmem:[#allocation3 + $0x98] sm:$0xff] %vm681, %v1662
  %1695 = vst.msk [vmem:[#allocation3 + $0xa0] sm:$0xff] %vm681, %v1663
  %1696 = vst.msk [vmem:[#allocation3 + $0xa8] sm:$0xff] %vm681, %v1664
  %1697 = vst.msk [vmem:[#allocation3 + $0xb0] sm:$0xff] %vm681, %v1665
  %1698 = vst.msk [vmem:[#allocation3 + $0xb8] sm:$0xff] %vm681, %v1666
  %1699 = vst.msk [vmem:[#allocation3 + $0xc0] sm:$0xff] %vm681, %v1667
  %1700 = vst.msk [vmem:[#allocation3 + $0xc8] sm:$0xff] %vm681, %v1668
  %1701 = vst.msk [vmem:[#allocation3 + $0xd0] sm:$0xff] %vm681, %v1669
  %1702 = vst.msk [vmem:[#allocation3 + $0xd8] sm:$0xff] %vm681, %v1670
  %1703 = vst.msk [vmem:[#allocation3 + $0xe0] sm:$0xff] %vm681, %v1671
  %1704 = vst.msk [vmem:[#allocation3 + $0xe8] sm:$0xff] %vm681, %v1672
  %1705 = vst.msk [vmem:[#allocation3 + $0xf0] sm:$0xff] %vm681, %v1673
  %1706 = vst.msk [vmem:[#allocation3 + $0xf8] sm:$0xff] %vm681, %v1674
  %v1707 = vld [vmem:[#allocation2] sm:$0xff]
  %v1708 = vld [vmem:[#allocation2 + $0x8] sm:$0xff]
  %v1709 = vmul.f32 %v1707, 0.0
  %v1710 = vmul.f32 %v1708, 0.0
  %v1711 = vld [vmem:[#allocation3] sm:$0xff]
  %v1712 = vld [vmem:[#allocation3 + $0x8] sm:$0xff]
  %v1713 = vadd.f32 %v1709, %v1711
  %v1714 = vadd.f32 %v1710, %v1712
  %1715 = vst.msk [vmem:[#allocation4] sm:$0xff] %vm681, %v1713
  %1716 = vst.msk [vmem:[#allocation4 + $0x8] sm:$0xff] %vm681, %v1714
  %s1717 = scalar_lea.vmem [#allocation2], 128
  %v1718 = vld [vmem:[%s1717] sm:$0xff]
  %v1719 = vld [vmem:[%s1717 + $0x8] sm:$0xff]
  %v1720 = vmul.f32 %v1718, 0.0
  %v1721 = vmul.f32 %v1719, 0.0
  %s1722 = scalar_lea.vmem [#allocation3], 128
  %v1723 = vld [vmem:[%s1722] sm:$0xff]
  %v1724 = vld [vmem:[%s1722 + $0x8] sm:$0xff]
  %v1725 = vadd.f32 %v1720, %v1723
  %v1726 = vadd.f32 %v1721, %v1724
  %s1727 = scalar_lea.vmem [#allocation4], 128
  %1728 = vst.msk [vmem:[%s1727] sm:$0xff] %vm681, %v1725
  %1729 = vst.msk [vmem:[%s1727 + $0x8] sm:$0xff] %vm681, %v1726
  %s1730 = scalar_lea.vmem [#allocation2], 16
  %v1731 = vld [vmem:[%s1730] sm:$0xff]
  %v1732 = vld [vmem:[%s1730 + $0x8] sm:$0xff]
  %v1733 = vmul.f32 %v1731, %v1713
  %v1734 = vmul.f32 %v1732, %v1714
  %s1735 = scalar_lea.vmem [#allocation3], 16
  %v1736 = vld [vmem:[%s1735] sm:$0xff]
  %v1737 = vld [vmem:[%s1735 + $0x8] sm:$0xff]
  %v1738 = vadd.f32 %v1733, %v1736
  %v1739 = vadd.f32 %v1734, %v1737
  %s1740 = scalar_lea.vmem [#allocation4], 16
  %1741 = vst.msk [vmem:[%s1740] sm:$0xff] %vm681, %v1738
  %1742 = vst.msk [vmem:[%s1740 + $0x8] sm:$0xff] %vm681, %v1739
  %s1743 = scalar_lea.vmem [#allocation2], 144
  %v1744 = vld [vmem:[%s1743] sm:$0xff]
  %v1745 = vld [vmem:[%s1743 + $0x8] sm:$0xff]
  %v1746 = vmul.f32 %v1744, %v1725
  %v1747 = vmul.f32 %v1745, %v1726
  %s1748 = scalar_lea.vmem [#allocation3], 144
  %v1749 = vld [vmem:[%s1748] sm:$0xff]
  %v1750 = vld [vmem:[%s1748 + $0x8] sm:$0xff]
  %v1751 = vadd.f32 %v1746, %v1749
  %v1752 = vadd.f32 %v1747, %v1750
  %s1753 = scalar_lea.vmem [#allocation4], 144
  %1754 = vst.msk [vmem:[%s1753] sm:$0xff] %vm681, %v1751
  %1755 = vst.msk [vmem:[%s1753 + $0x8] sm:$0xff] %vm681, %v1752
  %s1756 = scalar_lea.vmem [#allocation2], 32
  %v1757 = vld [vmem:[%s1756] sm:$0xff]
  %v1758 = vld [vmem:[%s1756 + $0x8] sm:$0xff]
  %v1759 = vmul.f32 %v1757, %v1738
  %v1760 = vmul.f32 %v1758, %v1739
  %s1761 = scalar_lea.vmem [#allocation3], 32
  %v1762 = vld [vmem:[%s1761] sm:$0xff]
  %v1763 = vld [vmem:[%s1761 + $0x8] sm:$0xff]
  %v1764 = vadd.f32 %v1759, %v1762
  %v1765 = vadd.f32 %v1760, %v1763
  %s1766 = scalar_lea.vmem [#allocation4], 32
  %1767 = vst.msk [vmem:[%s1766] sm:$0xff] %vm681, %v1764
  %1768 = vst.msk [vmem:[%s1766 + $0x8] sm:$0xff] %vm681, %v1765
  %s1769 = scalar_lea.vmem [#allocation2], 160
  %v1770 = vld [vmem:[%s1769] sm:$0xff]
  %v1771 = vld [vmem:[%s1769 + $0x8] sm:$0xff]
  %v1772 = vmul.f32 %v1770, %v1751
  %v1773 = vmul.f32 %v1771, %v1752
  %s1774 = scalar_lea.vmem [#allocation3], 160
  %v1775 = vld [vmem:[%s1774] sm:$0xff]
  %v1776 = vld [vmem:[%s1774 + $0x8] sm:$0xff]
  %v1777 = vadd.f32 %v1772, %v1775
  %v1778 = vadd.f32 %v1773, %v1776
  %s1779 = scalar_lea.vmem [#allocation4], 160
  %1780 = vst.msk [vmem:[%s1779] sm:$0xff] %vm681, %v1777
  %1781 = vst.msk [vmem:[%s1779 + $0x8] sm:$0xff] %vm681, %v1778
  %s1782 = scalar_lea.vmem [#allocation2], 48
  %v1783 = vld [vmem:[%s1782] sm:$0xff]
  %v1784 = vld [vmem:[%s1782 + $0x8] sm:$0xff]
  %v1785 = vmul.f32 %v1783, %v1764
  %v1786 = vmul.f32 %v1784, %v1765
  %s1787 = scalar_lea.vmem [#allocation3], 48
  %v1788 = vld [vmem:[%s1787] sm:$0xff]
  %v1789 = vld [vmem:[%s1787 + $0x8] sm:$0xff]
  %v1790 = vadd.f32 %v1785, %v1788
  %v1791 = vadd.f32 %v1786, %v1789
  %s1792 = scalar_lea.vmem [#allocation4], 48
  %1793 = vst.msk [vmem:[%s1792] sm:$0xff] %vm681, %v1790
  %1794 = vst.msk [vmem:[%s1792 + $0x8] sm:$0xff] %vm681, %v1791
  %s1795 = scalar_lea.vmem [#allocation2], 176
  %v1796 = vld [vmem:[%s1795] sm:$0xff]
  %v1797 = vld [vmem:[%s1795 + $0x8] sm:$0xff]
  %v1798 = vmul.f32 %v1796, %v1777
  %v1799 = vmul.f32 %v1797, %v1778
  %s1800 = scalar_lea.vmem [#allocation3], 176
  %v1801 = vld [vmem:[%s1800] sm:$0xff]
  %v1802 = vld [vmem:[%s1800 + $0x8] sm:$0xff]
  %v1803 = vadd.f32 %v1798, %v1801
  %v1804 = vadd.f32 %v1799, %v1802
  %s1805 = scalar_lea.vmem [#allocation4], 176
  %1806 = vst.msk [vmem:[%s1805] sm:$0xff] %vm681, %v1803
  %1807 = vst.msk [vmem:[%s1805 + $0x8] sm:$0xff] %vm681, %v1804
  %s1808 = scalar_lea.vmem [#allocation2], 64
  %v1809 = vld [vmem:[%s1808] sm:$0xff]
  %v1810 = vld [vmem:[%s1808 + $0x8] sm:$0xff]
  %v1811 = vmul.f32 %v1809, %v1790
  %v1812 = vmul.f32 %v1810, %v1791
  %s1813 = scalar_lea.vmem [#allocation3], 64
  %v1814 = vld [vmem:[%s1813] sm:$0xff]
  %v1815 = vld [vmem:[%s1813 + $0x8] sm:$0xff]
  %v1816 = vadd.f32 %v1811, %v1814
  %v1817 = vadd.f32 %v1812, %v1815
  %s1818 = scalar_lea.vmem [#allocation4], 64
  %1819 = vst.msk [vmem:[%s1818] sm:$0xff] %vm681, %v1816
  %1820 = vst.msk [vmem:[%s1818 + $0x8] sm:$0xff] %vm681, %v1817
  %s1821 = scalar_lea.vmem [#allocation2], 192
  %v1822 = vld [vmem:[%s1821] sm:$0xff]
  %v1823 = vld [vmem:[%s1821 + $0x8] sm:$0xff]
  %v1824 = vmul.f32 %v1822, %v1803
  %v1825 = vmul.f32 %v1823, %v1804
  %s1826 = scalar_lea.vmem [#allocation3], 192
  %v1827 = vld [vmem:[%s1826] sm:$0xff]
  %v1828 = vld [vmem:[%s1826 + $0x8] sm:$0xff]
  %v1829 = vadd.f32 %v1824, %v1827
  %v1830 = vadd.f32 %v1825, %v1828
  %s1831 = scalar_lea.vmem [#allocation4], 192
  %1832 = vst.msk [vmem:[%s1831] sm:$0xff] %vm681, %v1829
  %1833 = vst.msk [vmem:[%s1831 + $0x8] sm:$0xff] %vm681, %v1830
  %s1834 = scalar_lea.vmem [#allocation2], 80
  %v1835 = vld [vmem:[%s1834] sm:$0xff]
  %v1836 = vld [vmem:[%s1834 + $0x8] sm:$0xff]
  %v1837 = vmul.f32 %v1835, %v1816
  %v1838 = vmul.f32 %v1836, %v1817
  %s1839 = scalar_lea.vmem [#allocation3], 80
  %v1840 = vld [vmem:[%s1839] sm:$0xff]
  %v1841 = vld [vmem:[%s1839 + $0x8] sm:$0xff]
  %v1842 = vadd.f32 %v1837, %v1840
  %v1843 = vadd.f32 %v1838, %v1841
  %s1844 = scalar_lea.vmem [#allocation4], 80
  %1845 = vst.msk [vmem:[%s1844] sm:$0xff] %vm681, %v1842
  %1846 = vst.msk [vmem:[%s1844 + $0x8] sm:$0xff] %vm681, %v1843
  %s1847 = scalar_lea.vmem [#allocation2], 208
  %v1848 = vld [vmem:[%s1847] sm:$0xff]
  %v1849 = vld [vmem:[%s1847 + $0x8] sm:$0xff]
  %v1850 = vmul.f32 %v1848, %v1829
  %v1851 = vmul.f32 %v1849, %v1830
  %s1852 = scalar_lea.vmem [#allocation3], 208
  %v1853 = vld [vmem:[%s1852] sm:$0xff]
  %v1854 = vld [vmem:[%s1852 + $0x8] sm:$0xff]
  %v1855 = vadd.f32 %v1850, %v1853
  %v1856 = vadd.f32 %v1851, %v1854
  %s1857 = scalar_lea.vmem [#allocation4], 208
  %1858 = vst.msk [vmem:[%s1857] sm:$0xff] %vm681, %v1855
  %1859 = vst.msk [vmem:[%s1857 + $0x8] sm:$0xff] %vm681, %v1856
  %s1860 = scalar_lea.vmem [#allocation2], 96
  %v1861 = vld [vmem:[%s1860] sm:$0xff]
  %v1862 = vld [vmem:[%s1860 + $0x8] sm:$0xff]
  %v1863 = vmul.f32 %v1861, %v1842
  %v1864 = vmul.f32 %v1862, %v1843
  %s1865 = scalar_lea.vmem [#allocation3], 96
  %v1866 = vld [vmem:[%s1865] sm:$0xff]
  %v1867 = vld [vmem:[%s1865 + $0x8] sm:$0xff]
  %v1868 = vadd.f32 %v1863, %v1866
  %v1869 = vadd.f32 %v1864, %v1867
  %s1870 = scalar_lea.vmem [#allocation4], 96
  %1871 = vst.msk [vmem:[%s1870] sm:$0xff] %vm681, %v1868
  %1872 = vst.msk [vmem:[%s1870 + $0x8] sm:$0xff] %vm681, %v1869
  %s1873 = scalar_lea.vmem [#allocation2], 224
  %v1874 = vld [vmem:[%s1873] sm:$0xff]
  %v1875 = vld [vmem:[%s1873 + $0x8] sm:$0xff]
  %v1876 = vmul.f32 %v1874, %v1855
  %v1877 = vmul.f32 %v1875, %v1856
  %s1878 = scalar_lea.vmem [#allocation3], 224
  %v1879 = vld [vmem:[%s1878] sm:$0xff]
  %v1880 = vld [vmem:[%s1878 + $0x8] sm:$0xff]
  %v1881 = vadd.f32 %v1876, %v1879
  %v1882 = vadd.f32 %v1877, %v1880
  %s1883 = scalar_lea.vmem [#allocation4], 224
  %1884 = vst.msk [vmem:[%s1883] sm:$0xff] %vm681, %v1881
  %1885 = vst.msk [vmem:[%s1883 + $0x8] sm:$0xff] %vm681, %v1882
  %s1886 = scalar_lea.vmem [#allocation2], 112
  %v1887 = vld [vmem:[%s1886] sm:$0xff]
  %v1888 = vld [vmem:[%s1886 + $0x8] sm:$0xff]
  %v1889 = vmul.f32 %v1887, %v1868
  %v1890 = vmul.f32 %v1888, %v1869
  %s1891 = scalar_lea.vmem [#allocation3], 112
  %v1892 = vld [vmem:[%s1891] sm:$0xff]
  %v1893 = vld [vmem:[%s1891 + $0x8] sm:$0xff]
  %v1894 = vadd.f32 %v1889, %v1892
  %v1895 = vadd.f32 %v1890, %v1893
  %s1896 = scalar_lea.vmem [#allocation4], 112
  %1897 = vst.msk [vmem:[%s1896] sm:$0xff] %vm681, %v1894
  %1898 = vst.msk [vmem:[%s1896 + $0x8] sm:$0xff] %vm681, %v1895
  %s1899 = scalar_lea.vmem [#allocation2], 240
  %v1900 = vld [vmem:[%s1899] sm:$0xff]
  %v1901 = vld [vmem:[%s1899 + $0x8] sm:$0xff]
  %v1902 = vmul.f32 %v1900, %v1881
  %v1903 = vmul.f32 %v1901, %v1882
  %s1904 = scalar_lea.vmem [#allocation3], 240
  %v1905 = vld [vmem:[%s1904] sm:$0xff]
  %v1906 = vld [vmem:[%s1904 + $0x8] sm:$0xff]
  %v1907 = vadd.f32 %v1902, %v1905
  %v1908 = vadd.f32 %v1903, %v1906
  %s1909 = scalar_lea.vmem [#allocation4], 240
  %1910 = vst.msk [vmem:[%s1909] sm:$0xff] %vm681, %v1907
  %1911 = vst.msk [vmem:[%s1909 + $0x8] sm:$0xff] %vm681, %v1908
  %v1912 = vlaneseq
  %v1913 = vshrl.u32 %v1912, 7
  %v1914 = vsub.s32 0, %v1913
  %v1915 = vrot.slane %v957, %v1914
  %1917 = vbcast.lane.b32.xlu0 %v1915, 256
  %v1918 = vpop.permute.xlu0 %1917
  %s1920 = sor.u32 256, 8
  %1921 = vbcast.lane.b32.xlu0 %v1915, %s1920
  %v1922 = vpop.permute.xlu0 %1921
  %v1923 = vlaneseq
  %v1924 = vshrl.u32 %v1923, 7
  %v1925 = vsub.s32 1, %v1924
  %v1926 = vrot.slane %v957, %v1925
  %1928 = vbcast.lane.b32.xlu0 %v1926, 256
  %v1929 = vpop.permute.xlu0 %1928
  %s1931 = sor.u32 256, 8
  %1932 = vbcast.lane.b32.xlu0 %v1926, %s1931
  %v1933 = vpop.permute.xlu0 %1932
  %v1934 = vlaneseq
  %v1935 = vshrl.u32 %v1934, 7
  %v1936 = vsub.s32 2, %v1935
  %v1937 = vrot.slane %v957, %v1936
  %1939 = vbcast.lane.b32.xlu0 %v1937, 256
  %v1940 = vpop.permute.xlu0 %1939
  %s1942 = sor.u32 256, 8
  %1943 = vbcast.lane.b32.xlu0 %v1937, %s1942
  %v1944 = vpop.permute.xlu0 %1943
  %v1945 = vlaneseq
  %v1946 = vshrl.u32 %v1945, 7
  %v1947 = vsub.s32 3, %v1946
  %v1948 = vrot.slane %v957, %v1947
  %1950 = vbcast.lane.b32.xlu0 %v1948, 256
  %v1951 = vpop.permute.xlu0 %1950
  %s1953 = sor.u32 256, 8
  %1954 = vbcast.lane.b32.xlu0 %v1948, %s1953
  %v1955 = vpop.permute.xlu0 %1954
  %v1956 = vlaneseq
  %v1957 = vshrl.u32 %v1956, 7
  %v1958 = vsub.s32 4, %v1957
  %v1959 = vrot.slane %v957, %v1958
  %1961 = vbcast.lane.b32.xlu0 %v1959, 256
  %v1962 = vpop.permute.xlu0 %1961
  %s1964 = sor.u32 256, 8
  %1965 = vbcast.lane.b32.xlu0 %v1959, %s1964
  %v1966 = vpop.permute.xlu0 %1965
  %v1967 = vlaneseq
  %v1968 = vshrl.u32 %v1967, 7
  %v1969 = vsub.s32 5, %v1968
  %v1970 = vrot.slane %v957, %v1969
  %1972 = vbcast.lane.b32.xlu0 %v1970, 256
  %v1973 = vpop.permute.xlu0 %1972
  %s1975 = sor.u32 256, 8
  %1976 = vbcast.lane.b32.xlu0 %v1970, %s1975
  %v1977 = vpop.permute.xlu0 %1976
  %v1978 = vlaneseq
  %v1979 = vshrl.u32 %v1978, 7
  %v1980 = vsub.s32 6, %v1979
  %v1981 = vrot.slane %v957, %v1980
  %1983 = vbcast.lane.b32.xlu0 %v1981, 256
  %v1984 = vpop.permute.xlu0 %1983
  %s1986 = sor.u32 256, 8
  %1987 = vbcast.lane.b32.xlu0 %v1981, %s1986
  %v1988 = vpop.permute.xlu0 %1987
  %v1989 = vlaneseq
  %v1990 = vshrl.u32 %v1989, 7
  %v1991 = vsub.s32 7, %v1990
  %v1992 = vrot.slane %v957, %v1991
  %1994 = vbcast.lane.b32.xlu0 %v1992, 256
  %v1995 = vpop.permute.xlu0 %1994
  %s1997 = sor.u32 256, 8
  %1998 = vbcast.lane.b32.xlu0 %v1992, %s1997
  %v1999 = vpop.permute.xlu0 %1998
  %v2000 = vlaneseq
  %v2001 = vshrl.u32 %v2000, 7
  %v2002 = vsub.s32 0, %v2001
  %v2003 = vrot.slane %v962, %v2002
  %2005 = vbcast.lane.b32.xlu0 %v2003, 256
  %v2006 = vpop.permute.xlu0 %2005
  %s2008 = sor.u32 256, 8
  %2009 = vbcast.lane.b32.xlu0 %v2003, %s2008
  %v2010 = vpop.permute.xlu0 %2009
  %v2011 = vlaneseq
  %v2012 = vshrl.u32 %v2011, 7
  %v2013 = vsub.s32 1, %v2012
  %v2014 = vrot.slane %v962, %v2013
  %2016 = vbcast.lane.b32.xlu0 %v2014, 256
  %v2017 = vpop.permute.xlu0 %2016
  %s2019 = sor.u32 256, 8
  %2020 = vbcast.lane.b32.xlu0 %v2014, %s2019
  %v2021 = vpop.permute.xlu0 %2020
  %v2022 = vlaneseq
  %v2023 = vshrl.u32 %v2022, 7
  %v2024 = vsub.s32 2, %v2023
  %v2025 = vrot.slane %v962, %v2024
  %2027 = vbcast.lane.b32.xlu0 %v2025, 256
  %v2028 = vpop.permute.xlu0 %2027
  %s2030 = sor.u32 256, 8
  %2031 = vbcast.lane.b32.xlu0 %v2025, %s2030
  %v2032 = vpop.permute.xlu0 %2031
  %v2033 = vlaneseq
  %v2034 = vshrl.u32 %v2033, 7
  %v2035 = vsub.s32 3, %v2034
  %v2036 = vrot.slane %v962, %v2035
  %2038 = vbcast.lane.b32.xlu0 %v2036, 256
  %v2039 = vpop.permute.xlu0 %2038
  %s2041 = sor.u32 256, 8
  %2042 = vbcast.lane.b32.xlu0 %v2036, %s2041
  %v2043 = vpop.permute.xlu0 %2042
  %v2044 = vlaneseq
  %v2045 = vshrl.u32 %v2044, 7
  %v2046 = vsub.s32 4, %v2045
  %v2047 = vrot.slane %v962, %v2046
  %2049 = vbcast.lane.b32.xlu0 %v2047, 256
  %v2050 = vpop.permute.xlu0 %2049
  %s2052 = sor.u32 256, 8
  %2053 = vbcast.lane.b32.xlu0 %v2047, %s2052
  %v2054 = vpop.permute.xlu0 %2053
  %v2055 = vlaneseq
  %v2056 = vshrl.u32 %v2055, 7
  %v2057 = vsub.s32 5, %v2056
  %v2058 = vrot.slane %v962, %v2057
  %2060 = vbcast.lane.b32.xlu0 %v2058, 256
  %v2061 = vpop.permute.xlu0 %2060
  %s2063 = sor.u32 256, 8
  %2064 = vbcast.lane.b32.xlu0 %v2058, %s2063
  %v2065 = vpop.permute.xlu0 %2064
  %v2066 = vlaneseq
  %v2067 = vshrl.u32 %v2066, 7
  %v2068 = vsub.s32 6, %v2067
  %v2069 = vrot.slane %v962, %v2068
  %2071 = vbcast.lane.b32.xlu0 %v2069, 256
  %v2072 = vpop.permute.xlu0 %2071
  %s2074 = sor.u32 256, 8
  %2075 = vbcast.lane.b32.xlu0 %v2069, %s2074
  %v2076 = vpop.permute.xlu0 %2075
  %v2077 = vlaneseq
  %v2078 = vshrl.u32 %v2077, 7
  %v2079 = vsub.s32 7, %v2078
  %v2080 = vrot.slane %v962, %v2079
  %2082 = vbcast.lane.b32.xlu0 %v2080, 256
  %v2083 = vpop.permute.xlu0 %2082
  %s2085 = sor.u32 256, 8
  %2086 = vbcast.lane.b32.xlu0 %v2080, %s2085
  %v2087 = vpop.permute.xlu0 %2086
  %v2088 = vld [vmem:[#allocation4] sm:$0xff]
  %v2089 = vld [vmem:[#allocation4 + $0x8] sm:$0xff]
  %v2090 = vld [vmem:[#allocation4 + $0x10] sm:$0xff]
  %v2091 = vld [vmem:[#allocation4 + $0x18] sm:$0xff]
  %v2092 = vld [vmem:[#allocation4 + $0x20] sm:$0xff]
  %v2093 = vld [vmem:[#allocation4 + $0x28] sm:$0xff]
  %v2094 = vld [vmem:[#allocation4 + $0x30] sm:$0xff]
  %v2095 = vld [vmem:[#allocation4 + $0x38] sm:$0xff]
  %v2096 = vld [vmem:[#allocation4 + $0x40] sm:$0xff]
  %v2097 = vld [vmem:[#allocation4 + $0x48] sm:$0xff]
  %v2098 = vld [vmem:[#allocation4 + $0x50] sm:$0xff]
  %v2099 = vld [vmem:[#allocation4 + $0x58] sm:$0xff]
  %v2100 = vld [vmem:[#allocation4 + $0x60] sm:$0xff]
  %v2101 = vld [vmem:[#allocation4 + $0x68] sm:$0xff]
  %v2102 = vld [vmem:[#allocation4 + $0x70] sm:$0xff]
  %v2103 = vld [vmem:[#allocation4 + $0x78] sm:$0xff]
  %v2104 = vld [vmem:[#allocation4 + $0x80] sm:$0xff]
  %v2105 = vld [vmem:[#allocation4 + $0x88] sm:$0xff]
  %v2106 = vld [vmem:[#allocation4 + $0x90] sm:$0xff]
  %v2107 = vld [vmem:[#allocation4 + $0x98] sm:$0xff]
  %v2108 = vld [vmem:[#allocation4 + $0xa0] sm:$0xff]
  %v2109 = vld [vmem:[#allocation4 + $0xa8] sm:$0xff]
  %v2110 = vld [vmem:[#allocation4 + $0xb0] sm:$0xff]
  %v2111 = vld [vmem:[#allocation4 + $0xb8] sm:$0xff]
  %v2112 = vld [vmem:[#allocation4 + $0xc0] sm:$0xff]
  %v2113 = vld [vmem:[#allocation4 + $0xc8] sm:$0xff]
  %v2114 = vld [vmem:[#allocation4 + $0xd0] sm:$0xff]
  %v2115 = vld [vmem:[#allocation4 + $0xd8] sm:$0xff]
  %v2116 = vld [vmem:[#allocation4 + $0xe0] sm:$0xff]
  %v2117 = vld [vmem:[#allocation4 + $0xe8] sm:$0xff]
  %v2118 = vld [vmem:[#allocation4 + $0xf0] sm:$0xff]
  %v2119 = vld [vmem:[#allocation4 + $0xf8] sm:$0xff]
  %v2120 = vmul.f32 %v1918, %v2088
  %v2121 = vmul.f32 %v1922, %v2089
  %v2122 = vmul.f32 %v1929, %v2090
  %v2123 = vmul.f32 %v1933, %v2091
  %v2124 = vmul.f32 %v1940, %v2092
  %v2125 = vmul.f32 %v1944, %v2093
  %v2126 = vmul.f32 %v1951, %v2094
  %v2127 = vmul.f32 %v1955, %v2095
  %v2128 = vmul.f32 %v1962, %v2096
  %v2129 = vmul.f32 %v1966, %v2097
  %v2130 = vmul.f32 %v1973, %v2098
  %v2131 = vmul.f32 %v1977, %v2099
  %v2132 = vmul.f32 %v1984, %v2100
  %v2133 = vmul.f32 %v1988, %v2101
  %v2134 = vmul.f32 %v1995, %v2102
  %v2135 = vmul.f32 %v1999, %v2103
  %v2136 = vmul.f32 %v2006, %v2104
  %v2137 = vmul.f32 %v2010, %v2105
  %v2138 = vmul.f32 %v2017, %v2106
  %v2139 = vmul.f32 %v2021, %v2107
  %v2140 = vmul.f32 %v2028, %v2108
  %v2141 = vmul.f32 %v2032, %v2109
  %v2142 = vmul.f32 %v2039, %v2110
  %v2143 = vmul.f32 %v2043, %v2111
  %v2144 = vmul.f32 %v2050, %v2112
  %v2145 = vmul.f32 %v2054, %v2113
  %v2146 = vmul.f32 %v2061, %v2114
  %v2147 = vmul.f32 %v2065, %v2115
  %v2148 = vmul.f32 %v2072, %v2116
  %v2149 = vmul.f32 %v2076, %v2117
  %v2150 = vmul.f32 %v2083, %v2118
  %v2151 = vmul.f32 %v2087, %v2119
  %v2152 = vsel %vm681, %v2120, 0.0
  %v2153 = vsel %vm681, %v2121, 0.0
  %v2154 = vadd.f32 %v2152, %v2153
  %v2155 = vrot.slane %v2154, 4
  %v2156 = vadd.f32 %v2154, %v2155
  %v2157 = vrot.slane %v2156, 2
  %v2158 = vadd.f32 %v2156, %v2157
  %v2159 = vrot.slane %v2158, 1
  %v2160 = vadd.f32 %v2158, %v2159
  %v2161 = vsel %vm681, %v2122, 0.0
  %v2162 = vsel %vm681, %v2123, 0.0
  %v2163 = vadd.f32 %v2161, %v2162
  %v2164 = vrot.slane %v2163, 4
  %v2165 = vadd.f32 %v2163, %v2164
  %v2166 = vrot.slane %v2165, 2
  %v2167 = vadd.f32 %v2165, %v2166
  %v2168 = vrot.slane %v2167, 1
  %v2169 = vadd.f32 %v2167, %v2168
  %v2170 = vsel %vm681, %v2124, 0.0
  %v2171 = vsel %vm681, %v2125, 0.0
  %v2172 = vadd.f32 %v2170, %v2171
  %v2173 = vrot.slane %v2172, 4
  %v2174 = vadd.f32 %v2172, %v2173
  %v2175 = vrot.slane %v2174, 2
  %v2176 = vadd.f32 %v2174, %v2175
  %v2177 = vrot.slane %v2176, 1
  %v2178 = vadd.f32 %v2176, %v2177
  %v2179 = vsel %vm681, %v2126, 0.0
  %v2180 = vsel %vm681, %v2127, 0.0
  %v2181 = vadd.f32 %v2179, %v2180
  %v2182 = vrot.slane %v2181, 4
  %v2183 = vadd.f32 %v2181, %v2182
  %v2184 = vrot.slane %v2183, 2
  %v2185 = vadd.f32 %v2183, %v2184
  %v2186 = vrot.slane %v2185, 1
  %v2187 = vadd.f32 %v2185, %v2186
  %v2188 = vsel %vm681, %v2128, 0.0
  %v2189 = vsel %vm681, %v2129, 0.0
  %v2190 = vadd.f32 %v2188, %v2189
  %v2191 = vrot.slane %v2190, 4
  %v2192 = vadd.f32 %v2190, %v2191
  %v2193 = vrot.slane %v2192, 2
  %v2194 = vadd.f32 %v2192, %v2193
  %v2195 = vrot.slane %v2194, 1
  %v2196 = vadd.f32 %v2194, %v2195
  %v2197 = vsel %vm681, %v2130, 0.0
  %v2198 = vsel %vm681, %v2131, 0.0
  %v2199 = vadd.f32 %v2197, %v2198
  %v2200 = vrot.slane %v2199, 4
  %v2201 = vadd.f32 %v2199, %v2200
  %v2202 = vrot.slane %v2201, 2
  %v2203 = vadd.f32 %v2201, %v2202
  %v2204 = vrot.slane %v2203, 1
  %v2205 = vadd.f32 %v2203, %v2204
  %v2206 = vsel %vm681, %v2132, 0.0
  %v2207 = vsel %vm681, %v2133, 0.0
  %v2208 = vadd.f32 %v2206, %v2207
  %v2209 = vrot.slane %v2208, 4
  %v2210 = vadd.f32 %v2208, %v2209
  %v2211 = vrot.slane %v2210, 2
  %v2212 = vadd.f32 %v2210, %v2211
  %v2213 = vrot.slane %v2212, 1
  %v2214 = vadd.f32 %v2212, %v2213
  %v2215 = vsel %vm681, %v2134, 0.0
  %v2216 = vsel %vm681, %v2135, 0.0
  %v2217 = vadd.f32 %v2215, %v2216
  %v2218 = vrot.slane %v2217, 4
  %v2219 = vadd.f32 %v2217, %v2218
  %v2220 = vrot.slane %v2219, 2
  %v2221 = vadd.f32 %v2219, %v2220
  %v2222 = vrot.slane %v2221, 1
  %v2223 = vadd.f32 %v2221, %v2222
  %v2224 = vsel %vm681, %v2136, 0.0
  %v2225 = vsel %vm681, %v2137, 0.0
  %v2226 = vadd.f32 %v2224, %v2225
  %v2227 = vrot.slane %v2226, 4
  %v2228 = vadd.f32 %v2226, %v2227
  %v2229 = vrot.slane %v2228, 2
  %v2230 = vadd.f32 %v2228, %v2229
  %v2231 = vrot.slane %v2230, 1
  %v2232 = vadd.f32 %v2230, %v2231
  %v2233 = vsel %vm681, %v2138, 0.0
  %v2234 = vsel %vm681, %v2139, 0.0
  %v2235 = vadd.f32 %v2233, %v2234
  %v2236 = vrot.slane %v2235, 4
  %v2237 = vadd.f32 %v2235, %v2236
  %v2238 = vrot.slane %v2237, 2
  %v2239 = vadd.f32 %v2237, %v2238
  %v2240 = vrot.slane %v2239, 1
  %v2241 = vadd.f32 %v2239, %v2240
  %v2242 = vsel %vm681, %v2140, 0.0
  %v2243 = vsel %vm681, %v2141, 0.0
  %v2244 = vadd.f32 %v2242, %v2243
  %v2245 = vrot.slane %v2244, 4
  %v2246 = vadd.f32 %v2244, %v2245
  %v2247 = vrot.slane %v2246, 2
  %v2248 = vadd.f32 %v2246, %v2247
  %v2249 = vrot.slane %v2248, 1
  %v2250 = vadd.f32 %v2248, %v2249
  %v2251 = vsel %vm681, %v2142, 0.0
  %v2252 = vsel %vm681, %v2143, 0.0
  %v2253 = vadd.f32 %v2251, %v2252
  %v2254 = vrot.slane %v2253, 4
  %v2255 = vadd.f32 %v2253, %v2254
  %v2256 = vrot.slane %v2255, 2
  %v2257 = vadd.f32 %v2255, %v2256
  %v2258 = vrot.slane %v2257, 1
  %v2259 = vadd.f32 %v2257, %v2258
  %v2260 = vsel %vm681, %v2144, 0.0
  %v2261 = vsel %vm681, %v2145, 0.0
  %v2262 = vadd.f32 %v2260, %v2261
  %v2263 = vrot.slane %v2262, 4
  %v2264 = vadd.f32 %v2262, %v2263
  %v2265 = vrot.slane %v2264, 2
  %v2266 = vadd.f32 %v2264, %v2265
  %v2267 = vrot.slane %v2266, 1
  %v2268 = vadd.f32 %v2266, %v2267
  %v2269 = vsel %vm681, %v2146, 0.0
  %v2270 = vsel %vm681, %v2147, 0.0
  %v2271 = vadd.f32 %v2269, %v2270
  %v2272 = vrot.slane %v2271, 4
  %v2273 = vadd.f32 %v2271, %v2272
  %v2274 = vrot.slane %v2273, 2
  %v2275 = vadd.f32 %v2273, %v2274
  %v2276 = vrot.slane %v2275, 1
  %v2277 = vadd.f32 %v2275, %v2276
  %v2278 = vsel %vm681, %v2148, 0.0
  %v2279 = vsel %vm681, %v2149, 0.0
  %v2280 = vadd.f32 %v2278, %v2279
  %v2281 = vrot.slane %v2280, 4
  %v2282 = vadd.f32 %v2280, %v2281
  %v2283 = vrot.slane %v2282, 2
  %v2284 = vadd.f32 %v2282, %v2283
  %v2285 = vrot.slane %v2284, 1
  %v2286 = vadd.f32 %v2284, %v2285
  %v2287 = vsel %vm681, %v2150, 0.0
  %v2288 = vsel %vm681, %v2151, 0.0
  %v2289 = vadd.f32 %v2287, %v2288
  %v2290 = vrot.slane %v2289, 4
  %v2291 = vadd.f32 %v2289, %v2290
  %v2292 = vrot.slane %v2291, 2
  %v2293 = vadd.f32 %v2291, %v2292
  %v2294 = vrot.slane %v2293, 1
  %v2295 = vadd.f32 %v2293, %v2294
  %v2296 = vld [vmem:[%s14] sm:$0x1]
  %v2298 = vlaneseq
  %v2299 = vshrl.u32 %v2298, 7
  %v2300 = vsub.s32 0, %v2299
  %v2301 = vrot.slane %v2296, %v2300
  %v2303 = vmul.f32 %v664, %v2301
  %v2304 = vmul.f32 %v665, %v2301
  %v2307 = vrot.slane %v2303, 1
  %v2308 = vrot.slane %v2303, 2
  %v2309 = vrot.slane %v2303, 3
  %v2310 = vrot.slane %v2303, 4
  %v2311 = vrot.slane %v2303, 5
  %v2312 = vrot.slane %v2303, 6
  %v2313 = vrot.slane %v2303, 7
  %v2314 = vrot.slane %v2304, 1
  %v2315 = vrot.slane %v2304, 2
  %v2316 = vrot.slane %v2304, 3
  %v2317 = vrot.slane %v2304, 4
  %v2318 = vrot.slane %v2304, 5
  %v2319 = vrot.slane %v2304, 6
  %v2320 = vrot.slane %v2304, 7
  %v2337 = vadd.f32 %v2160, %v2303
  %v2338 = vadd.f32 %v2169, %v2307
  %v2339 = vadd.f32 %v2178, %v2308
  %v2340 = vadd.f32 %v2187, %v2309
  %v2341 = vadd.f32 %v2196, %v2310
  %v2342 = vadd.f32 %v2205, %v2311
  %v2343 = vadd.f32 %v2214, %v2312
  %v2344 = vadd.f32 %v2223, %v2313
  %v2345 = vadd.f32 %v2232, %v2304
  %v2346 = vadd.f32 %v2241, %v2314
  %v2347 = vadd.f32 %v2250, %v2315
  %v2348 = vadd.f32 %v2259, %v2316
  %v2349 = vadd.f32 %v2268, %v2317
  %v2350 = vadd.f32 %v2277, %v2318
  %v2351 = vadd.f32 %v2286, %v2319
  %v2352 = vadd.f32 %v2295, %v2320
  %v2353 = vxor.u32 %v266, 2147483648
  %v2354 = vxor.u32 %v271, 2147483648
  %v2355 = vmul.f32 %v2353, 1.442695
  %v2356 = vpow.pop %v2355
  %v2357 = vmul.f32 %v2354, 1.442695
  %v2358 = vpow.pop %v2357
  %v2359 = vadd.f32 %v2356, 1.0
  %v2360 = vadd.f32 %v2358, 1.0
  %v2361 = vrcp.pop %v2359
  %v2362 = vmul.f32 1.0, %v2361
  %v2363 = vrcp.pop %v2360
  %v2364 = vmul.f32 1.0, %v2363
  %v2365 = vmul.f32 %v266, %v2362
  %v2366 = vmul.f32 %v271, %v2364
  %v2369 = vrot.slane %v2365, 1
  %v2370 = vrot.slane %v2365, 2
  %v2371 = vrot.slane %v2365, 3
  %v2372 = vrot.slane %v2365, 4
  %v2373 = vrot.slane %v2365, 5
  %v2374 = vrot.slane %v2365, 6
  %v2375 = vrot.slane %v2365, 7
  %v2376 = vrot.slane %v2366, 1
  %v2377 = vrot.slane %v2366, 2
  %v2378 = vrot.slane %v2366, 3
  %v2379 = vrot.slane %v2366, 4
  %v2380 = vrot.slane %v2366, 5
  %v2381 = vrot.slane %v2366, 6
  %v2382 = vrot.slane %v2366, 7
  %v2399 = vmul.f32 %v2337, %v2365
  %v2400 = vmul.f32 %v2338, %v2369
  %v2401 = vmul.f32 %v2339, %v2370
  %v2402 = vmul.f32 %v2340, %v2371
  %v2403 = vmul.f32 %v2341, %v2372
  %v2404 = vmul.f32 %v2342, %v2373
  %v2405 = vmul.f32 %v2343, %v2374
  %v2406 = vmul.f32 %v2344, %v2375
  %v2407 = vmul.f32 %v2345, %v2366
  %v2408 = vmul.f32 %v2346, %v2376
  %v2409 = vmul.f32 %v2347, %v2377
  %v2410 = vmul.f32 %v2348, %v2378
  %v2411 = vmul.f32 %v2349, %v2379
  %v2412 = vmul.f32 %v2350, %v2380
  %v2413 = vmul.f32 %v2351, %v2381
  %v2414 = vmul.f32 %v2352, %v2382
  %v2415 = vld [vmem:[%s12] sm:$0xff]
  %v2416 = vld [vmem:[%s12 + $0x8] sm:$0xff]
  %v2417 = vld [vmem:[%s12 + $0x10] sm:$0xff]
  %v2418 = vld [vmem:[%s12 + $0x18] sm:$0xff]
  %v2419 = vld [vmem:[%s12 + $0x20] sm:$0xff]
  %v2420 = vld [vmem:[%s12 + $0x28] sm:$0xff]
  %v2421 = vld [vmem:[%s12 + $0x30] sm:$0xff]
  %v2422 = vld [vmem:[%s12 + $0x38] sm:$0xff]
  %v2439 = vrot.slane %v2400, 7
  %vm2440 = vcmask 1041409
  %v2441 = vsel %vm2440, %v2439, %v2399
  %v2442 = vrot.slane %v2401, 6
  %vm2443 = vcmask 1042434
  %v2444 = vsel %vm2443, %v2442, %v2441
  %v2445 = vrot.slane %v2402, 5
  %vm2446 = vcmask 1043459
  %v2447 = vsel %vm2446, %v2445, %v2444
  %v2448 = vrot.slane %v2403, 4
  %vm2449 = vcmask 1044484
  %v2450 = vsel %vm2449, %v2448, %v2447
  %v2451 = vrot.slane %v2404, 3
  %vm2452 = vcmask 1045509
  %v2453 = vsel %vm2452, %v2451, %v2450
  %v2454 = vrot.slane %v2405, 2
  %vm2455 = vcmask 1046534
  %v2456 = vsel %vm2455, %v2454, %v2453
  %v2457 = vrot.slane %v2406, 1
  %vm2458 = vcmask 1047559
  %v2459 = vsel %vm2458, %v2457, %v2456
  %v2460 = vrot.slane %v2408, 7
  %v2461 = vsel %vm2440, %v2460, %v2407
  %v2462 = vrot.slane %v2409, 6
  %v2463 = vsel %vm2443, %v2462, %v2461
  %v2464 = vrot.slane %v2410, 5
  %v2465 = vsel %vm2446, %v2464, %v2463
  %v2466 = vrot.slane %v2411, 4
  %v2467 = vsel %vm2449, %v2466, %v2465
  %v2468 = vrot.slane %v2412, 3
  %v2469 = vsel %vm2452, %v2468, %v2467
  %v2470 = vrot.slane %v2413, 2
  %v2471 = vsel %vm2455, %v2470, %v2469
  %v2472 = vrot.slane %v2414, 1
  %v2473 = vsel %vm2458, %v2472, %v2471
  %v2474 = vsel %vm681, %v2459, 0
  %v2476 = vsel %vm681, %v2473, 0
  %2478 = vmatprep.subr.mxu0 0.0
  %2479 = vmatpush1.msra.mxu0 %v2415
  %2480 = vmatprep.subr.mxu0 0.0
  %2481 = vmatpush1.msra.mxu0 %v2416
  %2482 = vmatprep.subr.mxu0 0.0
  %2483 = vmatpush1.msra.mxu0 %v2417
  %2484 = vmatprep.subr.mxu0 0.0
  %2485 = vmatpush1.msra.mxu0 %v2418
  %2486 = vmatprep.subr.mxu0 0.0
  %2487 = vmatpush1.msra.mxu0 %v2419
  %2488 = vmatprep.subr.mxu0 0.0
  %2489 = vmatpush1.msra.mxu0 %v2420
  %2490 = vmatprep.subr.mxu0 0.0
  %2491 = vmatpush1.msra.mxu0 %v2421
  %2492 = vmatprep.subr.mxu0 0.0
  %2493 = vmatpush1.msra.mxu0 %v2422
  %2494 = vmatprep.subr.mxu0 0.0
  %2495 = vmatpush1.msra.mxu0 0.0
  %2496 = vmatprep.subr.mxu0 0.0
  %2497 = vmatpush1.msra.mxu0 0.0
  %2498 = vmatprep.subr.mxu0 0.0
  %2499 = vmatpush1.msra.mxu0 0.0
  %2500 = vmatprep.subr.mxu0 0.0
  %2501 = vmatpush1.msra.mxu0 0.0
  %2502 = vmatprep.subr.mxu0 0.0
  %2503 = vmatpush1.msra.mxu0 0.0
  %2504 = vmatprep.subr.mxu0 0.0
  %2505 = vmatpush1.msra.mxu0 0.0
  %2506 = vmatprep.subr.mxu0 0.0
  %2507 = vmatpush1.msra.mxu0 0.0
  %2508 = vmatprep.subr.mxu0 0.0
  %2509 = vmatpush1.msra.mxu0 0.0
  %2510 = vmatprep.subr.mxu0 0.0
  %2511 = vmatpush1.msra.mxu0 0.0
  %2512 = vmatprep.subr.mxu0 0.0
  %2513 = vmatpush1.msra.mxu0 0.0
  %2514 = vmatprep.subr.mxu0 0.0
  %2515 = vmatpush1.msra.mxu0 0.0
  %2516 = vmatprep.subr.mxu0 0.0
  %2517 = vmatpush1.msra.mxu0 0.0
  %2518 = vmatprep.subr.mxu0 0.0
  %2519 = vmatpush1.msra.mxu0 0.0
  %2520 = vmatprep.subr.mxu0 0.0
  %2521 = vmatpush1.msra.mxu0 0.0
  %2522 = vmatprep.subr.mxu0 0.0
  %2523 = vmatpush1.msra.mxu0 0.0
  %2524 = vmatprep.subr.mxu0 0.0
  %2525 = vmatpush1.msra.mxu0 0.0
  %2526 = vmatprep.subr.mxu0 0.0
  %2527 = vmatpush1.msra.mxu0 0.0
  %2528 = vmatprep.subr.mxu0 0.0
  %2529 = vmatpush1.msra.mxu0 0.0
  %2530 = vmatprep.subr.mxu0 0.0
  %2531 = vmatpush1.msra.mxu0 0.0
  %2532 = vmatprep.subr.mxu0 0.0
  %2533 = vmatpush1.msra.mxu0 0.0
  %2534 = vmatprep.subr.mxu0 0.0
  %2535 = vmatpush1.msra.mxu0 0.0
  %2536 = vmatprep.subr.mxu0 0.0
  %2537 = vmatpush1.msra.mxu0 0.0
  %2538 = vmatprep.subr.mxu0 0.0
  %2539 = vmatpush1.msra.mxu0 0.0
  %2540 = vmatprep.subr.mxu0 0.0
  %2541 = vmatpush1.msra.mxu0 0.0
  %2542 = vmatprep.mubr.f32.mxu0 0.0
  %2543 = vmatmul.mubr.f32.gmra.mrb[0].mxu0 %v2474
  %v2544 = vpop.f32.mrb[0].mxu0
  %v2545 = vadd.f32 0.0, %v2544
  %v2546 = vpop.f32.mrb[0].mxu0
  %2547 = vmatprep.mubr.f32.mxu0 0.0
  %2548 = vmatmul.mubr.f32.gmra.mrb[0].mxu0 %v2476
  %v2549 = vpop.f32.mrb[0].mxu0
  %v2550 = vadd.f32 0.0, %v2549
  %v2551 = vpop.f32.mrb[0].mxu0
  %2552 = vdwg.mxu0
  %v2553 = vadd.f32 %v62, %v2545
  %v2554 = vadd.f32 %v63, %v2550
  %s2555 = scalar_lea.vmem %s2, 1
  %v2556 = vld [vmem:[%s2555] sm:$0x1]
  %s2557 = scalar_lea.vmem %s3, 1
  %v2558 = vld [vmem:[%s2557] sm:$0x1]
  %v2559 = vsel %vm66, %v2553, 0.0
  %2560 = vadd.xlane.f32.xlu0 %v2559
  %v2561 = vpop.xlane.xlu0 %2560
  %v2562 = vsel %vm66, %v2554, 0.0
  %2563 = vadd.xlane.f32.xlu0 %v2562
  %v2564 = vpop.xlane.xlu0 %2563
  %v2565 = vmul.f32 %v2561, %v73
  %v2566 = vmul.f32 %v2564, %v73
  %v2567 = vsub.f32 %v2553, %v2565
  %v2568 = vsub.f32 %v2554, %v2566
  %v2569 = vmul.f32 %v2567, %v2567
  %v2570 = vmul.f32 %v2568, %v2568
  %v2571 = vsel %vm66, %v2569, 0.0
  %2572 = vadd.xlane.f32.xlu0 %v2571
  %v2573 = vpop.xlane.xlu0 %2572
  %v2574 = vsel %vm66, %v2570, 0.0
  %2575 = vadd.xlane.f32.xlu0 %v2574
  %v2576 = vpop.xlane.xlu0 %2575
  %v2577 = vmul.f32 %v2573, %v73
  %v2578 = vmul.f32 %v2576, %v73
  %v2579 = vadd.f32 %v2577, 1e-05
  %v2580 = vadd.f32 %v2578, 1e-05
  %v2581 = vrsqrt.pop %v2579
  %v2582 = vrsqrt.pop %v2580
  %v2583 = vmul.f32 %v2567, %v2581
  %v2584 = vmul.f32 %v2568, %v2582
  %v2586 = vlaneseq
  %v2587 = vshrl.u32 %v2586, 7
  %v2588 = vsub.s32 0, %v2587
  %v2589 = vrot.slane %v2556, %v2588
  %v2591 = vmul.f32 %v2583, %v2589
  %v2592 = vmul.f32 %v2584, %v2589
  %v2594 = vlaneseq
  %v2595 = vshrl.u32 %v2594, 7
  %v2596 = vsub.s32 0, %v2595
  %v2597 = vrot.slane %v2558, %v2596
  %v2599 = vadd.f32 %v2591, %v2597
  %v2600 = vadd.f32 %v2592, %v2597
  %s2601 = scalar_lea.vmem %s4, 32
  %v2602 = vld [vmem:[%s2601] sm:$0xff]
  %v2603 = vld [vmem:[%s2601 + $0x8] sm:$0xff]
  %v2604 = vld [vmem:[%s2601 + $0x10] sm:$0xff]
  %v2605 = vld [vmem:[%s2601 + $0x18] sm:$0xff]
  %v2607 = vsel %vm66, %v2599, 0
  %v2610 = vsel %vm66, %v2600, 0
  %2612 = vmatprep.subr.mxu0 0.0
  %2613 = vmatpush1.msra.mxu0 %v2602
  %2614 = vmatprep.subr.mxu0 0.0
  %2615 = vmatpush1.msra.mxu0 %v2603
  %2616 = vmatprep.subr.mxu0 0.0
  %2617 = vmatpush1.msra.mxu0 %v2604
  %2618 = vmatprep.subr.mxu0 0.0
  %2619 = vmatpush1.msra.mxu0 %v2605
  %2620 = vmatprep.subr.mxu0 0.0
  %2621 = vmatpush1.msra.mxu0 0.0
  %2622 = vmatprep.subr.mxu0 0.0
  %2623 = vmatpush1.msra.mxu0 0.0
  %2624 = vmatprep.subr.mxu0 0.0
  %2625 = vmatpush1.msra.mxu0 0.0
  %2626 = vmatprep.subr.mxu0 0.0
  %2627 = vmatpush1.msra.mxu0 0.0
  %2628 = vmatprep.subr.mxu0 0.0
  %2629 = vmatpush1.msra.mxu0 0.0
  %2630 = vmatprep.subr.mxu0 0.0
  %2631 = vmatpush1.msra.mxu0 0.0
  %2632 = vmatprep.subr.mxu0 0.0
  %2633 = vmatpush1.msra.mxu0 0.0
  %2634 = vmatprep.subr.mxu0 0.0
  %2635 = vmatpush1.msra.mxu0 0.0
  %2636 = vmatprep.subr.mxu0 0.0
  %2637 = vmatpush1.msra.mxu0 0.0
  %2638 = vmatprep.subr.mxu0 0.0
  %2639 = vmatpush1.msra.mxu0 0.0
  %2640 = vmatprep.subr.mxu0 0.0
  %2641 = vmatpush1.msra.mxu0 0.0
  %2642 = vmatprep.subr.mxu0 0.0
  %2643 = vmatpush1.msra.mxu0 0.0
  %2644 = vmatprep.subr.mxu0 0.0
  %2645 = vmatpush1.msra.mxu0 0.0
  %2646 = vmatprep.subr.mxu0 0.0
  %2647 = vmatpush1.msra.mxu0 0.0
  %2648 = vmatprep.subr.mxu0 0.0
  %2649 = vmatpush1.msra.mxu0 0.0
  %2650 = vmatprep.subr.mxu0 0.0
  %2651 = vmatpush1.msra.mxu0 0.0
  %2652 = vmatprep.subr.mxu0 0.0
  %2653 = vmatpush1.msra.mxu0 0.0
  %2654 = vmatprep.subr.mxu0 0.0
  %2655 = vmatpush1.msra.mxu0 0.0
  %2656 = vmatprep.subr.mxu0 0.0
  %2657 = vmatpush1.msra.mxu0 0.0
  %2658 = vmatprep.subr.mxu0 0.0
  %2659 = vmatpush1.msra.mxu0 0.0
  %2660 = vmatprep.subr.mxu0 0.0
  %2661 = vmatpush1.msra.mxu0 0.0
  %2662 = vmatprep.subr.mxu0 0.0
  %2663 = vmatpush1.msra.mxu0 0.0
  %2664 = vmatprep.subr.mxu0 0.0
  %2665 = vmatpush1.msra.mxu0 0.0
  %2666 = vmatprep.subr.mxu0 0.0
  %2667 = vmatpush1.msra.mxu0 0.0
  %2668 = vmatprep.subr.mxu0 0.0
  %2669 = vmatpush1.msra.mxu0 0.0
  %2670 = vmatprep.subr.mxu0 0.0
  %2671 = vmatpush1.msra.mxu0 0.0
  %2672 = vmatprep.subr.mxu0 0.0
  %2673 = vmatpush1.msra.mxu0 0.0
  %2674 = vmatprep.subr.mxu0 0.0
  %2675 = vmatpush1.msra.mxu0 0.0
  %2676 = vmatprep.mubr.f32.mxu0 0.0
  %2677 = vmatmul.mubr.f32.gmra.mrb[0].mxu0 %v2607
  %v2678 = vpop.f32.mrb[0].mxu0
  %v2679 = vadd.f32 0.0, %v2678
  %v2680 = vpop.f32.mrb[0].mxu0
  %2681 = vmatprep.mubr.f32.mxu0 0.0
  %2682 = vmatmul.mubr.f32.gmra.mrb[0].mxu0 %v2610
  %v2683 = vpop.f32.mrb[0].mxu0
  %v2684 = vadd.f32 0.0, %v2683
  %v2685 = vpop.f32.mrb[0].mxu0
  %2686 = vdwg.mxu0
  %s2687 = scalar_lea.vmem %s5, 32
  %v2688 = vld [vmem:[%s2687] sm:$0xff]
  %v2689 = vld [vmem:[%s2687 + $0x8] sm:$0xff]
  %v2690 = vld [vmem:[%s2687 + $0x10] sm:$0xff]
  %v2691 = vld [vmem:[%s2687 + $0x18] sm:$0xff]
  %2692 = vmatprep.subr.mxu0 0.0
  %2693 = vmatpush1.msra.mxu0 %v2688
  %2694 = vmatprep.subr.mxu0 0.0
  %2695 = vmatpush1.msra.mxu0 %v2689
  %2696 = vmatprep.subr.mxu0 0.0
  %2697 = vmatpush1.msra.mxu0 %v2690
  %2698 = vmatprep.subr.mxu0 0.0
  %2699 = vmatpush1.msra.mxu0 %v2691
  %2700 = vmatprep.subr.mxu0 0.0
  %2701 = vmatpush1.msra.mxu0 0.0
  %2702 = vmatprep.subr.mxu0 0.0
  %2703 = vmatpush1.msra.mxu0 0.0
  %2704 = vmatprep.subr.mxu0 0.0
  %2705 = vmatpush1.msra.mxu0 0.0
  %2706 = vmatprep.subr.mxu0 0.0
  %2707 = vmatpush1.msra.mxu0 0.0
  %2708 = vmatprep.subr.mxu0 0.0
  %2709 = vmatpush1.msra.mxu0 0.0
  %2710 = vmatprep.subr.mxu0 0.0
  %2711 = vmatpush1.msra.mxu0 0.0
  %2712 = vmatprep.subr.mxu0 0.0
  %2713 = vmatpush1.msra.mxu0 0.0
  %2714 = vmatprep.subr.mxu0 0.0
  %2715 = vmatpush1.msra.mxu0 0.0
  %2716 = vmatprep.subr.mxu0 0.0
  %2717 = vmatpush1.msra.mxu0 0.0
  %2718 = vmatprep.subr.mxu0 0.0
  %2719 = vmatpush1.msra.mxu0 0.0
  %2720 = vmatprep.subr.mxu0 0.0
  %2721 = vmatpush1.msra.mxu0 0.0
  %2722 = vmatprep.subr.mxu0 0.0
  %2723 = vmatpush1.msra.mxu0 0.0
  %2724 = vmatprep.subr.mxu0 0.0
  %2725 = vmatpush1.msra.mxu0 0.0
  %2726 = vmatprep.subr.mxu0 0.0
  %2727 = vmatpush1.msra.mxu0 0.0
  %2728 = vmatprep.subr.mxu0 0.0
  %2729 = vmatpush1.msra.mxu0 0.0
  %2730 = vmatprep.subr.mxu0 0.0
  %2731 = vmatpush1.msra.mxu0 0.0
  %2732 = vmatprep.subr.mxu0 0.0
  %2733 = vmatpush1.msra.mxu0 0.0
  %2734 = vmatprep.subr.mxu0 0.0
  %2735 = vmatpush1.msra.mxu0 0.0
  %2736 = vmatprep.subr.mxu0 0.0
  %2737 = vmatpush1.msra.mxu0 0.0
  %2738 = vmatprep.subr.mxu0 0.0
  %2739 = vmatpush1.msra.mxu0 0.0
  %2740 = vmatprep.subr.mxu0 0.0
  %2741 = vmatpush1.msra.mxu0 0.0
  %2742 = vmatprep.subr.mxu0 0.0
  %2743 = vmatpush1.msra.mxu0 0.0
  %2744 = vmatprep.subr.mxu0 0.0
  %2745 = vmatpush1.msra.mxu0 0.0
  %2746 = vmatprep.subr.mxu0 0.0
  %2747 = vmatpush1.msra.mxu0 0.0
  %2748 = vmatprep.subr.mxu0 0.0
  %2749 = vmatpush1.msra.mxu0 0.0
  %2750 = vmatprep.subr.mxu0 0.0
  %2751 = vmatpush1.msra.mxu0 0.0
  %2752 = vmatprep.subr.mxu0 0.0
  %2753 = vmatpush1.msra.mxu0 0.0
  %2754 = vmatprep.subr.mxu0 0.0
  %2755 = vmatpush1.msra.mxu0 0.0
  %2756 = vmatprep.mubr.f32.mxu0 0.0
  %2757 = vmatmul.mubr.f32.gmra.mrb[0].mxu0 %v2607
  %v2758 = vpop.f32.mrb[0].mxu0
  %v2759 = vadd.f32 0.0, %v2758
  %v2760 = vpop.f32.mrb[0].mxu0
  %2761 = vmatprep.mubr.f32.mxu0 0.0
  %2762 = vmatmul.mubr.f32.gmra.mrb[0].mxu0 %v2610
  %v2763 = vpop.f32.mrb[0].mxu0
  %v2764 = vadd.f32 0.0, %v2763
  %v2765 = vpop.f32.mrb[0].mxu0
  %2766 = vdwg.mxu0
  %s2767 = scalar_lea.vmem %s6, 4
  %v2768 = vld [vmem:[%s2767] sm:$0xf]
  %v2769 = vld [vmem:[%s1] sm:$0xff]
  %v2770 = vld [vmem:[%s1 + $0x8] sm:$0xff]
  %v2772 = vsel %vm277, %v2769, 0
  %v2775 = vsel %vm277, %v2770, 0
  %2777 = vmatprep.subr.mxu0 0.0
  %2778 = vmatpush1.msra.mxu0 %v2679
  %2779 = vmatprep.subr.mxu0 0.0
  %2780 = vmatpush1.msra.mxu0 %v2684
  %2781 = vmatprep.subr.mxu0 0.0
  %2782 = vmatpush1.msra.mxu0 0.0
  %2783 = vmatprep.subr.mxu0 0.0
  %2784 = vmatpush1.msra.mxu0 0.0
  %2785 = vmatprep.subr.mxu0 0.0
  %2786 = vmatpush1.msra.mxu0 0.0
  %2787 = vmatprep.subr.mxu0 0.0
  %2788 = vmatpush1.msra.mxu0 0.0
  %2789 = vmatprep.subr.mxu0 0.0
  %2790 = vmatpush1.msra.mxu0 0.0
  %2791 = vmatprep.subr.mxu0 0.0
  %2792 = vmatpush1.msra.mxu0 0.0
  %2793 = vmatprep.subr.mxu0 0.0
  %2794 = vmatpush1.msra.mxu0 0.0
  %2795 = vmatprep.subr.mxu0 0.0
  %2796 = vmatpush1.msra.mxu0 0.0
  %2797 = vmatprep.subr.mxu0 0.0
  %2798 = vmatpush1.msra.mxu0 0.0
  %2799 = vmatprep.subr.mxu0 0.0
  %2800 = vmatpush1.msra.mxu0 0.0
  %2801 = vmatprep.subr.mxu0 0.0
  %2802 = vmatpush1.msra.mxu0 0.0
  %2803 = vmatprep.subr.mxu0 0.0
  %2804 = vmatpush1.msra.mxu0 0.0
  %2805 = vmatprep.subr.mxu0 0.0
  %2806 = vmatpush1.msra.mxu0 0.0
  %2807 = vmatprep.subr.mxu0 0.0
  %2808 = vmatpush1.msra.mxu0 0.0
  %2809 = vmatprep.subr.mxu0 0.0
  %2810 = vmatpush1.msra.mxu0 0.0
  %2811 = vmatprep.subr.mxu0 0.0
  %2812 = vmatpush1.msra.mxu0 0.0
  %2813 = vmatprep.subr.mxu0 0.0
  %2814 = vmatpush1.msra.mxu0 0.0
  %2815 = vmatprep.subr.mxu0 0.0
  %2816 = vmatpush1.msra.mxu0 0.0
  %2817 = vmatprep.subr.mxu0 0.0
  %2818 = vmatpush1.msra.mxu0 0.0
  %2819 = vmatprep.subr.mxu0 0.0
  %2820 = vmatpush1.msra.mxu0 0.0
  %2821 = vmatprep.subr.mxu0 0.0
  %2822 = vmatpush1.msra.mxu0 0.0
  %2823 = vmatprep.subr.mxu0 0.0
  %2824 = vmatpush1.msra.mxu0 0.0
  %2825 = vmatprep.subr.mxu0 0.0
  %2826 = vmatpush1.msra.mxu0 0.0
  %2827 = vmatprep.subr.mxu0 0.0
  %2828 = vmatpush1.msra.mxu0 0.0
  %2829 = vmatprep.subr.mxu0 0.0
  %2830 = vmatpush1.msra.mxu0 0.0
  %2831 = vmatprep.subr.mxu0 0.0
  %2832 = vmatpush1.msra.mxu0 0.0
  %2833 = vmatprep.subr.mxu0 0.0
  %2834 = vmatpush1.msra.mxu0 0.0
  %2835 = vmatprep.subr.mxu0 0.0
  %2836 = vmatpush1.msra.mxu0 0.0
  %2837 = vmatprep.subr.mxu0 0.0
  %2838 = vmatpush1.msra.mxu0 0.0
  %2839 = vmatprep.subr.mxu0 0.0
  %2840 = vmatpush1.msra.mxu0 0.0
  %2841 = vmatprep.mubr.f32.mxu0 0.0
  %2842 = vmatmul.mubr.f32.gmra.mrb[0].mxu0 %v2772
  %v2843 = vpop.f32.mrb[0].mxu0
  %v2844 = vadd.f32 0.0, %v2843
  %v2845 = vpop.f32.mrb[0].mxu0
  %2846 = vmatprep.mubr.f32.mxu0 0.0
  %2847 = vmatmul.mubr.f32.gmra.mrb[0].mxu0 %v2775
  %v2848 = vpop.f32.mrb[0].mxu0
  %v2849 = vadd.f32 0.0, %v2848
  %v2850 = vpop.f32.mrb[0].mxu0
  %2851 = vdwg.mxu0
  %v2852 = vlaneseq
  %v2853 = vshrl.u32 %v2852, 7
  %v2854 = vsub.s32 0, %v2853
  %v2855 = vrot.slane %v2768, %v2854
  %v2856 = vmul.f32 %v2844, %v2855
  %v2857 = vmul.f32 %v2849, %v2855
  %v2858 = vadd.f32 %v2856, 0.0
  %v2859 = vadd.f32 %v2857, 0.0
  %v2860 = vld [vmem:[%s367] sm:$0xff]
  %v2861 = vld [vmem:[%s367 + $0x8] sm:$0xff]
  %v2863 = vsel %vm277, %v2860, 0
  %v2866 = vsel %vm277, %v2861, 0
  %2868 = vmatprep.subr.mxu0 0.0
  %2869 = vmatpush1.msra.mxu0 %v2679
  %2870 = vmatprep.subr.mxu0 0.0
  %2871 = vmatpush1.msra.mxu0 %v2684
  %2872 = vmatprep.subr.mxu0 0.0
  %2873 = vmatpush1.msra.mxu0 0.0
  %2874 = vmatprep.subr.mxu0 0.0
  %2875 = vmatpush1.msra.mxu0 0.0
  %2876 = vmatprep.subr.mxu0 0.0
  %2877 = vmatpush1.msra.mxu0 0.0
  %2878 = vmatprep.subr.mxu0 0.0
  %2879 = vmatpush1.msra.mxu0 0.0
  %2880 = vmatprep.subr.mxu0 0.0
  %2881 = vmatpush1.msra.mxu0 0.0
  %2882 = vmatprep.subr.mxu0 0.0
  %2883 = vmatpush1.msra.mxu0 0.0
  %2884 = vmatprep.subr.mxu0 0.0
  %2885 = vmatpush1.msra.mxu0 0.0
  %2886 = vmatprep.subr.mxu0 0.0
  %2887 = vmatpush1.msra.mxu0 0.0
  %2888 = vmatprep.subr.mxu0 0.0
  %2889 = vmatpush1.msra.mxu0 0.0
  %2890 = vmatprep.subr.mxu0 0.0
  %2891 = vmatpush1.msra.mxu0 0.0
  %2892 = vmatprep.subr.mxu0 0.0
  %2893 = vmatpush1.msra.mxu0 0.0
  %2894 = vmatprep.subr.mxu0 0.0
  %2895 = vmatpush1.msra.mxu0 0.0
  %2896 = vmatprep.subr.mxu0 0.0
  %2897 = vmatpush1.msra.mxu0 0.0
  %2898 = vmatprep.subr.mxu0 0.0
  %2899 = vmatpush1.msra.mxu0 0.0
  %2900 = vmatprep.subr.mxu0 0.0
  %2901 = vmatpush1.msra.mxu0 0.0
  %2902 = vmatprep.subr.mxu0 0.0
  %2903 = vmatpush1.msra.mxu0 0.0
  %2904 = vmatprep.subr.mxu0 0.0
  %2905 = vmatpush1.msra.mxu0 0.0
  %2906 = vmatprep.subr.mxu0 0.0
  %2907 = vmatpush1.msra.mxu0 0.0
  %2908 = vmatprep.subr.mxu0 0.0
  %2909 = vmatpush1.msra.mxu0 0.0
  %2910 = vmatprep.subr.mxu0 0.0
  %2911 = vmatpush1.msra.mxu0 0.0
  %2912 = vmatprep.subr.mxu0 0.0
  %2913 = vmatpush1.msra.mxu0 0.0
  %2914 = vmatprep.subr.mxu0 0.0
  %2915 = vmatpush1.msra.mxu0 0.0
  %2916 = vmatprep.subr.mxu0 0.0
  %2917 = vmatpush1.msra.mxu0 0.0
  %2918 = vmatprep.subr.mxu0 0.0
  %2919 = vmatpush1.msra.mxu0 0.0
  %2920 = vmatprep.subr.mxu0 0.0
  %2921 = vmatpush1.msra.mxu0 0.0
  %2922 = vmatprep.subr.mxu0 0.0
  %2923 = vmatpush1.msra.mxu0 0.0
  %2924 = vmatprep.subr.mxu0 0.0
  %2925 = vmatpush1.msra.mxu0 0.0
  %2926 = vmatprep.subr.mxu0 0.0
  %2927 = vmatpush1.msra.mxu0 0.0
  %2928 = vmatprep.subr.mxu0 0.0
  %2929 = vmatpush1.msra.mxu0 0.0
  %2930 = vmatprep.subr.mxu0 0.0
  %2931 = vmatpush1.msra.mxu0 0.0
  %2932 = vmatprep.mubr.f32.mxu0 0.0
  %2933 = vmatmul.mubr.f32.gmra.mrb[0].mxu0 %v2863
  %v2934 = vpop.f32.mrb[0].mxu0
  %v2935 = vadd.f32 0.0, %v2934
  %v2936 = vpop.f32.mrb[0].mxu0
  %2937 = vmatprep.mubr.f32.mxu0 0.0
  %2938 = vmatmul.mubr.f32.gmra.mrb[0].mxu0 %v2866
  %v2939 = vpop.f32.mrb[0].mxu0
  %v2940 = vadd.f32 0.0, %v2939
  %v2941 = vpop.f32.mrb[0].mxu0
  %2942 = vdwg.mxu0
  %v2943 = vlaneseq
  %v2944 = vshrl.u32 %v2943, 7
  %v2945 = vsub.s32 1, %v2944
  %v2946 = vrot.slane %v2768, %v2945
  %v2947 = vmul.f32 %v2935, %v2946
  %v2948 = vmul.f32 %v2940, %v2946
  %v2949 = vadd.f32 %v2858, %v2947
  %v2950 = vadd.f32 %v2859, %v2948
  %v2951 = vld [vmem:[%s459] sm:$0xff]
  %v2952 = vld [vmem:[%s459 + $0x8] sm:$0xff]
  %v2954 = vsel %vm277, %v2951, 0
  %v2957 = vsel %vm277, %v2952, 0
  %2959 = vmatprep.subr.mxu0 0.0
  %2960 = vmatpush1.msra.mxu0 %v2679
  %2961 = vmatprep.subr.mxu0 0.0
  %2962 = vmatpush1.msra.mxu0 %v2684
  %2963 = vmatprep.subr.mxu0 0.0
  %2964 = vmatpush1.msra.mxu0 0.0
  %2965 = vmatprep.subr.mxu0 0.0
  %2966 = vmatpush1.msra.mxu0 0.0
  %2967 = vmatprep.subr.mxu0 0.0
  %2968 = vmatpush1.msra.mxu0 0.0
  %2969 = vmatprep.subr.mxu0 0.0
  %2970 = vmatpush1.msra.mxu0 0.0
  %2971 = vmatprep.subr.mxu0 0.0
  %2972 = vmatpush1.msra.mxu0 0.0
  %2973 = vmatprep.subr.mxu0 0.0
  %2974 = vmatpush1.msra.mxu0 0.0
  %2975 = vmatprep.subr.mxu0 0.0
  %2976 = vmatpush1.msra.mxu0 0.0
  %2977 = vmatprep.subr.mxu0 0.0
  %2978 = vmatpush1.msra.mxu0 0.0
  %2979 = vmatprep.subr.mxu0 0.0
  %2980 = vmatpush1.msra.mxu0 0.0
  %2981 = vmatprep.subr.mxu0 0.0
  %2982 = vmatpush1.msra.mxu0 0.0
  %2983 = vmatprep.subr.mxu0 0.0
  %2984 = vmatpush1.msra.mxu0 0.0
  %2985 = vmatprep.subr.mxu0 0.0
  %2986 = vmatpush1.msra.mxu0 0.0
  %2987 = vmatprep.subr.mxu0 0.0
  %2988 = vmatpush1.msra.mxu0 0.0
  %2989 = vmatprep.subr.mxu0 0.0
  %2990 = vmatpush1.msra.mxu0 0.0
  %2991 = vmatprep.subr.mxu0 0.0
  %2992 = vmatpush1.msra.mxu0 0.0
  %2993 = vmatprep.subr.mxu0 0.0
  %2994 = vmatpush1.msra.mxu0 0.0
  %2995 = vmatprep.subr.mxu0 0.0
  %2996 = vmatpush1.msra.mxu0 0.0
  %2997 = vmatprep.subr.mxu0 0.0
  %2998 = vmatpush1.msra.mxu0 0.0
  %2999 = vmatprep.subr.mxu0 0.0
  %3000 = vmatpush1.msra.mxu0 0.0
  %3001 = vmatprep.subr.mxu0 0.0
  %3002 = vmatpush1.msra.mxu0 0.0
  %3003 = vmatprep.subr.mxu0 0.0
  %3004 = vmatpush1.msra.mxu0 0.0
  %3005 = vmatprep.subr.mxu0 0.0
  %3006 = vmatpush1.msra.mxu0 0.0
  %3007 = vmatprep.subr.mxu0 0.0
  %3008 = vmatpush1.msra.mxu0 0.0
  %3009 = vmatprep.subr.mxu0 0.0
  %3010 = vmatpush1.msra.mxu0 0.0
  %3011 = vmatprep.subr.mxu0 0.0
  %3012 = vmatpush1.msra.mxu0 0.0
  %3013 = vmatprep.subr.mxu0 0.0
  %3014 = vmatpush1.msra.mxu0 0.0
  %3015 = vmatprep.subr.mxu0 0.0
  %3016 = vmatpush1.msra.mxu0 0.0
  %3017 = vmatprep.subr.mxu0 0.0
  %3018 = vmatpush1.msra.mxu0 0.0
  %3019 = vmatprep.subr.mxu0 0.0
  %3020 = vmatpush1.msra.mxu0 0.0
  %3021 = vmatprep.subr.mxu0 0.0
  %3022 = vmatpush1.msra.mxu0 0.0
  %3023 = vmatprep.mubr.f32.mxu0 0.0
  %3024 = vmatmul.mubr.f32.gmra.mrb[0].mxu0 %v2954
  %v3025 = vpop.f32.mrb[0].mxu0
  %v3026 = vadd.f32 0.0, %v3025
  %v3027 = vpop.f32.mrb[0].mxu0
  %3028 = vmatprep.mubr.f32.mxu0 0.0
  %3029 = vmatmul.mubr.f32.gmra.mrb[0].mxu0 %v2957
  %v3030 = vpop.f32.mrb[0].mxu0
  %v3031 = vadd.f32 0.0, %v3030
  %v3032 = vpop.f32.mrb[0].mxu0
  %3033 = vdwg.mxu0
  %v3034 = vlaneseq
  %v3035 = vshrl.u32 %v3034, 7
  %v3036 = vsub.s32 2, %v3035
  %v3037 = vrot.slane %v2768, %v3036
  %v3038 = vmul.f32 %v3026, %v3037
  %v3039 = vmul.f32 %v3031, %v3037
  %v3040 = vadd.f32 %v2949, %v3038
  %v3041 = vadd.f32 %v2950, %v3039
  %v3042 = vld [vmem:[%s551] sm:$0xff]
  %v3043 = vld [vmem:[%s551 + $0x8] sm:$0xff]
  %v3045 = vsel %vm277, %v3042, 0
  %v3048 = vsel %vm277, %v3043, 0
  %3050 = vmatprep.subr.mxu0 0.0
  %3051 = vmatpush1.msra.mxu0 %v2679
  %3052 = vmatprep.subr.mxu0 0.0
  %3053 = vmatpush1.msra.mxu0 %v2684
  %3054 = vmatprep.subr.mxu0 0.0
  %3055 = vmatpush1.msra.mxu0 0.0
  %3056 = vmatprep.subr.mxu0 0.0
  %3057 = vmatpush1.msra.mxu0 0.0
  %3058 = vmatprep.subr.mxu0 0.0
  %3059 = vmatpush1.msra.mxu0 0.0
  %3060 = vmatprep.subr.mxu0 0.0
  %3061 = vmatpush1.msra.mxu0 0.0
  %3062 = vmatprep.subr.mxu0 0.0
  %3063 = vmatpush1.msra.mxu0 0.0
  %3064 = vmatprep.subr.mxu0 0.0
  %3065 = vmatpush1.msra.mxu0 0.0
  %3066 = vmatprep.subr.mxu0 0.0
  %3067 = vmatpush1.msra.mxu0 0.0
  %3068 = vmatprep.subr.mxu0 0.0
  %3069 = vmatpush1.msra.mxu0 0.0
  %3070 = vmatprep.subr.mxu0 0.0
  %3071 = vmatpush1.msra.mxu0 0.0
  %3072 = vmatprep.subr.mxu0 0.0
  %3073 = vmatpush1.msra.mxu0 0.0
  %3074 = vmatprep.subr.mxu0 0.0
  %3075 = vmatpush1.msra.mxu0 0.0
  %3076 = vmatprep.subr.mxu0 0.0
  %3077 = vmatpush1.msra.mxu0 0.0
  %3078 = vmatprep.subr.mxu0 0.0
  %3079 = vmatpush1.msra.mxu0 0.0
  %3080 = vmatprep.subr.mxu0 0.0
  %3081 = vmatpush1.msra.mxu0 0.0
  %3082 = vmatprep.subr.mxu0 0.0
  %3083 = vmatpush1.msra.mxu0 0.0
  %3084 = vmatprep.subr.mxu0 0.0
  %3085 = vmatpush1.msra.mxu0 0.0
  %3086 = vmatprep.subr.mxu0 0.0
  %3087 = vmatpush1.msra.mxu0 0.0
  %3088 = vmatprep.subr.mxu0 0.0
  %3089 = vmatpush1.msra.mxu0 0.0
  %3090 = vmatprep.subr.mxu0 0.0
  %3091 = vmatpush1.msra.mxu0 0.0
  %3092 = vmatprep.subr.mxu0 0.0
  %3093 = vmatpush1.msra.mxu0 0.0
  %3094 = vmatprep.subr.mxu0 0.0
  %3095 = vmatpush1.msra.mxu0 0.0
  %3096 = vmatprep.subr.mxu0 0.0
  %3097 = vmatpush1.msra.mxu0 0.0
  %3098 = vmatprep.subr.mxu0 0.0
  %3099 = vmatpush1.msra.mxu0 0.0
  %3100 = vmatprep.subr.mxu0 0.0
  %3101 = vmatpush1.msra.mxu0 0.0
  %3102 = vmatprep.subr.mxu0 0.0
  %3103 = vmatpush1.msra.mxu0 0.0
  %3104 = vmatprep.subr.mxu0 0.0
  %3105 = vmatpush1.msra.mxu0 0.0
  %3106 = vmatprep.subr.mxu0 0.0
  %3107 = vmatpush1.msra.mxu0 0.0
  %3108 = vmatprep.subr.mxu0 0.0
  %3109 = vmatpush1.msra.mxu0 0.0
  %3110 = vmatprep.subr.mxu0 0.0
  %3111 = vmatpush1.msra.mxu0 0.0
  %3112 = vmatprep.subr.mxu0 0.0
  %3113 = vmatpush1.msra.mxu0 0.0
  %3114 = vmatprep.mubr.f32.mxu0 0.0
  %3115 = vmatmul.mubr.f32.gmra.mrb[0].mxu0 %v3045
  %v3116 = vpop.f32.mrb[0].mxu0
  %v3117 = vadd.f32 0.0, %v3116
  %v3118 = vpop.f32.mrb[0].mxu0
  %3119 = vmatprep.mubr.f32.mxu0 0.0
  %3120 = vmatmul.mubr.f32.gmra.mrb[0].mxu0 %v3048
  %v3121 = vpop.f32.mrb[0].mxu0
  %v3122 = vadd.f32 0.0, %v3121
  %v3123 = vpop.f32.mrb[0].mxu0
  %3124 = vdwg.mxu0
  %v3125 = vlaneseq
  %v3126 = vshrl.u32 %v3125, 7
  %v3127 = vsub.s32 3, %v3126
  %v3128 = vrot.slane %v2768, %v3127
  %v3129 = vmul.f32 %v3117, %v3128
  %v3130 = vmul.f32 %v3122, %v3128
  %v3131 = vadd.f32 %v3040, %v3129
  %v3132 = vadd.f32 %v3041, %v3130
  %s3133 = scalar_lea.vmem %s7, 1
  %v3134 = vld [vmem:[%s3133] sm:$0x1]
  %v3136 = vlaneseq
  %v3137 = vshrl.u32 %v3136, 7
  %v3138 = vsub.s32 0, %v3137
  %v3139 = vrot.slane %v3134, %v3138
  %v3141 = vadd.f32 %v3131, %v3139
  %v3142 = vadd.f32 %v3132, %v3139
  %v3143 = vxor.u32 %v3141, 2147483648
  %v3144 = vxor.u32 %v3142, 2147483648
  %v3145 = vmul.f32 %v3143, 1.442695
  %v3146 = vpow.pop %v3145
  %v3147 = vmul.f32 %v3144, 1.442695
  %v3148 = vpow.pop %v3147
  %v3149 = vadd.f32 %v3146, 1.0
  %v3150 = vadd.f32 %v3148, 1.0
  %v3151 = vrcp.pop %v3149
  %v3152 = vmul.f32 1.0, %v3151
  %v3153 = vrcp.pop %v3150
  %v3154 = vmul.f32 1.0, %v3153
  %v3155 = vmul.f32 %v3141, %v3152
  %v3156 = vmul.f32 %v3142, %v3154
  %s3157 = scalar_lea.vmem %s8, 64
  %v3158 = vld [vmem:[%s3157] sm:$0xff]
  %v3159 = vld [vmem:[%s3157 + $0x8] sm:$0xff]
  %v3160 = vld [vmem:[%s3157 + $0x10] sm:$0xff]
  %v3161 = vld [vmem:[%s3157 + $0x18] sm:$0xff]
  %v3162 = vld [vmem:[%s3157 + $0x20] sm:$0xff]
  %v3163 = vld [vmem:[%s3157 + $0x28] sm:$0xff]
  %v3164 = vld [vmem:[%s3157 + $0x30] sm:$0xff]
  %v3165 = vld [vmem:[%s3157 + $0x38] sm:$0xff]
  %s3166 = scalar_lea.vmem %s9, 1
  %v3167 = vld [vmem:[%s3166] sm:$0x1]
  %v3169 = vlaneseq
  %v3170 = vshrl.u32 %v3169, 7
  %v3171 = vsub.s32 0, %v3170
  %v3172 = vrot.slane %v3167, %v3171
  %v3175 = vsel %vm681, %v3155, 0
  %v3178 = vsel %vm681, %v3156, 0
  %3180 = vmatprep.subr.mxu0 0.0
  %3181 = vmatpush1.msra.mxu0 %v3158
  %3182 = vmatprep.subr.mxu0 0.0
  %3183 = vmatpush1.msra.mxu0 %v3159
  %3184 = vmatprep.subr.mxu0 0.0
  %3185 = vmatpush1.msra.mxu0 %v3160
  %3186 = vmatprep.subr.mxu0 0.0
  %3187 = vmatpush1.msra.mxu0 %v3161
  %3188 = vmatprep.subr.mxu0 0.0
  %3189 = vmatpush1.msra.mxu0 %v3162
  %3190 = vmatprep.subr.mxu0 0.0
  %3191 = vmatpush1.msra.mxu0 %v3163
  %3192 = vmatprep.subr.mxu0 0.0
  %3193 = vmatpush1.msra.mxu0 %v3164
  %3194 = vmatprep.subr.mxu0 0.0
  %3195 = vmatpush1.msra.mxu0 %v3165
  %3196 = vmatprep.subr.mxu0 0.0
  %3197 = vmatpush1.msra.mxu0 0.0
  %3198 = vmatprep.subr.mxu0 0.0
  %3199 = vmatpush1.msra.mxu0 0.0
  %3200 = vmatprep.subr.mxu0 0.0
  %3201 = vmatpush1.msra.mxu0 0.0
  %3202 = vmatprep.subr.mxu0 0.0
  %3203 = vmatpush1.msra.mxu0 0.0
  %3204 = vmatprep.subr.mxu0 0.0
  %3205 = vmatpush1.msra.mxu0 0.0
  %3206 = vmatprep.subr.mxu0 0.0
  %3207 = vmatpush1.msra.mxu0 0.0
  %3208 = vmatprep.subr.mxu0 0.0
  %3209 = vmatpush1.msra.mxu0 0.0
  %3210 = vmatprep.subr.mxu0 0.0
  %3211 = vmatpush1.msra.mxu0 0.0
  %3212 = vmatprep.subr.mxu0 0.0
  %3213 = vmatpush1.msra.mxu0 0.0
  %3214 = vmatprep.subr.mxu0 0.0
  %3215 = vmatpush1.msra.mxu0 0.0
  %3216 = vmatprep.subr.mxu0 0.0
  %3217 = vmatpush1.msra.mxu0 0.0
  %3218 = vmatprep.subr.mxu0 0.0
  %3219 = vmatpush1.msra.mxu0 0.0
  %3220 = vmatprep.subr.mxu0 0.0
  %3221 = vmatpush1.msra.mxu0 0.0
  %3222 = vmatprep.subr.mxu0 0.0
  %3223 = vmatpush1.msra.mxu0 0.0
  %3224 = vmatprep.subr.mxu0 0.0
  %3225 = vmatpush1.msra.mxu0 0.0
  %3226 = vmatprep.subr.mxu0 0.0
  %3227 = vmatpush1.msra.mxu0 0.0
  %3228 = vmatprep.subr.mxu0 0.0
  %3229 = vmatpush1.msra.mxu0 0.0
  %3230 = vmatprep.subr.mxu0 0.0
  %3231 = vmatpush1.msra.mxu0 0.0
  %3232 = vmatprep.subr.mxu0 0.0
  %3233 = vmatpush1.msra.mxu0 0.0
  %3234 = vmatprep.subr.mxu0 0.0
  %3235 = vmatpush1.msra.mxu0 0.0
  %3236 = vmatprep.subr.mxu0 0.0
  %3237 = vmatpush1.msra.mxu0 0.0
  %3238 = vmatprep.subr.mxu0 0.0
  %3239 = vmatpush1.msra.mxu0 0.0
  %3240 = vmatprep.subr.mxu0 0.0
  %3241 = vmatpush1.msra.mxu0 0.0
  %3242 = vmatprep.subr.mxu0 0.0
  %3243 = vmatpush1.msra.mxu0 0.0
  %3244 = vmatprep.mubr.f32.mxu0 0.0
  %3245 = vmatmul.mubr.f32.gmra.mrb[0].mxu0 %v3175
  %v3246 = vpop.f32.mrb[0].mxu0
  %v3247 = vadd.f32 %v3172, %v3246
  %v3248 = vpop.f32.mrb[0].mxu0
  %3249 = vmatprep.mubr.f32.mxu0 0.0
  %3250 = vmatmul.mubr.f32.gmra.mrb[0].mxu0 %v3178
  %v3251 = vpop.f32.mrb[0].mxu0
  %v3252 = vadd.f32 %v3172, %v3251
  %v3253 = vpop.f32.mrb[0].mxu0
  %3254 = vdwg.mxu0
  %v3255 = vmax.f32 %v3247, 0.0
  %v3256 = vmax.f32 %v3252, 0.0
  %vm3257 = vcmp.ne.f32.partialorder %v3247, %v3247
  %vm3258 = vcmp.ne.f32.partialorder %v3252, %v3252
  %v3259 = vadd.f32 %v3247, 0.0
  %v3260 = vadd.f32 %v3252, 0.0
  %v3261 = vand.u32 2147483647, %v3247
  %v3262 = vand.u32 2147483647, %v3252
  %v3263 = vsub.f32 0.0, %v3261
  %v3264 = vsub.f32 0.0, %v3262
  %v3265 = vmul.f32 %v3263, 1.442695
  %v3266 = vpow.pop %v3265
  %v3267 = vmul.f32 %v3264, 1.442695
  %v3268 = vpow.pop %v3267
  %v3269 = vadd.f32 %v3266, 1.0
  %v3270 = vlog2.pop %v3269
  %v3271 = vmul.f32 %v3270, 0.6931472
  %v3272 = vmul.f32 -0.5, %v3266
  %v3273 = vadd.f32 %v3272, 1.0
  %v3274 = vmul.f32 %v3273, %v3266
  %v3275 = vand.u32 2147483647, %v3266
  %vm3276 = vcmp.lt.f32.partialorder %v3275, 0.0004427343
  %v3277 = vsel %vm3276, %v3274, %v3271
  %v3278 = vadd.f32 %v3268, 1.0
  %v3279 = vlog2.pop %v3278
  %v3280 = vmul.f32 %v3279, 0.6931472
  %v3281 = vmul.f32 -0.5, %v3268
  %v3282 = vadd.f32 %v3281, 1.0
  %v3283 = vmul.f32 %v3282, %v3268
  %v3284 = vand.u32 2147483647, %v3268
  %vm3285 = vcmp.lt.f32.partialorder %v3284, 0.0004427343
  %v3286 = vsel %vm3285, %v3283, %v3280
  %v3287 = vadd.f32 %v3255, %v3277
  %v3288 = vadd.f32 %v3256, %v3286
  %v3289 = vsel %vm3257, %v3259, %v3287
  %v3290 = vsel %vm3258, %v3260, %v3288
  %s3291 = scalar_lea.vmem %s10, 64
  %v3292 = vld [vmem:[%s3291] sm:$0xff]
  %v3293 = vld [vmem:[%s3291 + $0x8] sm:$0xff]
  %v3294 = vld [vmem:[%s3291 + $0x10] sm:$0xff]
  %v3295 = vld [vmem:[%s3291 + $0x18] sm:$0xff]
  %v3296 = vld [vmem:[%s3291 + $0x20] sm:$0xff]
  %v3297 = vld [vmem:[%s3291 + $0x28] sm:$0xff]
  %v3298 = vld [vmem:[%s3291 + $0x30] sm:$0xff]
  %v3299 = vld [vmem:[%s3291 + $0x38] sm:$0xff]
  %3300 = vmatprep.subr.mxu0 0.0
  %3301 = vmatpush1.msra.mxu0 %v3292
  %3302 = vmatprep.subr.mxu0 0.0
  %3303 = vmatpush1.msra.mxu0 %v3293
  %3304 = vmatprep.subr.mxu0 0.0
  %3305 = vmatpush1.msra.mxu0 %v3294
  %3306 = vmatprep.subr.mxu0 0.0
  %3307 = vmatpush1.msra.mxu0 %v3295
  %3308 = vmatprep.subr.mxu0 0.0
  %3309 = vmatpush1.msra.mxu0 %v3296
  %3310 = vmatprep.subr.mxu0 0.0
  %3311 = vmatpush1.msra.mxu0 %v3297
  %3312 = vmatprep.subr.mxu0 0.0
  %3313 = vmatpush1.msra.mxu0 %v3298
  %3314 = vmatprep.subr.mxu0 0.0
  %3315 = vmatpush1.msra.mxu0 %v3299
  %3316 = vmatprep.subr.mxu0 0.0
  %3317 = vmatpush1.msra.mxu0 0.0
  %3318 = vmatprep.subr.mxu0 0.0
  %3319 = vmatpush1.msra.mxu0 0.0
  %3320 = vmatprep.subr.mxu0 0.0
  %3321 = vmatpush1.msra.mxu0 0.0
  %3322 = vmatprep.subr.mxu0 0.0
  %3323 = vmatpush1.msra.mxu0 0.0
  %3324 = vmatprep.subr.mxu0 0.0
  %3325 = vmatpush1.msra.mxu0 0.0
  %3326 = vmatprep.subr.mxu0 0.0
  %3327 = vmatpush1.msra.mxu0 0.0
  %3328 = vmatprep.subr.mxu0 0.0
  %3329 = vmatpush1.msra.mxu0 0.0
  %3330 = vmatprep.subr.mxu0 0.0
  %3331 = vmatpush1.msra.mxu0 0.0
  %3332 = vmatprep.subr.mxu0 0.0
  %3333 = vmatpush1.msra.mxu0 0.0
  %3334 = vmatprep.subr.mxu0 0.0
  %3335 = vmatpush1.msra.mxu0 0.0
  %3336 = vmatprep.subr.mxu0 0.0
  %3337 = vmatpush1.msra.mxu0 0.0
  %3338 = vmatprep.subr.mxu0 0.0
  %3339 = vmatpush1.msra.mxu0 0.0
  %3340 = vmatprep.subr.mxu0 0.0
  %3341 = vmatpush1.msra.mxu0 0.0
  %3342 = vmatprep.subr.mxu0 0.0
  %3343 = vmatpush1.msra.mxu0 0.0
  %3344 = vmatprep.subr.mxu0 0.0
  %3345 = vmatpush1.msra.mxu0 0.0
  %3346 = vmatprep.subr.mxu0 0.0
  %3347 = vmatpush1.msra.mxu0 0.0
  %3348 = vmatprep.subr.mxu0 0.0
  %3349 = vmatpush1.msra.mxu0 0.0
  %3350 = vmatprep.subr.mxu0 0.0
  %3351 = vmatpush1.msra.mxu0 0.0
  %3352 = vmatprep.subr.mxu0 0.0
  %3353 = vmatpush1.msra.mxu0 0.0
  %3354 = vmatprep.subr.mxu0 0.0
  %3355 = vmatpush1.msra.mxu0 0.0
  %3356 = vmatprep.subr.mxu0 0.0
  %3357 = vmatpush1.msra.mxu0 0.0
  %3358 = vmatprep.subr.mxu0 0.0
  %3359 = vmatpush1.msra.mxu0 0.0
  %3360 = vmatprep.subr.mxu0 0.0
  %3361 = vmatpush1.msra.mxu0 0.0
  %3362 = vmatprep.subr.mxu0 0.0
  %3363 = vmatpush1.msra.mxu0 0.0
  %3364 = vmatprep.mubr.f32.mxu0 0.0
  %3365 = vmatmul.mubr.f32.gmra.mrb[0].mxu0 %v3175
  %v3366 = vpop.f32.mrb[0].mxu0
  %v3367 = vadd.f32 0.0, %v3366
  %v3368 = vpop.f32.mrb[0].mxu0
  %3369 = vmatprep.mubr.f32.mxu0 0.0
  %3370 = vmatmul.mubr.f32.gmra.mrb[0].mxu0 %v3178
  %v3371 = vpop.f32.mrb[0].mxu0
  %v3372 = vadd.f32 0.0, %v3371
  %v3373 = vpop.f32.mrb[0].mxu0
  %3374 = vdwg.mxu0
  %s3375 = scalar_lea.vmem %s11, 64
  %v3376 = vld [vmem:[%s3375] sm:$0xff]
  %v3377 = vld [vmem:[%s3375 + $0x8] sm:$0xff]
  %v3378 = vld [vmem:[%s3375 + $0x10] sm:$0xff]
  %v3379 = vld [vmem:[%s3375 + $0x18] sm:$0xff]
  %v3380 = vld [vmem:[%s3375 + $0x20] sm:$0xff]
  %v3381 = vld [vmem:[%s3375 + $0x28] sm:$0xff]
  %v3382 = vld [vmem:[%s3375 + $0x30] sm:$0xff]
  %v3383 = vld [vmem:[%s3375 + $0x38] sm:$0xff]
  %3384 = vmatprep.subr.mxu0 0.0
  %3385 = vmatpush1.msra.mxu0 %v3376
  %3386 = vmatprep.subr.mxu0 0.0
  %3387 = vmatpush1.msra.mxu0 %v3377
  %3388 = vmatprep.subr.mxu0 0.0
  %3389 = vmatpush1.msra.mxu0 %v3378
  %3390 = vmatprep.subr.mxu0 0.0
  %3391 = vmatpush1.msra.mxu0 %v3379
  %3392 = vmatprep.subr.mxu0 0.0
  %3393 = vmatpush1.msra.mxu0 %v3380
  %3394 = vmatprep.subr.mxu0 0.0
  %3395 = vmatpush1.msra.mxu0 %v3381
  %3396 = vmatprep.subr.mxu0 0.0
  %3397 = vmatpush1.msra.mxu0 %v3382
  %3398 = vmatprep.subr.mxu0 0.0
  %3399 = vmatpush1.msra.mxu0 %v3383
  %3400 = vmatprep.subr.mxu0 0.0
  %3401 = vmatpush1.msra.mxu0 0.0
  %3402 = vmatprep.subr.mxu0 0.0
  %3403 = vmatpush1.msra.mxu0 0.0
  %3404 = vmatprep.subr.mxu0 0.0
  %3405 = vmatpush1.msra.mxu0 0.0
  %3406 = vmatprep.subr.mxu0 0.0
  %3407 = vmatpush1.msra.mxu0 0.0
  %3408 = vmatprep.subr.mxu0 0.0
  %3409 = vmatpush1.msra.mxu0 0.0
  %3410 = vmatprep.subr.mxu0 0.0
  %3411 = vmatpush1.msra.mxu0 0.0
  %3412 = vmatprep.subr.mxu0 0.0
  %3413 = vmatpush1.msra.mxu0 0.0
  %3414 = vmatprep.subr.mxu0 0.0
  %3415 = vmatpush1.msra.mxu0 0.0
  %3416 = vmatprep.subr.mxu0 0.0
  %3417 = vmatpush1.msra.mxu0 0.0
  %3418 = vmatprep.subr.mxu0 0.0
  %3419 = vmatpush1.msra.mxu0 0.0
  %3420 = vmatprep.subr.mxu0 0.0
  %3421 = vmatpush1.msra.mxu0 0.0
  %3422 = vmatprep.subr.mxu0 0.0
  %3423 = vmatpush1.msra.mxu0 0.0
  %3424 = vmatprep.subr.mxu0 0.0
  %3425 = vmatpush1.msra.mxu0 0.0
  %3426 = vmatprep.subr.mxu0 0.0
  %3427 = vmatpush1.msra.mxu0 0.0
  %3428 = vmatprep.subr.mxu0 0.0
  %3429 = vmatpush1.msra.mxu0 0.0
  %3430 = vmatprep.subr.mxu0 0.0
  %3431 = vmatpush1.msra.mxu0 0.0
  %3432 = vmatprep.subr.mxu0 0.0
  %3433 = vmatpush1.msra.mxu0 0.0
  %3434 = vmatprep.subr.mxu0 0.0
  %3435 = vmatpush1.msra.mxu0 0.0
  %3436 = vmatprep.subr.mxu0 0.0
  %3437 = vmatpush1.msra.mxu0 0.0
  %3438 = vmatprep.subr.mxu0 0.0
  %3439 = vmatpush1.msra.mxu0 0.0
  %3440 = vmatprep.subr.mxu0 0.0
  %3441 = vmatpush1.msra.mxu0 0.0
  %3442 = vmatprep.subr.mxu0 0.0
  %3443 = vmatpush1.msra.mxu0 0.0
  %3444 = vmatprep.subr.mxu0 0.0
  %3445 = vmatpush1.msra.mxu0 0.0
  %3446 = vmatprep.subr.mxu0 0.0
  %3447 = vmatpush1.msra.mxu0 0.0
  %3448 = vmatprep.mubr.f32.mxu0 0.0
  %3449 = vmatmul.mubr.f32.gmra.mrb[0].mxu0 %v3175
  %v3450 = vpop.f32.mrb[0].mxu0
  %v3451 = vadd.f32 0.0, %v3450
  %v3452 = vpop.f32.mrb[0].mxu0
  %3453 = vmatprep.mubr.f32.mxu0 0.0
  %3454 = vmatmul.mubr.f32.gmra.mrb[0].mxu0 %v3178
  %v3455 = vpop.f32.mrb[0].mxu0
  %v3456 = vadd.f32 0.0, %v3455
  %v3457 = vpop.f32.mrb[0].mxu0
  %3458 = vdwg.mxu0
  %s3459 = scalar_lea.vmem %s13, 16
  %v3460 = vld [vmem:[%s3459] sm:$0xff]
  %v3461 = vld [vmem:[%s3459 + $0x8] sm:$0xff]
  %v3464 = vcombine.high %v3289, %v3289
  %v3466 = vunpack.c.l.s4 1966171168
  %v3467 = vunpack.c.0.s8 %v3466
  %v3468 = vlaneseq
  %v3469 = vshrl.u32 %v3468, 7
  %v3470 = vsub.s32 %v3467, %v3469
  %v3471 = vrot.slane %v3289, %v3470
  %v3473 = vunpack.c.l.s4 1966171168
  %v3474 = vunpack.c.0.s8 %v3473
  %v3475 = vlaneseq
  %v3476 = vshrl.u32 %v3475, 7
  %v3477 = vsub.s32 %v3474, %v3476
  %v3478 = vrot.slane %v3464, %v3477
  %v3479 = vcombine.high %v3471, %v3471
  %v3480 = vcombine.high %v3478, %v3478
  %v3482 = vunpack.c.l.s4 1966171168
  %v3483 = vunpack.c.0.s8 %v3482
  %v3484 = vlaneseq
  %v3485 = vshrl.u32 %v3484, 7
  %v3486 = vsub.s32 %v3483, %v3485
  %v3487 = vrot.slane %v3471, %v3486
  %v3489 = vunpack.c.l.s4 1966171168
  %v3490 = vunpack.c.0.s8 %v3489
  %v3491 = vlaneseq
  %v3492 = vshrl.u32 %v3491, 7
  %v3493 = vsub.s32 %v3490, %v3492
  %v3494 = vrot.slane %v3478, %v3493
  %v3496 = vunpack.c.l.s4 1966171168
  %v3497 = vunpack.c.0.s8 %v3496
  %v3498 = vlaneseq
  %v3499 = vshrl.u32 %v3498, 7
  %v3500 = vsub.s32 %v3497, %v3499
  %v3501 = vrot.slane %v3479, %v3500
  %v3503 = vunpack.c.l.s4 1966171168
  %v3504 = vunpack.c.0.s8 %v3503
  %v3505 = vlaneseq
  %v3506 = vshrl.u32 %v3505, 7
  %v3507 = vsub.s32 %v3504, %v3506
  %v3508 = vrot.slane %v3480, %v3507
  %v3509 = vcombine.high %v3487, %v3487
  %v3510 = vcombine.high %v3494, %v3494
  %v3511 = vcombine.high %v3501, %v3501
  %v3512 = vcombine.high %v3508, %v3508
  %v3513 = vcombine.high %v3290, %v3290
  %v3515 = vunpack.c.l.s4 1966171168
  %v3516 = vunpack.c.0.s8 %v3515
  %v3517 = vlaneseq
  %v3518 = vshrl.u32 %v3517, 7
  %v3519 = vsub.s32 %v3516, %v3518
  %v3520 = vrot.slane %v3290, %v3519
  %v3522 = vunpack.c.l.s4 1966171168
  %v3523 = vunpack.c.0.s8 %v3522
  %v3524 = vlaneseq
  %v3525 = vshrl.u32 %v3524, 7
  %v3526 = vsub.s32 %v3523, %v3525
  %v3527 = vrot.slane %v3513, %v3526
  %v3528 = vcombine.high %v3520, %v3520
  %v3529 = vcombine.high %v3527, %v3527
  %v3531 = vunpack.c.l.s4 1966171168
  %v3532 = vunpack.c.0.s8 %v3531
  %v3533 = vlaneseq
  %v3534 = vshrl.u32 %v3533, 7
  %v3535 = vsub.s32 %v3532, %v3534
  %v3536 = vrot.slane %v3520, %v3535
  %v3538 = vunpack.c.l.s4 1966171168
  %v3539 = vunpack.c.0.s8 %v3538
  %v3540 = vlaneseq
  %v3541 = vshrl.u32 %v3540, 7
  %v3542 = vsub.s32 %v3539, %v3541
  %v3543 = vrot.slane %v3527, %v3542
  %v3545 = vunpack.c.l.s4 1966171168
  %v3546 = vunpack.c.0.s8 %v3545
  %v3547 = vlaneseq
  %v3548 = vshrl.u32 %v3547, 7
  %v3549 = vsub.s32 %v3546, %v3548
  %v3550 = vrot.slane %v3528, %v3549
  %v3552 = vunpack.c.l.s4 1966171168
  %v3553 = vunpack.c.0.s8 %v3552
  %v3554 = vlaneseq
  %v3555 = vshrl.u32 %v3554, 7
  %v3556 = vsub.s32 %v3553, %v3555
  %v3557 = vrot.slane %v3529, %v3556
  %v3558 = vcombine.high %v3536, %v3536
  %v3559 = vcombine.high %v3543, %v3543
  %v3560 = vcombine.high %v3550, %v3550
  %v3561 = vcombine.high %v3557, %v3557
  %v3562 = vlaneseq
  %v3563 = vshrl.u32 %v3562, 7
  %v3564 = vsub.s32 0, %v3563
  %v3565 = vrot.slane %v3487, %v3564
  %v3566 = vlaneseq
  %v3567 = vshrl.u32 %v3566, 7
  %v3568 = vsub.s32 0, %v3567
  %v3569 = vrot.slane %v3501, %v3568
  %v3570 = vlaneseq
  %v3571 = vshrl.u32 %v3570, 7
  %v3572 = vsub.s32 0, %v3571
  %v3573 = vrot.slane %v3509, %v3572
  %v3574 = vlaneseq
  %v3575 = vshrl.u32 %v3574, 7
  %v3576 = vsub.s32 0, %v3575
  %v3577 = vrot.slane %v3511, %v3576
  %v3578 = vlaneseq
  %v3579 = vshrl.u32 %v3578, 7
  %v3580 = vsub.s32 0, %v3579
  %v3581 = vrot.slane %v3494, %v3580
  %v3582 = vlaneseq
  %v3583 = vshrl.u32 %v3582, 7
  %v3584 = vsub.s32 0, %v3583
  %v3585 = vrot.slane %v3508, %v3584
  %v3586 = vlaneseq
  %v3587 = vshrl.u32 %v3586, 7
  %v3588 = vsub.s32 0, %v3587
  %v3589 = vrot.slane %v3510, %v3588
  %v3590 = vlaneseq
  %v3591 = vshrl.u32 %v3590, 7
  %v3592 = vsub.s32 0, %v3591
  %v3593 = vrot.slane %v3512, %v3592
  %v3594 = vlaneseq
  %v3595 = vshrl.u32 %v3594, 7
  %v3596 = vsub.s32 0, %v3595
  %v3597 = vrot.slane %v3536, %v3596
  %v3598 = vlaneseq
  %v3599 = vshrl.u32 %v3598, 7
  %v3600 = vsub.s32 0, %v3599
  %v3601 = vrot.slane %v3550, %v3600
  %v3602 = vlaneseq
  %v3603 = vshrl.u32 %v3602, 7
  %v3604 = vsub.s32 0, %v3603
  %v3605 = vrot.slane %v3558, %v3604
  %v3606 = vlaneseq
  %v3607 = vshrl.u32 %v3606, 7
  %v3608 = vsub.s32 0, %v3607
  %v3609 = vrot.slane %v3560, %v3608
  %v3610 = vlaneseq
  %v3611 = vshrl.u32 %v3610, 7
  %v3612 = vsub.s32 0, %v3611
  %v3613 = vrot.slane %v3543, %v3612
  %v3614 = vlaneseq
  %v3615 = vshrl.u32 %v3614, 7
  %v3616 = vsub.s32 0, %v3615
  %v3617 = vrot.slane %v3557, %v3616
  %v3618 = vlaneseq
  %v3619 = vshrl.u32 %v3618, 7
  %v3620 = vsub.s32 0, %v3619
  %v3621 = vrot.slane %v3559, %v3620
  %v3622 = vlaneseq
  %v3623 = vshrl.u32 %v3622, 7
  %v3624 = vsub.s32 0, %v3623
  %v3625 = vrot.slane %v3561, %v3624
  %3643 = vset.pattern.permute.xlu0 0
  %3644 = vperm.xlu0 %3643, %v3460
  %v3645 = vpop.permute.xlu0 %3644
  %3648 = vset.pattern.permute.xlu0 0
  %3649 = vperm.xlu0 %3648, %v3461
  %v3650 = vpop.permute.xlu0 %3649
  %v3652 = vmul.f32 %v3565, %v3645
  %v3653 = vmul.f32 %v3565, %v3650
  %v3654 = vmul.f32 %v3569, %v3645
  %v3655 = vmul.f32 %v3569, %v3650
  %v3656 = vmul.f32 %v3573, %v3645
  %v3657 = vmul.f32 %v3573, %v3650
  %v3658 = vmul.f32 %v3577, %v3645
  %v3659 = vmul.f32 %v3577, %v3650
  %v3660 = vmul.f32 %v3581, %v3645
  %v3661 = vmul.f32 %v3581, %v3650
  %v3662 = vmul.f32 %v3585, %v3645
  %v3663 = vmul.f32 %v3585, %v3650
  %v3664 = vmul.f32 %v3589, %v3645
  %v3665 = vmul.f32 %v3589, %v3650
  %v3666 = vmul.f32 %v3593, %v3645
  %v3667 = vmul.f32 %v3593, %v3650
  %v3668 = vmul.f32 %v3597, %v3645
  %v3669 = vmul.f32 %v3597, %v3650
  %v3670 = vmul.f32 %v3601, %v3645
  %v3671 = vmul.f32 %v3601, %v3650
  %v3672 = vmul.f32 %v3605, %v3645
  %v3673 = vmul.f32 %v3605, %v3650
  %v3674 = vmul.f32 %v3609, %v3645
  %v3675 = vmul.f32 %v3609, %v3650
  %v3676 = vmul.f32 %v3613, %v3645
  %v3677 = vmul.f32 %v3613, %v3650
  %v3678 = vmul.f32 %v3617, %v3645
  %v3679 = vmul.f32 %v3617, %v3650
  %v3680 = vmul.f32 %v3621, %v3645
  %v3681 = vmul.f32 %v3621, %v3650
  %v3682 = vmul.f32 %v3625, %v3645
  %v3683 = vmul.f32 %v3625, %v3650
  %v3684 = vmul.f32 %v3652, 1.442695
  %v3685 = vpow.pop %v3684
  %v3686 = vmul.f32 %v3653, 1.442695
  %v3687 = vpow.pop %v3686
  %v3688 = vmul.f32 %v3654, 1.442695
  %v3689 = vpow.pop %v3688
  %v3690 = vmul.f32 %v3655, 1.442695
  %v3691 = vpow.pop %v3690
  %v3692 = vmul.f32 %v3656, 1.442695
  %v3693 = vpow.pop %v3692
  %v3694 = vmul.f32 %v3657, 1.442695
  %v3695 = vpow.pop %v3694
  %v3696 = vmul.f32 %v3658, 1.442695
  %v3697 = vpow.pop %v3696
  %v3698 = vmul.f32 %v3659, 1.442695
  %v3699 = vpow.pop %v3698
  %v3700 = vmul.f32 %v3660, 1.442695
  %v3701 = vpow.pop %v3700
  %v3702 = vmul.f32 %v3661, 1.442695
  %v3703 = vpow.pop %v3702
  %v3704 = vmul.f32 %v3662, 1.442695
  %v3705 = vpow.pop %v3704
  %v3706 = vmul.f32 %v3663, 1.442695
  %v3707 = vpow.pop %v3706
  %v3708 = vmul.f32 %v3664, 1.442695
  %v3709 = vpow.pop %v3708
  %v3710 = vmul.f32 %v3665, 1.442695
  %v3711 = vpow.pop %v3710
  %v3712 = vmul.f32 %v3666, 1.442695
  %v3713 = vpow.pop %v3712
  %v3714 = vmul.f32 %v3667, 1.442695
  %v3715 = vpow.pop %v3714
  %v3716 = vmul.f32 %v3668, 1.442695
  %v3717 = vpow.pop %v3716
  %v3718 = vmul.f32 %v3669, 1.442695
  %v3719 = vpow.pop %v3718
  %v3720 = vmul.f32 %v3670, 1.442695
  %v3721 = vpow.pop %v3720
  %v3722 = vmul.f32 %v3671, 1.442695
  %v3723 = vpow.pop %v3722
  %v3724 = vmul.f32 %v3672, 1.442695
  %v3725 = vpow.pop %v3724
  %v3726 = vmul.f32 %v3673, 1.442695
  %v3727 = vpow.pop %v3726
  %v3728 = vmul.f32 %v3674, 1.442695
  %v3729 = vpow.pop %v3728
  %v3730 = vmul.f32 %v3675, 1.442695
  %v3731 = vpow.pop %v3730
  %v3732 = vmul.f32 %v3676, 1.442695
  %v3733 = vpow.pop %v3732
  %v3734 = vmul.f32 %v3677, 1.442695
  %v3735 = vpow.pop %v3734
  %v3736 = vmul.f32 %v3678, 1.442695
  %v3737 = vpow.pop %v3736
  %v3738 = vmul.f32 %v3679, 1.442695
  %v3739 = vpow.pop %v3738
  %v3740 = vmul.f32 %v3680, 1.442695
  %v3741 = vpow.pop %v3740
  %v3742 = vmul.f32 %v3681, 1.442695
  %v3743 = vpow.pop %v3742
  %v3744 = vmul.f32 %v3682, 1.442695
  %v3745 = vpow.pop %v3744
  %v3746 = vmul.f32 %v3683, 1.442695
  %v3747 = vpow.pop %v3746
  %3748 = vst.msk [vmem:[#allocation2] sm:$0xff] %vm681, %v3685
  %3749 = vst.msk [vmem:[#allocation2 + $0x8] sm:$0xff] %vm681, %v3687
  %3750 = vst.msk [vmem:[#allocation2 + $0x10] sm:$0xff] %vm681, %v3689
  %3751 = vst.msk [vmem:[#allocation2 + $0x18] sm:$0xff] %vm681, %v3691
  %3752 = vst.msk [vmem:[#allocation2 + $0x20] sm:$0xff] %vm681, %v3693
  %3753 = vst.msk [vmem:[#allocation2 + $0x28] sm:$0xff] %vm681, %v3695
  %3754 = vst.msk [vmem:[#allocation2 + $0x30] sm:$0xff] %vm681, %v3697
  %3755 = vst.msk [vmem:[#allocation2 + $0x38] sm:$0xff] %vm681, %v3699
  %3756 = vst.msk [vmem:[#allocation2 + $0x40] sm:$0xff] %vm681, %v3701
  %3757 = vst.msk [vmem:[#allocation2 + $0x48] sm:$0xff] %vm681, %v3703
  %3758 = vst.msk [vmem:[#allocation2 + $0x50] sm:$0xff] %vm681, %v3705
  %3759 = vst.msk [vmem:[#allocation2 + $0x58] sm:$0xff] %vm681, %v3707
  %3760 = vst.msk [vmem:[#allocation2 + $0x60] sm:$0xff] %vm681, %v3709
  %3761 = vst.msk [vmem:[#allocation2 + $0x68] sm:$0xff] %vm681, %v3711
  %3762 = vst.msk [vmem:[#allocation2 + $0x70] sm:$0xff] %vm681, %v3713
  %3763 = vst.msk [vmem:[#allocation2 + $0x78] sm:$0xff] %vm681, %v3715
  %3764 = vst.msk [vmem:[#allocation2 + $0x80] sm:$0xff] %vm681, %v3717
  %3765 = vst.msk [vmem:[#allocation2 + $0x88] sm:$0xff] %vm681, %v3719
  %3766 = vst.msk [vmem:[#allocation2 + $0x90] sm:$0xff] %vm681, %v3721
  %3767 = vst.msk [vmem:[#allocation2 + $0x98] sm:$0xff] %vm681, %v3723
  %3768 = vst.msk [vmem:[#allocation2 + $0xa0] sm:$0xff] %vm681, %v3725
  %3769 = vst.msk [vmem:[#allocation2 + $0xa8] sm:$0xff] %vm681, %v3727
  %3770 = vst.msk [vmem:[#allocation2 + $0xb0] sm:$0xff] %vm681, %v3729
  %3771 = vst.msk [vmem:[#allocation2 + $0xb8] sm:$0xff] %vm681, %v3731
  %3772 = vst.msk [vmem:[#allocation2 + $0xc0] sm:$0xff] %vm681, %v3733
  %3773 = vst.msk [vmem:[#allocation2 + $0xc8] sm:$0xff] %vm681, %v3735
  %3774 = vst.msk [vmem:[#allocation2 + $0xd0] sm:$0xff] %vm681, %v3737
  %3775 = vst.msk [vmem:[#allocation2 + $0xd8] sm:$0xff] %vm681, %v3739
  %3776 = vst.msk [vmem:[#allocation2 + $0xe0] sm:$0xff] %vm681, %v3741
  %3777 = vst.msk [vmem:[#allocation2 + $0xe8] sm:$0xff] %vm681, %v3743
  %3778 = vst.msk [vmem:[#allocation2 + $0xf0] sm:$0xff] %vm681, %v3745
  %3779 = vst.msk [vmem:[#allocation2 + $0xf8] sm:$0xff] %vm681, %v3747
  %v3780 = vmul.f32 %v3289, %v3155
  %v3781 = vmul.f32 %v3290, %v3156
  %v3784 = vcombine.high %v3780, %v3780
  %v3786 = vunpack.c.l.s4 1966171168
  %v3787 = vunpack.c.0.s8 %v3786
  %v3788 = vlaneseq
  %v3789 = vshrl.u32 %v3788, 7
  %v3790 = vsub.s32 %v3787, %v3789
  %v3791 = vrot.slane %v3780, %v3790
  %v3793 = vunpack.c.l.s4 1966171168
  %v3794 = vunpack.c.0.s8 %v3793
  %v3795 = vlaneseq
  %v3796 = vshrl.u32 %v3795, 7
  %v3797 = vsub.s32 %v3794, %v3796
  %v3798 = vrot.slane %v3784, %v3797
  %v3799 = vcombine.high %v3791, %v3791
  %v3800 = vcombine.high %v3798, %v3798
  %v3802 = vunpack.c.l.s4 1966171168
  %v3803 = vunpack.c.0.s8 %v3802
  %v3804 = vlaneseq
  %v3805 = vshrl.u32 %v3804, 7
  %v3806 = vsub.s32 %v3803, %v3805
  %v3807 = vrot.slane %v3791, %v3806
  %v3809 = vunpack.c.l.s4 1966171168
  %v3810 = vunpack.c.0.s8 %v3809
  %v3811 = vlaneseq
  %v3812 = vshrl.u32 %v3811, 7
  %v3813 = vsub.s32 %v3810, %v3812
  %v3814 = vrot.slane %v3798, %v3813
  %v3816 = vunpack.c.l.s4 1966171168
  %v3817 = vunpack.c.0.s8 %v3816
  %v3818 = vlaneseq
  %v3819 = vshrl.u32 %v3818, 7
  %v3820 = vsub.s32 %v3817, %v3819
  %v3821 = vrot.slane %v3799, %v3820
  %v3823 = vunpack.c.l.s4 1966171168
  %v3824 = vunpack.c.0.s8 %v3823
  %v3825 = vlaneseq
  %v3826 = vshrl.u32 %v3825, 7
  %v3827 = vsub.s32 %v3824, %v3826
  %v3828 = vrot.slane %v3800, %v3827
  %v3829 = vcombine.high %v3807, %v3807
  %v3830 = vcombine.high %v3814, %v3814
  %v3831 = vcombine.high %v3821, %v3821
  %v3832 = vcombine.high %v3828, %v3828
  %v3833 = vcombine.high %v3781, %v3781
  %v3835 = vunpack.c.l.s4 1966171168
  %v3836 = vunpack.c.0.s8 %v3835
  %v3837 = vlaneseq
  %v3838 = vshrl.u32 %v3837, 7
  %v3839 = vsub.s32 %v3836, %v3838
  %v3840 = vrot.slane %v3781, %v3839
  %v3842 = vunpack.c.l.s4 1966171168
  %v3843 = vunpack.c.0.s8 %v3842
  %v3844 = vlaneseq
  %v3845 = vshrl.u32 %v3844, 7
  %v3846 = vsub.s32 %v3843, %v3845
  %v3847 = vrot.slane %v3833, %v3846
  %v3848 = vcombine.high %v3840, %v3840
  %v3849 = vcombine.high %v3847, %v3847
  %v3851 = vunpack.c.l.s4 1966171168
  %v3852 = vunpack.c.0.s8 %v3851
  %v3853 = vlaneseq
  %v3854 = vshrl.u32 %v3853, 7
  %v3855 = vsub.s32 %v3852, %v3854
  %v3856 = vrot.slane %v3840, %v3855
  %v3858 = vunpack.c.l.s4 1966171168
  %v3859 = vunpack.c.0.s8 %v3858
  %v3860 = vlaneseq
  %v3861 = vshrl.u32 %v3860, 7
  %v3862 = vsub.s32 %v3859, %v3861
  %v3863 = vrot.slane %v3847, %v3862
  %v3865 = vunpack.c.l.s4 1966171168
  %v3866 = vunpack.c.0.s8 %v3865
  %v3867 = vlaneseq
  %v3868 = vshrl.u32 %v3867, 7
  %v3869 = vsub.s32 %v3866, %v3868
  %v3870 = vrot.slane %v3848, %v3869
  %v3872 = vunpack.c.l.s4 1966171168
  %v3873 = vunpack.c.0.s8 %v3872
  %v3874 = vlaneseq
  %v3875 = vshrl.u32 %v3874, 7
  %v3876 = vsub.s32 %v3873, %v3875
  %v3877 = vrot.slane %v3849, %v3876
  %v3878 = vcombine.high %v3856, %v3856
  %v3879 = vcombine.high %v3863, %v3863
  %v3880 = vcombine.high %v3870, %v3870
  %v3881 = vcombine.high %v3877, %v3877
  %v3882 = vlaneseq
  %v3883 = vshrl.u32 %v3882, 7
  %v3884 = vsub.s32 0, %v3883
  %v3885 = vrot.slane %v3367, %v3884
  %3887 = vbcast.lane.b32.xlu0 %v3885, 256
  %v3888 = vpop.permute.xlu0 %3887
  %s3890 = sor.u32 256, 8
  %3891 = vbcast.lane.b32.xlu0 %v3885, %s3890
  %v3892 = vpop.permute.xlu0 %3891
  %v3893 = vlaneseq
  %v3894 = vshrl.u32 %v3893, 7
  %v3895 = vsub.s32 1, %v3894
  %v3896 = vrot.slane %v3367, %v3895
  %3898 = vbcast.lane.b32.xlu0 %v3896, 256
  %v3899 = vpop.permute.xlu0 %3898
  %s3901 = sor.u32 256, 8
  %3902 = vbcast.lane.b32.xlu0 %v3896, %s3901
  %v3903 = vpop.permute.xlu0 %3902
  %v3904 = vlaneseq
  %v3905 = vshrl.u32 %v3904, 7
  %v3906 = vsub.s32 2, %v3905
  %v3907 = vrot.slane %v3367, %v3906
  %3909 = vbcast.lane.b32.xlu0 %v3907, 256
  %v3910 = vpop.permute.xlu0 %3909
  %s3912 = sor.u32 256, 8
  %3913 = vbcast.lane.b32.xlu0 %v3907, %s3912
  %v3914 = vpop.permute.xlu0 %3913
  %v3915 = vlaneseq
  %v3916 = vshrl.u32 %v3915, 7
  %v3917 = vsub.s32 3, %v3916
  %v3918 = vrot.slane %v3367, %v3917
  %3920 = vbcast.lane.b32.xlu0 %v3918, 256
  %v3921 = vpop.permute.xlu0 %3920
  %s3923 = sor.u32 256, 8
  %3924 = vbcast.lane.b32.xlu0 %v3918, %s3923
  %v3925 = vpop.permute.xlu0 %3924
  %v3926 = vlaneseq
  %v3927 = vshrl.u32 %v3926, 7
  %v3928 = vsub.s32 4, %v3927
  %v3929 = vrot.slane %v3367, %v3928
  %3931 = vbcast.lane.b32.xlu0 %v3929, 256
  %v3932 = vpop.permute.xlu0 %3931
  %s3934 = sor.u32 256, 8
  %3935 = vbcast.lane.b32.xlu0 %v3929, %s3934
  %v3936 = vpop.permute.xlu0 %3935
  %v3937 = vlaneseq
  %v3938 = vshrl.u32 %v3937, 7
  %v3939 = vsub.s32 5, %v3938
  %v3940 = vrot.slane %v3367, %v3939
  %3942 = vbcast.lane.b32.xlu0 %v3940, 256
  %v3943 = vpop.permute.xlu0 %3942
  %s3945 = sor.u32 256, 8
  %3946 = vbcast.lane.b32.xlu0 %v3940, %s3945
  %v3947 = vpop.permute.xlu0 %3946
  %v3948 = vlaneseq
  %v3949 = vshrl.u32 %v3948, 7
  %v3950 = vsub.s32 6, %v3949
  %v3951 = vrot.slane %v3367, %v3950
  %3953 = vbcast.lane.b32.xlu0 %v3951, 256
  %v3954 = vpop.permute.xlu0 %3953
  %s3956 = sor.u32 256, 8
  %3957 = vbcast.lane.b32.xlu0 %v3951, %s3956
  %v3958 = vpop.permute.xlu0 %3957
  %v3959 = vlaneseq
  %v3960 = vshrl.u32 %v3959, 7
  %v3961 = vsub.s32 7, %v3960
  %v3962 = vrot.slane %v3367, %v3961
  %3964 = vbcast.lane.b32.xlu0 %v3962, 256
  %v3965 = vpop.permute.xlu0 %3964
  %s3967 = sor.u32 256, 8
  %3968 = vbcast.lane.b32.xlu0 %v3962, %s3967
  %v3969 = vpop.permute.xlu0 %3968
  %v3970 = vlaneseq
  %v3971 = vshrl.u32 %v3970, 7
  %v3972 = vsub.s32 0, %v3971
  %v3973 = vrot.slane %v3372, %v3972
  %3975 = vbcast.lane.b32.xlu0 %v3973, 256
  %v3976 = vpop.permute.xlu0 %3975
  %s3978 = sor.u32 256, 8
  %3979 = vbcast.lane.b32.xlu0 %v3973, %s3978
  %v3980 = vpop.permute.xlu0 %3979
  %v3981 = vlaneseq
  %v3982 = vshrl.u32 %v3981, 7
  %v3983 = vsub.s32 1, %v3982
  %v3984 = vrot.slane %v3372, %v3983
  %3986 = vbcast.lane.b32.xlu0 %v3984, 256
  %v3987 = vpop.permute.xlu0 %3986
  %s3989 = sor.u32 256, 8
  %3990 = vbcast.lane.b32.xlu0 %v3984, %s3989
  %v3991 = vpop.permute.xlu0 %3990
  %v3992 = vlaneseq
  %v3993 = vshrl.u32 %v3992, 7
  %v3994 = vsub.s32 2, %v3993
  %v3995 = vrot.slane %v3372, %v3994
  %3997 = vbcast.lane.b32.xlu0 %v3995, 256
  %v3998 = vpop.permute.xlu0 %3997
  %s4000 = sor.u32 256, 8
  %4001 = vbcast.lane.b32.xlu0 %v3995, %s4000
  %v4002 = vpop.permute.xlu0 %4001
  %v4003 = vlaneseq
  %v4004 = vshrl.u32 %v4003, 7
  %v4005 = vsub.s32 3, %v4004
  %v4006 = vrot.slane %v3372, %v4005
  %4008 = vbcast.lane.b32.xlu0 %v4006, 256
  %v4009 = vpop.permute.xlu0 %4008
  %s4011 = sor.u32 256, 8
  %4012 = vbcast.lane.b32.xlu0 %v4006, %s4011
  %v4013 = vpop.permute.xlu0 %4012
  %v4014 = vlaneseq
  %v4015 = vshrl.u32 %v4014, 7
  %v4016 = vsub.s32 4, %v4015
  %v4017 = vrot.slane %v3372, %v4016
  %4019 = vbcast.lane.b32.xlu0 %v4017, 256
  %v4020 = vpop.permute.xlu0 %4019
  %s4022 = sor.u32 256, 8
  %4023 = vbcast.lane.b32.xlu0 %v4017, %s4022
  %v4024 = vpop.permute.xlu0 %4023
  %v4025 = vlaneseq
  %v4026 = vshrl.u32 %v4025, 7
  %v4027 = vsub.s32 5, %v4026
  %v4028 = vrot.slane %v3372, %v4027
  %4030 = vbcast.lane.b32.xlu0 %v4028, 256
  %v4031 = vpop.permute.xlu0 %4030
  %s4033 = sor.u32 256, 8
  %4034 = vbcast.lane.b32.xlu0 %v4028, %s4033
  %v4035 = vpop.permute.xlu0 %4034
  %v4036 = vlaneseq
  %v4037 = vshrl.u32 %v4036, 7
  %v4038 = vsub.s32 6, %v4037
  %v4039 = vrot.slane %v3372, %v4038
  %4041 = vbcast.lane.b32.xlu0 %v4039, 256
  %v4042 = vpop.permute.xlu0 %4041
  %s4044 = sor.u32 256, 8
  %4045 = vbcast.lane.b32.xlu0 %v4039, %s4044
  %v4046 = vpop.permute.xlu0 %4045
  %v4047 = vlaneseq
  %v4048 = vshrl.u32 %v4047, 7
  %v4049 = vsub.s32 7, %v4048
  %v4050 = vrot.slane %v3372, %v4049
  %4052 = vbcast.lane.b32.xlu0 %v4050, 256
  %v4053 = vpop.permute.xlu0 %4052
  %s4055 = sor.u32 256, 8
  %4056 = vbcast.lane.b32.xlu0 %v4050, %s4055
  %v4057 = vpop.permute.xlu0 %4056
  %v4058 = vlaneseq
  %v4059 = vshrl.u32 %v4058, 7
  %v4060 = vsub.s32 0, %v4059
  %v4061 = vrot.slane %v3807, %v4060
  %v4062 = vlaneseq
  %v4063 = vshrl.u32 %v4062, 7
  %v4064 = vsub.s32 0, %v4063
  %v4065 = vrot.slane %v3821, %v4064
  %v4066 = vlaneseq
  %v4067 = vshrl.u32 %v4066, 7
  %v4068 = vsub.s32 0, %v4067
  %v4069 = vrot.slane %v3829, %v4068
  %v4070 = vlaneseq
  %v4071 = vshrl.u32 %v4070, 7
  %v4072 = vsub.s32 0, %v4071
  %v4073 = vrot.slane %v3831, %v4072
  %v4074 = vlaneseq
  %v4075 = vshrl.u32 %v4074, 7
  %v4076 = vsub.s32 0, %v4075
  %v4077 = vrot.slane %v3814, %v4076
  %v4078 = vlaneseq
  %v4079 = vshrl.u32 %v4078, 7
  %v4080 = vsub.s32 0, %v4079
  %v4081 = vrot.slane %v3828, %v4080
  %v4082 = vlaneseq
  %v4083 = vshrl.u32 %v4082, 7
  %v4084 = vsub.s32 0, %v4083
  %v4085 = vrot.slane %v3830, %v4084
  %v4086 = vlaneseq
  %v4087 = vshrl.u32 %v4086, 7
  %v4088 = vsub.s32 0, %v4087
  %v4089 = vrot.slane %v3832, %v4088
  %v4090 = vlaneseq
  %v4091 = vshrl.u32 %v4090, 7
  %v4092 = vsub.s32 0, %v4091
  %v4093 = vrot.slane %v3856, %v4092
  %v4094 = vlaneseq
  %v4095 = vshrl.u32 %v4094, 7
  %v4096 = vsub.s32 0, %v4095
  %v4097 = vrot.slane %v3870, %v4096
  %v4098 = vlaneseq
  %v4099 = vshrl.u32 %v4098, 7
  %v4100 = vsub.s32 0, %v4099
  %v4101 = vrot.slane %v3878, %v4100
  %v4102 = vlaneseq
  %v4103 = vshrl.u32 %v4102, 7
  %v4104 = vsub.s32 0, %v4103
  %v4105 = vrot.slane %v3880, %v4104
  %v4106 = vlaneseq
  %v4107 = vshrl.u32 %v4106, 7
  %v4108 = vsub.s32 0, %v4107
  %v4109 = vrot.slane %v3863, %v4108
  %v4110 = vlaneseq
  %v4111 = vshrl.u32 %v4110, 7
  %v4112 = vsub.s32 0, %v4111
  %v4113 = vrot.slane %v3877, %v4112
  %v4114 = vlaneseq
  %v4115 = vshrl.u32 %v4114, 7
  %v4116 = vsub.s32 0, %v4115
  %v4117 = vrot.slane %v3879, %v4116
  %v4118 = vlaneseq
  %v4119 = vshrl.u32 %v4118, 7
  %v4120 = vsub.s32 0, %v4119
  %v4121 = vrot.slane %v3881, %v4120
  %v4138 = vmul.f32 %v4061, %v3888
  %v4139 = vmul.f32 %v4061, %v3892
  %v4140 = vmul.f32 %v4065, %v3899
  %v4141 = vmul.f32 %v4065, %v3903
  %v4142 = vmul.f32 %v4069, %v3910
  %v4143 = vmul.f32 %v4069, %v3914
  %v4144 = vmul.f32 %v4073, %v3921
  %v4145 = vmul.f32 %v4073, %v3925
  %v4146 = vmul.f32 %v4077, %v3932
  %v4147 = vmul.f32 %v4077, %v3936
  %v4148 = vmul.f32 %v4081, %v3943
  %v4149 = vmul.f32 %v4081, %v3947
  %v4150 = vmul.f32 %v4085, %v3954
  %v4151 = vmul.f32 %v4085, %v3958
  %v4152 = vmul.f32 %v4089, %v3965
  %v4153 = vmul.f32 %v4089, %v3969
  %v4154 = vmul.f32 %v4093, %v3976
  %v4155 = vmul.f32 %v4093, %v3980
  %v4156 = vmul.f32 %v4097, %v3987
  %v4157 = vmul.f32 %v4097, %v3991
  %v4158 = vmul.f32 %v4101, %v3998
  %v4159 = vmul.f32 %v4101, %v4002
  %v4160 = vmul.f32 %v4105, %v4009
  %v4161 = vmul.f32 %v4105, %v4013
  %v4162 = vmul.f32 %v4109, %v4020
  %v4163 = vmul.f32 %v4109, %v4024
  %v4164 = vmul.f32 %v4113, %v4031
  %v4165 = vmul.f32 %v4113, %v4035
  %v4166 = vmul.f32 %v4117, %v4042
  %v4167 = vmul.f32 %v4117, %v4046
  %v4168 = vmul.f32 %v4121, %v4053
  %v4169 = vmul.f32 %v4121, %v4057
  %4170 = vst.msk [vmem:[#allocation3] sm:$0xff] %vm681, %v4138
  %4171 = vst.msk [vmem:[#allocation3 + $0x8] sm:$0xff] %vm681, %v4139
  %4172 = vst.msk [vmem:[#allocation3 + $0x10] sm:$0xff] %vm681, %v4140
  %4173 = vst.msk [vmem:[#allocation3 + $0x18] sm:$0xff] %vm681, %v4141
  %4174 = vst.msk [vmem:[#allocation3 + $0x20] sm:$0xff] %vm681, %v4142
  %4175 = vst.msk [vmem:[#allocation3 + $0x28] sm:$0xff] %vm681, %v4143
  %4176 = vst.msk [vmem:[#allocation3 + $0x30] sm:$0xff] %vm681, %v4144
  %4177 = vst.msk [vmem:[#allocation3 + $0x38] sm:$0xff] %vm681, %v4145
  %4178 = vst.msk [vmem:[#allocation3 + $0x40] sm:$0xff] %vm681, %v4146
  %4179 = vst.msk [vmem:[#allocation3 + $0x48] sm:$0xff] %vm681, %v4147
  %4180 = vst.msk [vmem:[#allocation3 + $0x50] sm:$0xff] %vm681, %v4148
  %4181 = vst.msk [vmem:[#allocation3 + $0x58] sm:$0xff] %vm681, %v4149
  %4182 = vst.msk [vmem:[#allocation3 + $0x60] sm:$0xff] %vm681, %v4150
  %4183 = vst.msk [vmem:[#allocation3 + $0x68] sm:$0xff] %vm681, %v4151
  %4184 = vst.msk [vmem:[#allocation3 + $0x70] sm:$0xff] %vm681, %v4152
  %4185 = vst.msk [vmem:[#allocation3 + $0x78] sm:$0xff] %vm681, %v4153
  %4186 = vst.msk [vmem:[#allocation3 + $0x80] sm:$0xff] %vm681, %v4154
  %4187 = vst.msk [vmem:[#allocation3 + $0x88] sm:$0xff] %vm681, %v4155
  %4188 = vst.msk [vmem:[#allocation3 + $0x90] sm:$0xff] %vm681, %v4156
  %4189 = vst.msk [vmem:[#allocation3 + $0x98] sm:$0xff] %vm681, %v4157
  %4190 = vst.msk [vmem:[#allocation3 + $0xa0] sm:$0xff] %vm681, %v4158
  %4191 = vst.msk [vmem:[#allocation3 + $0xa8] sm:$0xff] %vm681, %v4159
  %4192 = vst.msk [vmem:[#allocation3 + $0xb0] sm:$0xff] %vm681, %v4160
  %4193 = vst.msk [vmem:[#allocation3 + $0xb8] sm:$0xff] %vm681, %v4161
  %4194 = vst.msk [vmem:[#allocation3 + $0xc0] sm:$0xff] %vm681, %v4162
  %4195 = vst.msk [vmem:[#allocation3 + $0xc8] sm:$0xff] %vm681, %v4163
  %4196 = vst.msk [vmem:[#allocation3 + $0xd0] sm:$0xff] %vm681, %v4164
  %4197 = vst.msk [vmem:[#allocation3 + $0xd8] sm:$0xff] %vm681, %v4165
  %4198 = vst.msk [vmem:[#allocation3 + $0xe0] sm:$0xff] %vm681, %v4166
  %4199 = vst.msk [vmem:[#allocation3 + $0xe8] sm:$0xff] %vm681, %v4167
  %4200 = vst.msk [vmem:[#allocation3 + $0xf0] sm:$0xff] %vm681, %v4168
  %4201 = vst.msk [vmem:[#allocation3 + $0xf8] sm:$0xff] %vm681, %v4169
  %v4202 = vld [vmem:[#allocation2] sm:$0xff]
  %v4203 = vld [vmem:[#allocation2 + $0x8] sm:$0xff]
  %v4204 = vmul.f32 %v4202, 0.0
  %v4205 = vmul.f32 %v4203, 0.0
  %v4206 = vld [vmem:[#allocation3] sm:$0xff]
  %v4207 = vld [vmem:[#allocation3 + $0x8] sm:$0xff]
  %v4208 = vadd.f32 %v4204, %v4206
  %v4209 = vadd.f32 %v4205, %v4207
  %4210 = vst.msk [vmem:[#allocation4] sm:$0xff] %vm681, %v4208
  %4211 = vst.msk [vmem:[#allocation4 + $0x8] sm:$0xff] %vm681, %v4209
  %v4212 = vld [vmem:[%s1717] sm:$0xff]
  %v4213 = vld [vmem:[%s1717 + $0x8] sm:$0xff]
  %v4214 = vmul.f32 %v4212, 0.0
  %v4215 = vmul.f32 %v4213, 0.0
  %v4216 = vld [vmem:[%s1722] sm:$0xff]
  %v4217 = vld [vmem:[%s1722 + $0x8] sm:$0xff]
  %v4218 = vadd.f32 %v4214, %v4216
  %v4219 = vadd.f32 %v4215, %v4217
  %4220 = vst.msk [vmem:[%s1727] sm:$0xff] %vm681, %v4218
  %4221 = vst.msk [vmem:[%s1727 + $0x8] sm:$0xff] %vm681, %v4219
  %v4222 = vld [vmem:[%s1730] sm:$0xff]
  %v4223 = vld [vmem:[%s1730 + $0x8] sm:$0xff]
  %v4224 = vmul.f32 %v4222, %v4208
  %v4225 = vmul.f32 %v4223, %v4209
  %v4226 = vld [vmem:[%s1735] sm:$0xff]
  %v4227 = vld [vmem:[%s1735 + $0x8] sm:$0xff]
  %v4228 = vadd.f32 %v4224, %v4226
  %v4229 = vadd.f32 %v4225, %v4227
  %4230 = vst.msk [vmem:[%s1740] sm:$0xff] %vm681, %v4228
  %4231 = vst.msk [vmem:[%s1740 + $0x8] sm:$0xff] %vm681, %v4229
  %v4232 = vld [vmem:[%s1743] sm:$0xff]
  %v4233 = vld [vmem:[%s1743 + $0x8] sm:$0xff]
  %v4234 = vmul.f32 %v4232, %v4218
  %v4235 = vmul.f32 %v4233, %v4219
  %v4236 = vld [vmem:[%s1748] sm:$0xff]
  %v4237 = vld [vmem:[%s1748 + $0x8] sm:$0xff]
  %v4238 = vadd.f32 %v4234, %v4236
  %v4239 = vadd.f32 %v4235, %v4237
  %4240 = vst.msk [vmem:[%s1753] sm:$0xff] %vm681, %v4238
  %4241 = vst.msk [vmem:[%s1753 + $0x8] sm:$0xff] %vm681, %v4239
  %v4242 = vld [vmem:[%s1756] sm:$0xff]
  %v4243 = vld [vmem:[%s1756 + $0x8] sm:$0xff]
  %v4244 = vmul.f32 %v4242, %v4228
  %v4245 = vmul.f32 %v4243, %v4229
  %v4246 = vld [vmem:[%s1761] sm:$0xff]
  %v4247 = vld [vmem:[%s1761 + $0x8] sm:$0xff]
  %v4248 = vadd.f32 %v4244, %v4246
  %v4249 = vadd.f32 %v4245, %v4247
  %4250 = vst.msk [vmem:[%s1766] sm:$0xff] %vm681, %v4248
  %4251 = vst.msk [vmem:[%s1766 + $0x8] sm:$0xff] %vm681, %v4249
  %v4252 = vld [vmem:[%s1769] sm:$0xff]
  %v4253 = vld [vmem:[%s1769 + $0x8] sm:$0xff]
  %v4254 = vmul.f32 %v4252, %v4238
  %v4255 = vmul.f32 %v4253, %v4239
  %v4256 = vld [vmem:[%s1774] sm:$0xff]
  %v4257 = vld [vmem:[%s1774 + $0x8] sm:$0xff]
  %v4258 = vadd.f32 %v4254, %v4256
  %v4259 = vadd.f32 %v4255, %v4257
  %4260 = vst.msk [vmem:[%s1779] sm:$0xff] %vm681, %v4258
  %4261 = vst.msk [vmem:[%s1779 + $0x8] sm:$0xff] %vm681, %v4259
  %v4262 = vld [vmem:[%s1782] sm:$0xff]
  %v4263 = vld [vmem:[%s1782 + $0x8] sm:$0xff]
  %v4264 = vmul.f32 %v4262, %v4248
  %v4265 = vmul.f32 %v4263, %v4249
  %v4266 = vld [vmem:[%s1787] sm:$0xff]
  %v4267 = vld [vmem:[%s1787 + $0x8] sm:$0xff]
  %v4268 = vadd.f32 %v4264, %v4266
  %v4269 = vadd.f32 %v4265, %v4267
  %4270 = vst.msk [vmem:[%s1792] sm:$0xff] %vm681, %v4268
  %4271 = vst.msk [vmem:[%s1792 + $0x8] sm:$0xff] %vm681, %v4269
  %v4272 = vld [vmem:[%s1795] sm:$0xff]
  %v4273 = vld [vmem:[%s1795 + $0x8] sm:$0xff]
  %v4274 = vmul.f32 %v4272, %v4258
  %v4275 = vmul.f32 %v4273, %v4259
  %v4276 = vld [vmem:[%s1800] sm:$0xff]
  %v4277 = vld [vmem:[%s1800 + $0x8] sm:$0xff]
  %v4278 = vadd.f32 %v4274, %v4276
  %v4279 = vadd.f32 %v4275, %v4277
  %4280 = vst.msk [vmem:[%s1805] sm:$0xff] %vm681, %v4278
  %4281 = vst.msk [vmem:[%s1805 + $0x8] sm:$0xff] %vm681, %v4279
  %v4282 = vld [vmem:[%s1808] sm:$0xff]
  %v4283 = vld [vmem:[%s1808 + $0x8] sm:$0xff]
  %v4284 = vmul.f32 %v4282, %v4268
  %v4285 = vmul.f32 %v4283, %v4269
  %v4286 = vld [vmem:[%s1813] sm:$0xff]
  %v4287 = vld [vmem:[%s1813 + $0x8] sm:$0xff]
  %v4288 = vadd.f32 %v4284, %v4286
  %v4289 = vadd.f32 %v4285, %v4287
  %4290 = vst.msk [vmem:[%s1818] sm:$0xff] %vm681, %v4288
  %4291 = vst.msk [vmem:[%s1818 + $0x8] sm:$0xff] %vm681, %v4289
  %v4292 = vld [vmem:[%s1821] sm:$0xff]
  %v4293 = vld [vmem:[%s1821 + $0x8] sm:$0xff]
  %v4294 = vmul.f32 %v4292, %v4278
  %v4295 = vmul.f32 %v4293, %v4279
  %v4296 = vld [vmem:[%s1826] sm:$0xff]
  %v4297 = vld [vmem:[%s1826 + $0x8] sm:$0xff]
  %v4298 = vadd.f32 %v4294, %v4296
  %v4299 = vadd.f32 %v4295, %v4297
  %4300 = vst.msk [vmem:[%s1831] sm:$0xff] %vm681, %v4298
  %4301 = vst.msk [vmem:[%s1831 + $0x8] sm:$0xff] %vm681, %v4299
  %v4302 = vld [vmem:[%s1834] sm:$0xff]
  %v4303 = vld [vmem:[%s1834 + $0x8] sm:$0xff]
  %v4304 = vmul.f32 %v4302, %v4288
  %v4305 = vmul.f32 %v4303, %v4289
  %v4306 = vld [vmem:[%s1839] sm:$0xff]
  %v4307 = vld [vmem:[%s1839 + $0x8] sm:$0xff]
  %v4308 = vadd.f32 %v4304, %v4306
  %v4309 = vadd.f32 %v4305, %v4307
  %4310 = vst.msk [vmem:[%s1844] sm:$0xff] %vm681, %v4308
  %4311 = vst.msk [vmem:[%s1844 + $0x8] sm:$0xff] %vm681, %v4309
  %v4312 = vld [vmem:[%s1847] sm:$0xff]
  %v4313 = vld [vmem:[%s1847 + $0x8] sm:$0xff]
  %v4314 = vmul.f32 %v4312, %v4298
  %v4315 = vmul.f32 %v4313, %v4299
  %v4316 = vld [vmem:[%s1852] sm:$0xff]
  %v4317 = vld [vmem:[%s1852 + $0x8] sm:$0xff]
  %v4318 = vadd.f32 %v4314, %v4316
  %v4319 = vadd.f32 %v4315, %v4317
  %4320 = vst.msk [vmem:[%s1857] sm:$0xff] %vm681, %v4318
  %4321 = vst.msk [vmem:[%s1857 + $0x8] sm:$0xff] %vm681, %v4319
  %v4322 = vld [vmem:[%s1860] sm:$0xff]
  %v4323 = vld [vmem:[%s1860 + $0x8] sm:$0xff]
  %v4324 = vmul.f32 %v4322, %v4308
  %v4325 = vmul.f32 %v4323, %v4309
  %v4326 = vld [vmem:[%s1865] sm:$0xff]
  %v4327 = vld [vmem:[%s1865 + $0x8] sm:$0xff]
  %v4328 = vadd.f32 %v4324, %v4326
  %v4329 = vadd.f32 %v4325, %v4327
  %4330 = vst.msk [vmem:[%s1870] sm:$0xff] %vm681, %v4328
  %4331 = vst.msk [vmem:[%s1870 + $0x8] sm:$0xff] %vm681, %v4329
  %v4332 = vld [vmem:[%s1873] sm:$0xff]
  %v4333 = vld [vmem:[%s1873 + $0x8] sm:$0xff]
  %v4334 = vmul.f32 %v4332, %v4318
  %v4335 = vmul.f32 %v4333, %v4319
  %v4336 = vld [vmem:[%s1878] sm:$0xff]
  %v4337 = vld [vmem:[%s1878 + $0x8] sm:$0xff]
  %v4338 = vadd.f32 %v4334, %v4336
  %v4339 = vadd.f32 %v4335, %v4337
  %4340 = vst.msk [vmem:[%s1883] sm:$0xff] %vm681, %v4338
  %4341 = vst.msk [vmem:[%s1883 + $0x8] sm:$0xff] %vm681, %v4339
  %v4342 = vld [vmem:[%s1886] sm:$0xff]
  %v4343 = vld [vmem:[%s1886 + $0x8] sm:$0xff]
  %v4344 = vmul.f32 %v4342, %v4328
  %v4345 = vmul.f32 %v4343, %v4329
  %v4346 = vld [vmem:[%s1891] sm:$0xff]
  %v4347 = vld [vmem:[%s1891 + $0x8] sm:$0xff]
  %v4348 = vadd.f32 %v4344, %v4346
  %v4349 = vadd.f32 %v4345, %v4347
  %4350 = vst.msk [vmem:[%s1896] sm:$0xff] %vm681, %v4348
  %4351 = vst.msk [vmem:[%s1896 + $0x8] sm:$0xff] %vm681, %v4349
  %v4352 = vld [vmem:[%s1899] sm:$0xff]
  %v4353 = vld [vmem:[%s1899 + $0x8] sm:$0xff]
  %v4354 = vmul.f32 %v4352, %v4338
  %v4355 = vmul.f32 %v4353, %v4339
  %v4356 = vld [vmem:[%s1904] sm:$0xff]
  %v4357 = vld [vmem:[%s1904 + $0x8] sm:$0xff]
  %v4358 = vadd.f32 %v4354, %v4356
  %v4359 = vadd.f32 %v4355, %v4357
  %4360 = vst.msk [vmem:[%s1909] sm:$0xff] %vm681, %v4358
  %4361 = vst.msk [vmem:[%s1909 + $0x8] sm:$0xff] %vm681, %v4359
  %v4362 = vlaneseq
  %v4363 = vshrl.u32 %v4362, 7
  %v4364 = vsub.s32 0, %v4363
  %v4365 = vrot.slane %v3451, %v4364
  %4367 = vbcast.lane.b32.xlu0 %v4365, 256
  %v4368 = vpop.permute.xlu0 %4367
  %s4370 = sor.u32 256, 8
  %4371 = vbcast.lane.b32.xlu0 %v4365, %s4370
  %v4372 = vpop.permute.xlu0 %4371
  %v4373 = vlaneseq
  %v4374 = vshrl.u32 %v4373, 7
  %v4375 = vsub.s32 1, %v4374
  %v4376 = vrot.slane %v3451, %v4375
  %4378 = vbcast.lane.b32.xlu0 %v4376, 256
  %v4379 = vpop.permute.xlu0 %4378
  %s4381 = sor.u32 256, 8
  %4382 = vbcast.lane.b32.xlu0 %v4376, %s4381
  %v4383 = vpop.permute.xlu0 %4382
  %v4384 = vlaneseq
  %v4385 = vshrl.u32 %v4384, 7
  %v4386 = vsub.s32 2, %v4385
  %v4387 = vrot.slane %v3451, %v4386
  %4389 = vbcast.lane.b32.xlu0 %v4387, 256
  %v4390 = vpop.permute.xlu0 %4389
  %s4392 = sor.u32 256, 8
  %4393 = vbcast.lane.b32.xlu0 %v4387, %s4392
  %v4394 = vpop.permute.xlu0 %4393
  %v4395 = vlaneseq
  %v4396 = vshrl.u32 %v4395, 7
  %v4397 = vsub.s32 3, %v4396
  %v4398 = vrot.slane %v3451, %v4397
  %4400 = vbcast.lane.b32.xlu0 %v4398, 256
  %v4401 = vpop.permute.xlu0 %4400
  %s4403 = sor.u32 256, 8
  %4404 = vbcast.lane.b32.xlu0 %v4398, %s4403
  %v4405 = vpop.permute.xlu0 %4404
  %v4406 = vlaneseq
  %v4407 = vshrl.u32 %v4406, 7
  %v4408 = vsub.s32 4, %v4407
  %v4409 = vrot.slane %v3451, %v4408
  %4411 = vbcast.lane.b32.xlu0 %v4409, 256
  %v4412 = vpop.permute.xlu0 %4411
  %s4414 = sor.u32 256, 8
  %4415 = vbcast.lane.b32.xlu0 %v4409, %s4414
  %v4416 = vpop.permute.xlu0 %4415
  %v4417 = vlaneseq
  %v4418 = vshrl.u32 %v4417, 7
  %v4419 = vsub.s32 5, %v4418
  %v4420 = vrot.slane %v3451, %v4419
  %4422 = vbcast.lane.b32.xlu0 %v4420, 256
  %v4423 = vpop.permute.xlu0 %4422
  %s4425 = sor.u32 256, 8
  %4426 = vbcast.lane.b32.xlu0 %v4420, %s4425
  %v4427 = vpop.permute.xlu0 %4426
  %v4428 = vlaneseq
  %v4429 = vshrl.u32 %v4428, 7
  %v4430 = vsub.s32 6, %v4429
  %v4431 = vrot.slane %v3451, %v4430
  %4433 = vbcast.lane.b32.xlu0 %v4431, 256
  %v4434 = vpop.permute.xlu0 %4433
  %s4436 = sor.u32 256, 8
  %4437 = vbcast.lane.b32.xlu0 %v4431, %s4436
  %v4438 = vpop.permute.xlu0 %4437
  %v4439 = vlaneseq
  %v4440 = vshrl.u32 %v4439, 7
  %v4441 = vsub.s32 7, %v4440
  %v4442 = vrot.slane %v3451, %v4441
  %4444 = vbcast.lane.b32.xlu0 %v4442, 256
  %v4445 = vpop.permute.xlu0 %4444
  %s4447 = sor.u32 256, 8
  %4448 = vbcast.lane.b32.xlu0 %v4442, %s4447
  %v4449 = vpop.permute.xlu0 %4448
  %v4450 = vlaneseq
  %v4451 = vshrl.u32 %v4450, 7
  %v4452 = vsub.s32 0, %v4451
  %v4453 = vrot.slane %v3456, %v4452
  %4455 = vbcast.lane.b32.xlu0 %v4453, 256
  %v4456 = vpop.permute.xlu0 %4455
  %s4458 = sor.u32 256, 8
  %4459 = vbcast.lane.b32.xlu0 %v4453, %s4458
  %v4460 = vpop.permute.xlu0 %4459
  %v4461 = vlaneseq
  %v4462 = vshrl.u32 %v4461, 7
  %v4463 = vsub.s32 1, %v4462
  %v4464 = vrot.slane %v3456, %v4463
  %4466 = vbcast.lane.b32.xlu0 %v4464, 256
  %v4467 = vpop.permute.xlu0 %4466
  %s4469 = sor.u32 256, 8
  %4470 = vbcast.lane.b32.xlu0 %v4464, %s4469
  %v4471 = vpop.permute.xlu0 %4470
  %v4472 = vlaneseq
  %v4473 = vshrl.u32 %v4472, 7
  %v4474 = vsub.s32 2, %v4473
  %v4475 = vrot.slane %v3456, %v4474
  %4477 = vbcast.lane.b32.xlu0 %v4475, 256
  %v4478 = vpop.permute.xlu0 %4477
  %s4480 = sor.u32 256, 8
  %4481 = vbcast.lane.b32.xlu0 %v4475, %s4480
  %v4482 = vpop.permute.xlu0 %4481
  %v4483 = vlaneseq
  %v4484 = vshrl.u32 %v4483, 7
  %v4485 = vsub.s32 3, %v4484
  %v4486 = vrot.slane %v3456, %v4485
  %4488 = vbcast.lane.b32.xlu0 %v4486, 256
  %v4489 = vpop.permute.xlu0 %4488
  %s4491 = sor.u32 256, 8
  %4492 = vbcast.lane.b32.xlu0 %v4486, %s4491
  %v4493 = vpop.permute.xlu0 %4492
  %v4494 = vlaneseq
  %v4495 = vshrl.u32 %v4494, 7
  %v4496 = vsub.s32 4, %v4495
  %v4497 = vrot.slane %v3456, %v4496
  %4499 = vbcast.lane.b32.xlu0 %v4497, 256
  %v4500 = vpop.permute.xlu0 %4499
  %s4502 = sor.u32 256, 8
  %4503 = vbcast.lane.b32.xlu0 %v4497, %s4502
  %v4504 = vpop.permute.xlu0 %4503
  %v4505 = vlaneseq
  %v4506 = vshrl.u32 %v4505, 7
  %v4507 = vsub.s32 5, %v4506
  %v4508 = vrot.slane %v3456, %v4507
  %4510 = vbcast.lane.b32.xlu0 %v4508, 256
  %v4511 = vpop.permute.xlu0 %4510
  %s4513 = sor.u32 256, 8
  %4514 = vbcast.lane.b32.xlu0 %v4508, %s4513
  %v4515 = vpop.permute.xlu0 %4514
  %v4516 = vlaneseq
  %v4517 = vshrl.u32 %v4516, 7
  %v4518 = vsub.s32 6, %v4517
  %v4519 = vrot.slane %v3456, %v4518
  %4521 = vbcast.lane.b32.xlu0 %v4519, 256
  %v4522 = vpop.permute.xlu0 %4521
  %s4524 = sor.u32 256, 8
  %4525 = vbcast.lane.b32.xlu0 %v4519, %s4524
  %v4526 = vpop.permute.xlu0 %4525
  %v4527 = vlaneseq
  %v4528 = vshrl.u32 %v4527, 7
  %v4529 = vsub.s32 7, %v4528
  %v4530 = vrot.slane %v3456, %v4529
  %4532 = vbcast.lane.b32.xlu0 %v4530, 256
  %v4533 = vpop.permute.xlu0 %4532
  %s4535 = sor.u32 256, 8
  %4536 = vbcast.lane.b32.xlu0 %v4530, %s4535
  %v4537 = vpop.permute.xlu0 %4536
  %v4538 = vld [vmem:[#allocation4] sm:$0xff]
  %v4539 = vld [vmem:[#allocation4 + $0x8] sm:$0xff]
  %v4540 = vld [vmem:[#allocation4 + $0x10] sm:$0xff]
  %v4541 = vld [vmem:[#allocation4 + $0x18] sm:$0xff]
  %v4542 = vld [vmem:[#allocation4 + $0x20] sm:$0xff]
  %v4543 = vld [vmem:[#allocation4 + $0x28] sm:$0xff]
  %v4544 = vld [vmem:[#allocation4 + $0x30] sm:$0xff]
  %v4545 = vld [vmem:[#allocation4 + $0x38] sm:$0xff]
  %v4546 = vld [vmem:[#allocation4 + $0x40] sm:$0xff]
  %v4547 = vld [vmem:[#allocation4 + $0x48] sm:$0xff]
  %v4548 = vld [vmem:[#allocation4 + $0x50] sm:$0xff]
  %v4549 = vld [vmem:[#allocation4 + $0x58] sm:$0xff]
  %v4550 = vld [vmem:[#allocation4 + $0x60] sm:$0xff]
  %v4551 = vld [vmem:[#allocation4 + $0x68] sm:$0xff]
  %v4552 = vld [vmem:[#allocation4 + $0x70] sm:$0xff]
  %v4553 = vld [vmem:[#allocation4 + $0x78] sm:$0xff]
  %v4554 = vld [vmem:[#allocation4 + $0x80] sm:$0xff]
  %v4555 = vld [vmem:[#allocation4 + $0x88] sm:$0xff]
  %v4556 = vld [vmem:[#allocation4 + $0x90] sm:$0xff]
  %v4557 = vld [vmem:[#allocation4 + $0x98] sm:$0xff]
  %v4558 = vld [vmem:[#allocation4 + $0xa0] sm:$0xff]
  %v4559 = vld [vmem:[#allocation4 + $0xa8] sm:$0xff]
  %v4560 = vld [vmem:[#allocation4 + $0xb0] sm:$0xff]
  %v4561 = vld [vmem:[#allocation4 + $0xb8] sm:$0xff]
  %v4562 = vld [vmem:[#allocation4 + $0xc0] sm:$0xff]
  %v4563 = vld [vmem:[#allocation4 + $0xc8] sm:$0xff]
  %v4564 = vld [vmem:[#allocation4 + $0xd0] sm:$0xff]
  %v4565 = vld [vmem:[#allocation4 + $0xd8] sm:$0xff]
  %v4566 = vld [vmem:[#allocation4 + $0xe0] sm:$0xff]
  %v4567 = vld [vmem:[#allocation4 + $0xe8] sm:$0xff]
  %v4568 = vld [vmem:[#allocation4 + $0xf0] sm:$0xff]
  %v4569 = vld [vmem:[#allocation4 + $0xf8] sm:$0xff]
  %v4570 = vmul.f32 %v4368, %v4538
  %v4571 = vmul.f32 %v4372, %v4539
  %v4572 = vmul.f32 %v4379, %v4540
  %v4573 = vmul.f32 %v4383, %v4541
  %v4574 = vmul.f32 %v4390, %v4542
  %v4575 = vmul.f32 %v4394, %v4543
  %v4576 = vmul.f32 %v4401, %v4544
  %v4577 = vmul.f32 %v4405, %v4545
  %v4578 = vmul.f32 %v4412, %v4546
  %v4579 = vmul.f32 %v4416, %v4547
  %v4580 = vmul.f32 %v4423, %v4548
  %v4581 = vmul.f32 %v4427, %v4549
  %v4582 = vmul.f32 %v4434, %v4550
  %v4583 = vmul.f32 %v4438, %v4551
  %v4584 = vmul.f32 %v4445, %v4552
  %v4585 = vmul.f32 %v4449, %v4553
  %v4586 = vmul.f32 %v4456, %v4554
  %v4587 = vmul.f32 %v4460, %v4555
  %v4588 = vmul.f32 %v4467, %v4556
  %v4589 = vmul.f32 %v4471, %v4557
  %v4590 = vmul.f32 %v4478, %v4558
  %v4591 = vmul.f32 %v4482, %v4559
  %v4592 = vmul.f32 %v4489, %v4560
  %v4593 = vmul.f32 %v4493, %v4561
  %v4594 = vmul.f32 %v4500, %v4562
  %v4595 = vmul.f32 %v4504, %v4563
  %v4596 = vmul.f32 %v4511, %v4564
  %v4597 = vmul.f32 %v4515, %v4565
  %v4598 = vmul.f32 %v4522, %v4566
  %v4599 = vmul.f32 %v4526, %v4567
  %v4600 = vmul.f32 %v4533, %v4568
  %v4601 = vmul.f32 %v4537, %v4569
  %v4602 = vsel %vm681, %v4570, 0.0
  %v4603 = vsel %vm681, %v4571, 0.0
  %v4604 = vadd.f32 %v4602, %v4603
  %v4605 = vrot.slane %v4604, 4
  %v4606 = vadd.f32 %v4604, %v4605
  %v4607 = vrot.slane %v4606, 2
  %v4608 = vadd.f32 %v4606, %v4607
  %v4609 = vrot.slane %v4608, 1
  %v4610 = vadd.f32 %v4608, %v4609
  %v4611 = vsel %vm681, %v4572, 0.0
  %v4612 = vsel %vm681, %v4573, 0.0
  %v4613 = vadd.f32 %v4611, %v4612
  %v4614 = vrot.slane %v4613, 4
  %v4615 = vadd.f32 %v4613, %v4614
  %v4616 = vrot.slane %v4615, 2
  %v4617 = vadd.f32 %v4615, %v4616
  %v4618 = vrot.slane %v4617, 1
  %v4619 = vadd.f32 %v4617, %v4618
  %v4620 = vsel %vm681, %v4574, 0.0
  %v4621 = vsel %vm681, %v4575, 0.0
  %v4622 = vadd.f32 %v4620, %v4621
  %v4623 = vrot.slane %v4622, 4
  %v4624 = vadd.f32 %v4622, %v4623
  %v4625 = vrot.slane %v4624, 2
  %v4626 = vadd.f32 %v4624, %v4625
  %v4627 = vrot.slane %v4626, 1
  %v4628 = vadd.f32 %v4626, %v4627
  %v4629 = vsel %vm681, %v4576, 0.0
  %v4630 = vsel %vm681, %v4577, 0.0
  %v4631 = vadd.f32 %v4629, %v4630
  %v4632 = vrot.slane %v4631, 4
  %v4633 = vadd.f32 %v4631, %v4632
  %v4634 = vrot.slane %v4633, 2
  %v4635 = vadd.f32 %v4633, %v4634
  %v4636 = vrot.slane %v4635, 1
  %v4637 = vadd.f32 %v4635, %v4636
  %v4638 = vsel %vm681, %v4578, 0.0
  %v4639 = vsel %vm681, %v4579, 0.0
  %v4640 = vadd.f32 %v4638, %v4639
  %v4641 = vrot.slane %v4640, 4
  %v4642 = vadd.f32 %v4640, %v4641
  %v4643 = vrot.slane %v4642, 2
  %v4644 = vadd.f32 %v4642, %v4643
  %v4645 = vrot.slane %v4644, 1
  %v4646 = vadd.f32 %v4644, %v4645
  %v4647 = vsel %vm681, %v4580, 0.0
  %v4648 = vsel %vm681, %v4581, 0.0
  %v4649 = vadd.f32 %v4647, %v4648
  %v4650 = vrot.slane %v4649, 4
  %v4651 = vadd.f32 %v4649, %v4650
  %v4652 = vrot.slane %v4651, 2
  %v4653 = vadd.f32 %v4651, %v4652
  %v4654 = vrot.slane %v4653, 1
  %v4655 = vadd.f32 %v4653, %v4654
  %v4656 = vsel %vm681, %v4582, 0.0
  %v4657 = vsel %vm681, %v4583, 0.0
  %v4658 = vadd.f32 %v4656, %v4657
  %v4659 = vrot.slane %v4658, 4
  %v4660 = vadd.f32 %v4658, %v4659
  %v4661 = vrot.slane %v4660, 2
  %v4662 = vadd.f32 %v4660, %v4661
  %v4663 = vrot.slane %v4662, 1
  %v4664 = vadd.f32 %v4662, %v4663
  %v4665 = vsel %vm681, %v4584, 0.0
  %v4666 = vsel %vm681, %v4585, 0.0
  %v4667 = vadd.f32 %v4665, %v4666
  %v4668 = vrot.slane %v4667, 4
  %v4669 = vadd.f32 %v4667, %v4668
  %v4670 = vrot.slane %v4669, 2
  %v4671 = vadd.f32 %v4669, %v4670
  %v4672 = vrot.slane %v4671, 1
  %v4673 = vadd.f32 %v4671, %v4672
  %v4674 = vsel %vm681, %v4586, 0.0
  %v4675 = vsel %vm681, %v4587, 0.0
  %v4676 = vadd.f32 %v4674, %v4675
  %v4677 = vrot.slane %v4676, 4
  %v4678 = vadd.f32 %v4676, %v4677
  %v4679 = vrot.slane %v4678, 2
  %v4680 = vadd.f32 %v4678, %v4679
  %v4681 = vrot.slane %v4680, 1
  %v4682 = vadd.f32 %v4680, %v4681
  %v4683 = vsel %vm681, %v4588, 0.0
  %v4684 = vsel %vm681, %v4589, 0.0
  %v4685 = vadd.f32 %v4683, %v4684
  %v4686 = vrot.slane %v4685, 4
  %v4687 = vadd.f32 %v4685, %v4686
  %v4688 = vrot.slane %v4687, 2
  %v4689 = vadd.f32 %v4687, %v4688
  %v4690 = vrot.slane %v4689, 1
  %v4691 = vadd.f32 %v4689, %v4690
  %v4692 = vsel %vm681, %v4590, 0.0
  %v4693 = vsel %vm681, %v4591, 0.0
  %v4694 = vadd.f32 %v4692, %v4693
  %v4695 = vrot.slane %v4694, 4
  %v4696 = vadd.f32 %v4694, %v4695
  %v4697 = vrot.slane %v4696, 2
  %v4698 = vadd.f32 %v4696, %v4697
  %v4699 = vrot.slane %v4698, 1
  %v4700 = vadd.f32 %v4698, %v4699
  %v4701 = vsel %vm681, %v4592, 0.0
  %v4702 = vsel %vm681, %v4593, 0.0
  %v4703 = vadd.f32 %v4701, %v4702
  %v4704 = vrot.slane %v4703, 4
  %v4705 = vadd.f32 %v4703, %v4704
  %v4706 = vrot.slane %v4705, 2
  %v4707 = vadd.f32 %v4705, %v4706
  %v4708 = vrot.slane %v4707, 1
  %v4709 = vadd.f32 %v4707, %v4708
  %v4710 = vsel %vm681, %v4594, 0.0
  %v4711 = vsel %vm681, %v4595, 0.0
  %v4712 = vadd.f32 %v4710, %v4711
  %v4713 = vrot.slane %v4712, 4
  %v4714 = vadd.f32 %v4712, %v4713
  %v4715 = vrot.slane %v4714, 2
  %v4716 = vadd.f32 %v4714, %v4715
  %v4717 = vrot.slane %v4716, 1
  %v4718 = vadd.f32 %v4716, %v4717
  %v4719 = vsel %vm681, %v4596, 0.0
  %v4720 = vsel %vm681, %v4597, 0.0
  %v4721 = vadd.f32 %v4719, %v4720
  %v4722 = vrot.slane %v4721, 4
  %v4723 = vadd.f32 %v4721, %v4722
  %v4724 = vrot.slane %v4723, 2
  %v4725 = vadd.f32 %v4723, %v4724
  %v4726 = vrot.slane %v4725, 1
  %v4727 = vadd.f32 %v4725, %v4726
  %v4728 = vsel %vm681, %v4598, 0.0
  %v4729 = vsel %vm681, %v4599, 0.0
  %v4730 = vadd.f32 %v4728, %v4729
  %v4731 = vrot.slane %v4730, 4
  %v4732 = vadd.f32 %v4730, %v4731
  %v4733 = vrot.slane %v4732, 2
  %v4734 = vadd.f32 %v4732, %v4733
  %v4735 = vrot.slane %v4734, 1
  %v4736 = vadd.f32 %v4734, %v4735
  %v4737 = vsel %vm681, %v4600, 0.0
  %v4738 = vsel %vm681, %v4601, 0.0
  %v4739 = vadd.f32 %v4737, %v4738
  %v4740 = vrot.slane %v4739, 4
  %v4741 = vadd.f32 %v4739, %v4740
  %v4742 = vrot.slane %v4741, 2
  %v4743 = vadd.f32 %v4741, %v4742
  %v4744 = vrot.slane %v4743, 1
  %v4745 = vadd.f32 %v4743, %v4744
  %s4746 = scalar_lea.vmem %s14, 1
  %v4747 = vld [vmem:[%s4746] sm:$0x1]
  %v4749 = vlaneseq
  %v4750 = vshrl.u32 %v4749, 7
  %v4751 = vsub.s32 0, %v4750
  %v4752 = vrot.slane %v4747, %v4751
  %v4754 = vmul.f32 %v3155, %v4752
  %v4755 = vmul.f32 %v3156, %v4752
  %v4758 = vrot.slane %v4754, 1
  %v4759 = vrot.slane %v4754, 2
  %v4760 = vrot.slane %v4754, 3
  %v4761 = vrot.slane %v4754, 4
  %v4762 = vrot.slane %v4754, 5
  %v4763 = vrot.slane %v4754, 6
  %v4764 = vrot.slane %v4754, 7
  %v4765 = vrot.slane %v4755, 1
  %v4766 = vrot.slane %v4755, 2
  %v4767 = vrot.slane %v4755, 3
  %v4768 = vrot.slane %v4755, 4
  %v4769 = vrot.slane %v4755, 5
  %v4770 = vrot.slane %v4755, 6
  %v4771 = vrot.slane %v4755, 7
  %v4788 = vadd.f32 %v4610, %v4754
  %v4789 = vadd.f32 %v4619, %v4758
  %v4790 = vadd.f32 %v4628, %v4759
  %v4791 = vadd.f32 %v4637, %v4760
  %v4792 = vadd.f32 %v4646, %v4761
  %v4793 = vadd.f32 %v4655, %v4762
  %v4794 = vadd.f32 %v4664, %v4763
  %v4795 = vadd.f32 %v4673, %v4764
  %v4796 = vadd.f32 %v4682, %v4755
  %v4797 = vadd.f32 %v4691, %v4765
  %v4798 = vadd.f32 %v4700, %v4766
  %v4799 = vadd.f32 %v4709, %v4767
  %v4800 = vadd.f32 %v4718, %v4768
  %v4801 = vadd.f32 %v4727, %v4769
  %v4802 = vadd.f32 %v4736, %v4770
  %v4803 = vadd.f32 %v4745, %v4771
  %v4804 = vxor.u32 %v2759, 2147483648
  %v4805 = vxor.u32 %v2764, 2147483648
  %v4806 = vmul.f32 %v4804, 1.442695
  %v4807 = vpow.pop %v4806
  %v4808 = vmul.f32 %v4805, 1.442695
  %v4809 = vpow.pop %v4808
  %v4810 = vadd.f32 %v4807, 1.0
  %v4811 = vadd.f32 %v4809, 1.0
  %v4812 = vrcp.pop %v4810
  %v4813 = vmul.f32 1.0, %v4812
  %v4814 = vrcp.pop %v4811
  %v4815 = vmul.f32 1.0, %v4814
  %v4816 = vmul.f32 %v2759, %v4813
  %v4817 = vmul.f32 %v2764, %v4815
  %v4820 = vrot.slane %v4816, 1
  %v4821 = vrot.slane %v4816, 2
  %v4822 = vrot.slane %v4816, 3
  %v4823 = vrot.slane %v4816, 4
  %v4824 = vrot.slane %v4816, 5
  %v4825 = vrot.slane %v4816, 6
  %v4826 = vrot.slane %v4816, 7
  %v4827 = vrot.slane %v4817, 1
  %v4828 = vrot.slane %v4817, 2
  %v4829 = vrot.slane %v4817, 3
  %v4830 = vrot.slane %v4817, 4
  %v4831 = vrot.slane %v4817, 5
  %v4832 = vrot.slane %v4817, 6
  %v4833 = vrot.slane %v4817, 7
  %v4850 = vmul.f32 %v4788, %v4816
  %v4851 = vmul.f32 %v4789, %v4820
  %v4852 = vmul.f32 %v4790, %v4821
  %v4853 = vmul.f32 %v4791, %v4822
  %v4854 = vmul.f32 %v4792, %v4823
  %v4855 = vmul.f32 %v4793, %v4824
  %v4856 = vmul.f32 %v4794, %v4825
  %v4857 = vmul.f32 %v4795, %v4826
  %v4858 = vmul.f32 %v4796, %v4817
  %v4859 = vmul.f32 %v4797, %v4827
  %v4860 = vmul.f32 %v4798, %v4828
  %v4861 = vmul.f32 %v4799, %v4829
  %v4862 = vmul.f32 %v4800, %v4830
  %v4863 = vmul.f32 %v4801, %v4831
  %v4864 = vmul.f32 %v4802, %v4832
  %v4865 = vmul.f32 %v4803, %v4833
  %s4866 = scalar_lea.vmem %s12, 64
  %v4867 = vld [vmem:[%s4866] sm:$0xff]
  %v4868 = vld [vmem:[%s4866 + $0x8] sm:$0xff]
  %v4869 = vld [vmem:[%s4866 + $0x10] sm:$0xff]
  %v4870 = vld [vmem:[%s4866 + $0x18] sm:$0xff]
  %v4871 = vld [vmem:[%s4866 + $0x20] sm:$0xff]
  %v4872 = vld [vmem:[%s4866 + $0x28] sm:$0xff]
  %v4873 = vld [vmem:[%s4866 + $0x30] sm:$0xff]
  %v4874 = vld [vmem:[%s4866 + $0x38] sm:$0xff]
  %v4891 = vrot.slane %v4851, 7
  %v4892 = vsel %vm2440, %v4891, %v4850
  %v4893 = vrot.slane %v4852, 6
  %v4894 = vsel %vm2443, %v4893, %v4892
  %v4895 = vrot.slane %v4853, 5
  %v4896 = vsel %vm2446, %v4895, %v4894
  %v4897 = vrot.slane %v4854, 4
  %v4898 = vsel %vm2449, %v4897, %v4896
  %v4899 = vrot.slane %v4855, 3
  %v4900 = vsel %vm2452, %v4899, %v4898
  %v4901 = vrot.slane %v4856, 2
  %v4902 = vsel %vm2455, %v4901, %v4900
  %v4903 = vrot.slane %v4857, 1
  %v4904 = vsel %vm2458, %v4903, %v4902
  %v4905 = vrot.slane %v4859, 7
  %v4906 = vsel %vm2440, %v4905, %v4858
  %v4907 = vrot.slane %v4860, 6
  %v4908 = vsel %vm2443, %v4907, %v4906
  %v4909 = vrot.slane %v4861, 5
  %v4910 = vsel %vm2446, %v4909, %v4908
  %v4911 = vrot.slane %v4862, 4
  %v4912 = vsel %vm2449, %v4911, %v4910
  %v4913 = vrot.slane %v4863, 3
  %v4914 = vsel %vm2452, %v4913, %v4912
  %v4915 = vrot.slane %v4864, 2
  %v4916 = vsel %vm2455, %v4915, %v4914
  %v4917 = vrot.slane %v4865, 1
  %v4918 = vsel %vm2458, %v4917, %v4916
  %v4919 = vsel %vm681, %v4904, 0
  %v4921 = vsel %vm681, %v4918, 0
  %4923 = vmatprep.subr.mxu0 0.0
  %4924 = vmatpush1.msra.mxu0 %v4867
  %4925 = vmatprep.subr.mxu0 0.0
  %4926 = vmatpush1.msra.mxu0 %v4868
  %4927 = vmatprep.subr.mxu0 0.0
  %4928 = vmatpush1.msra.mxu0 %v4869
  %4929 = vmatprep.subr.mxu0 0.0
  %4930 = vmatpush1.msra.mxu0 %v4870
  %4931 = vmatprep.subr.mxu0 0.0
  %4932 = vmatpush1.msra.mxu0 %v4871
  %4933 = vmatprep.subr.mxu0 0.0
  %4934 = vmatpush1.msra.mxu0 %v4872
  %4935 = vmatprep.subr.mxu0 0.0
  %4936 = vmatpush1.msra.mxu0 %v4873
  %4937 = vmatprep.subr.mxu0 0.0
  %4938 = vmatpush1.msra.mxu0 %v4874
  %4939 = vmatprep.subr.mxu0 0.0
  %4940 = vmatpush1.msra.mxu0 0.0
  %4941 = vmatprep.subr.mxu0 0.0
  %4942 = vmatpush1.msra.mxu0 0.0
  %4943 = vmatprep.subr.mxu0 0.0
  %4944 = vmatpush1.msra.mxu0 0.0
  %4945 = vmatprep.subr.mxu0 0.0
  %4946 = vmatpush1.msra.mxu0 0.0
  %4947 = vmatprep.subr.mxu0 0.0
  %4948 = vmatpush1.msra.mxu0 0.0
  %4949 = vmatprep.subr.mxu0 0.0
  %4950 = vmatpush1.msra.mxu0 0.0
  %4951 = vmatprep.subr.mxu0 0.0
  %4952 = vmatpush1.msra.mxu0 0.0
  %4953 = vmatprep.subr.mxu0 0.0
  %4954 = vmatpush1.msra.mxu0 0.0
  %4955 = vmatprep.subr.mxu0 0.0
  %4956 = vmatpush1.msra.mxu0 0.0
  %4957 = vmatprep.subr.mxu0 0.0
  %4958 = vmatpush1.msra.mxu0 0.0
  %4959 = vmatprep.subr.mxu0 0.0
  %4960 = vmatpush1.msra.mxu0 0.0
  %4961 = vmatprep.subr.mxu0 0.0
  %4962 = vmatpush1.msra.mxu0 0.0
  %4963 = vmatprep.subr.mxu0 0.0
  %4964 = vmatpush1.msra.mxu0 0.0
  %4965 = vmatprep.subr.mxu0 0.0
  %4966 = vmatpush1.msra.mxu0 0.0
  %4967 = vmatprep.subr.mxu0 0.0
  %4968 = vmatpush1.msra.mxu0 0.0
  %4969 = vmatprep.subr.mxu0 0.0
  %4970 = vmatpush1.msra.mxu0 0.0
  %4971 = vmatprep.subr.mxu0 0.0
  %4972 = vmatpush1.msra.mxu0 0.0
  %4973 = vmatprep.subr.mxu0 0.0
  %4974 = vmatpush1.msra.mxu0 0.0
  %4975 = vmatprep.subr.mxu0 0.0
  %4976 = vmatpush1.msra.mxu0 0.0
  %4977 = vmatprep.subr.mxu0 0.0
  %4978 = vmatpush1.msra.mxu0 0.0
  %4979 = vmatprep.subr.mxu0 0.0
  %4980 = vmatpush1.msra.mxu0 0.0
  %4981 = vmatprep.subr.mxu0 0.0
  %4982 = vmatpush1.msra.mxu0 0.0
  %4983 = vmatprep.subr.mxu0 0.0
  %4984 = vmatpush1.msra.mxu0 0.0
  %4985 = vmatprep.subr.mxu0 0.0
  %4986 = vmatpush1.msra.mxu0 0.0
  %4987 = vmatprep.mubr.f32.mxu0 0.0
  %4988 = vmatmul.mubr.f32.gmra.mrb[0].mxu0 %v4919
  %v4989 = vpop.f32.mrb[0].mxu0
  %v4990 = vadd.f32 0.0, %v4989
  %v4991 = vpop.f32.mrb[0].mxu0
  %4992 = vmatprep.mubr.f32.mxu0 0.0
  %4993 = vmatmul.mubr.f32.gmra.mrb[0].mxu0 %v4921
  %v4994 = vpop.f32.mrb[0].mxu0
  %v4995 = vadd.f32 0.0, %v4994
  %v4996 = vpop.f32.mrb[0].mxu0
  %4997 = vdwg.mxu0
  %v4998 = vadd.f32 %v2553, %v4990
  %v4999 = vadd.f32 %v2554, %v4995
  %v5000 = vld [vmem:[%s15] sm:$0x1]
  %v5001 = vld [vmem:[%s16] sm:$0x1]
  %v5002 = vsel %vm66, %v4998, 0.0
  %5003 = vadd.xlane.f32.xlu0 %v5002
  %v5004 = vpop.xlane.xlu0 %5003
  %v5005 = vsel %vm66, %v4999, 0.0
  %5006 = vadd.xlane.f32.xlu0 %v5005
  %v5007 = vpop.xlane.xlu0 %5006
  %v5008 = vmul.f32 %v5004, %v73
  %v5009 = vmul.f32 %v5007, %v73
  %v5010 = vsub.f32 %v4998, %v5008
  %v5011 = vsub.f32 %v4999, %v5009
  %v5012 = vmul.f32 %v5010, %v5010
  %v5013 = vmul.f32 %v5011, %v5011
  %v5014 = vsel %vm66, %v5012, 0.0
  %5015 = vadd.xlane.f32.xlu0 %v5014
  %v5016 = vpop.xlane.xlu0 %5015
  %v5017 = vsel %vm66, %v5013, 0.0
  %5018 = vadd.xlane.f32.xlu0 %v5017
  %v5019 = vpop.xlane.xlu0 %5018
  %v5020 = vmul.f32 %v5016, %v73
  %v5021 = vmul.f32 %v5019, %v73
  %v5022 = vadd.f32 %v5020, 1e-05
  %v5023 = vadd.f32 %v5021, 1e-05
  %v5024 = vrsqrt.pop %v5022
  %v5025 = vrsqrt.pop %v5023
  %v5026 = vmul.f32 %v5010, %v5024
  %v5027 = vmul.f32 %v5011, %v5025
  %v5029 = vlaneseq
  %v5030 = vshrl.u32 %v5029, 7
  %v5031 = vsub.s32 0, %v5030
  %v5032 = vrot.slane %v5000, %v5031
  %v5034 = vmul.f32 %v5026, %v5032
  %v5035 = vmul.f32 %v5027, %v5032
  %v5037 = vlaneseq
  %v5038 = vshrl.u32 %v5037, 7
  %v5039 = vsub.s32 0, %v5038
  %v5040 = vrot.slane %v5001, %v5039
  %v5042 = vadd.f32 %v5034, %v5040
  %v5043 = vadd.f32 %v5035, %v5040
  %v5044 = vld [vmem:[%s17] sm:$0xff]
  %v5045 = vld [vmem:[%s17 + $0x8] sm:$0xff]
  %v5046 = vld [vmem:[%s17 + $0x10] sm:$0xff]
  %v5047 = vld [vmem:[%s17 + $0x18] sm:$0xff]
  %v5048 = vld [vmem:[%s18] sm:$0x1]
  %v5050 = vlaneseq
  %v5051 = vshrl.u32 %v5050, 7
  %v5052 = vsub.s32 0, %v5051
  %v5053 = vrot.slane %v5048, %v5052
  %v5056 = vsel %vm66, %v5042, 0
  %v5059 = vsel %vm66, %v5043, 0
  %5061 = vmatprep.subr.mxu0 0.0
  %5062 = vmatpush1.msra.mxu0 %v5044
  %5063 = vmatprep.subr.mxu0 0.0
  %5064 = vmatpush1.msra.mxu0 %v5045
  %5065 = vmatprep.subr.mxu0 0.0
  %5066 = vmatpush1.msra.mxu0 %v5046
  %5067 = vmatprep.subr.mxu0 0.0
  %5068 = vmatpush1.msra.mxu0 %v5047
  %5069 = vmatprep.subr.mxu0 0.0
  %5070 = vmatpush1.msra.mxu0 0.0
  %5071 = vmatprep.subr.mxu0 0.0
  %5072 = vmatpush1.msra.mxu0 0.0
  %5073 = vmatprep.subr.mxu0 0.0
  %5074 = vmatpush1.msra.mxu0 0.0
  %5075 = vmatprep.subr.mxu0 0.0
  %5076 = vmatpush1.msra.mxu0 0.0
  %5077 = vmatprep.subr.mxu0 0.0
  %5078 = vmatpush1.msra.mxu0 0.0
  %5079 = vmatprep.subr.mxu0 0.0
  %5080 = vmatpush1.msra.mxu0 0.0
  %5081 = vmatprep.subr.mxu0 0.0
  %5082 = vmatpush1.msra.mxu0 0.0
  %5083 = vmatprep.subr.mxu0 0.0
  %5084 = vmatpush1.msra.mxu0 0.0
  %5085 = vmatprep.subr.mxu0 0.0
  %5086 = vmatpush1.msra.mxu0 0.0
  %5087 = vmatprep.subr.mxu0 0.0
  %5088 = vmatpush1.msra.mxu0 0.0
  %5089 = vmatprep.subr.mxu0 0.0
  %5090 = vmatpush1.msra.mxu0 0.0
  %5091 = vmatprep.subr.mxu0 0.0
  %5092 = vmatpush1.msra.mxu0 0.0
  %5093 = vmatprep.subr.mxu0 0.0
  %5094 = vmatpush1.msra.mxu0 0.0
  %5095 = vmatprep.subr.mxu0 0.0
  %5096 = vmatpush1.msra.mxu0 0.0
  %5097 = vmatprep.subr.mxu0 0.0
  %5098 = vmatpush1.msra.mxu0 0.0
  %5099 = vmatprep.subr.mxu0 0.0
  %5100 = vmatpush1.msra.mxu0 0.0
  %5101 = vmatprep.subr.mxu0 0.0
  %5102 = vmatpush1.msra.mxu0 0.0
  %5103 = vmatprep.subr.mxu0 0.0
  %5104 = vmatpush1.msra.mxu0 0.0
  %5105 = vmatprep.subr.mxu0 0.0
  %5106 = vmatpush1.msra.mxu0 0.0
  %5107 = vmatprep.subr.mxu0 0.0
  %5108 = vmatpush1.msra.mxu0 0.0
  %5109 = vmatprep.subr.mxu0 0.0
  %5110 = vmatpush1.msra.mxu0 0.0
  %5111 = vmatprep.subr.mxu0 0.0
  %5112 = vmatpush1.msra.mxu0 0.0
  %5113 = vmatprep.subr.mxu0 0.0
  %5114 = vmatpush1.msra.mxu0 0.0
  %5115 = vmatprep.subr.mxu0 0.0
  %5116 = vmatpush1.msra.mxu0 0.0
  %5117 = vmatprep.subr.mxu0 0.0
  %5118 = vmatpush1.msra.mxu0 0.0
  %5119 = vmatprep.subr.mxu0 0.0
  %5120 = vmatpush1.msra.mxu0 0.0
  %5121 = vmatprep.subr.mxu0 0.0
  %5122 = vmatpush1.msra.mxu0 0.0
  %5123 = vmatprep.subr.mxu0 0.0
  %5124 = vmatpush1.msra.mxu0 0.0
  %5125 = vmatprep.mubr.f32.mxu0 0.0
  %5126 = vmatmul.mubr.f32.gmra.mrb[0].mxu0 %v5056
  %v5127 = vpop.f32.mrb[0].mxu0
  %v5128 = vadd.f32 %v5053, %v5127
  %v5129 = vpop.f32.mrb[0].mxu0
  %5130 = vmatprep.mubr.f32.mxu0 0.0
  %5131 = vmatmul.mubr.f32.gmra.mrb[0].mxu0 %v5059
  %v5132 = vpop.f32.mrb[0].mxu0
  %v5133 = vadd.f32 %v5053, %v5132
  %v5134 = vpop.f32.mrb[0].mxu0
  %5135 = vdwg.mxu0
  %5136 = vst [vmem:[%s19] sm:$0xff] %v5128
  %5137 = vst [vmem:[%s19 + $0x8] sm:$0xff] %v5133
  // Predicated region
  $region78: #{tutorial_llm_forward.1} parent=0 // pred_check
    _
  $region79: #{tutorial_llm_forward.1} parent=0 // pred_check_branch
    %5139 = sbr.rel (0) target = $region81
  $region80: #{tutorial_llm_forward.1} parent=0 // pred_region
    _
  $region81: #{tutorial_llm_forward.1} parent=0 // pred_fallthru
    _
  // Predicated region
  $region82: #{tutorial_llm_forward.1} parent=0 // pred_check
    _
  $region83: #{tutorial_llm_forward.1} parent=0 // pred_check_branch
    %5141 = sbr.rel (0) target = $region85
  $region84: #{tutorial_llm_forward.1} parent=0 // pred_region
    _
  $region85: #{tutorial_llm_forward.1} parent=0 // pred_fallthru
    _

</llo_original>
